<compile_context>
chip_gen: v7x
topology: tpu7x:2x2x1
jax: 0.10.0
libtpu: 0.0.40
codegen_flags: <defaults>
</compile_context>

<pallas_src>
import jax
import jax.numpy as jnp
from jax.experimental import pallas as pl
from jax.experimental.pallas import tpu as pltpu


LATENT_DIM = 32       # opt.latent_dim
FEATURE_SIZE = 64     # opt.feature_size -> img_shape = (64,)
HIDDEN = (128, 256, 512, 1024)
OUT_PAD = 128         # final layer padded to a full 128-lane vreg
BATCH = 88            # matches the spec's z = (88, latent_dim)


def generator_kernel(z_ref,
                     w1_ref, b1_ref,
                     w2_ref, b2_ref,
                     w3_ref, b3_ref,
                     w4_ref, b4_ref,
                     w5_ref, b5_ref,
                     out_ref):
    """Fused MLP forward for one batch tile. Weights are bf16, accum in f32."""

    def hidden_layer(h, w_ref, b_ref):
        y = jnp.dot(h, w_ref[...], preferred_element_type=jnp.float32)
        y = y + b_ref[...]
        y = jnp.maximum(y, 0.2 * y)          # LeakyReLU(0.2)
        return y.astype(jnp.bfloat16)        # feed next MXU dot in bf16

    h = z_ref[...]                           # (TILE_B, LATENT_DIM) bf16
    h = hidden_layer(h, w1_ref, b1_ref)      # -> 128
    h = hidden_layer(h, w2_ref, b2_ref)      # -> 256
    h = hidden_layer(h, w3_ref, b3_ref)      # -> 512
    h = hidden_layer(h, w4_ref, b4_ref)      # -> 1024

    y = jnp.dot(h, w5_ref[...], preferred_element_type=jnp.float32)
    y = y + b5_ref[...]                      # -> OUT_PAD (padded 64 -> 128)
    out_ref[...] = jnp.tanh(y).astype(out_ref.dtype)


def pack_params(params):
    """Cast weights to bf16, keep biases f32 as (1, out); pad last layer to 128."""
    flat = []
    n = len(params)
    for i, (w, b) in enumerate(params):
        if i == n - 1:
            w = jnp.pad(w, ((0, 0), (0, OUT_PAD - w.shape[1])))
            b = jnp.pad(b, ((0, OUT_PAD - b.shape[0]),))
        flat.append(jnp.asarray(w, jnp.bfloat16))
        flat.append(jnp.asarray(b, jnp.float32).reshape(1, -1))
    return flat


def generator_forward(z, params, tile_b=32):
    """params = [(W1, b1), ..., (W5, b5)] with Wi shaped (in_feat, out_feat)."""
    B = z.shape[0]
    b_pad = ((B + tile_b - 1) // tile_b) * tile_b
    if b_pad != B:
        z = jnp.pad(z, ((0, b_pad - B), (0, 0)))
    z = z.astype(jnp.bfloat16)

    flat = pack_params(params)

    # z / out are tiled over the batch; all weights/biases use a constant
    # index_map so they are loaded once and stay resident in VMEM.
    const_map = lambda i: (0, 0)
    batch_map = lambda i: (i, 0)

    in_specs = [pl.BlockSpec((tile_b, LATENT_DIM), batch_map)]
    for arr in flat:
        in_specs.append(pl.BlockSpec(arr.shape, const_map))
    out_spec = pl.BlockSpec((tile_b, OUT_PAD), batch_map)

    out = pl.pallas_call(
        generator_kernel,
        out_shape=jax.ShapeDtypeStruct((b_pad, OUT_PAD), jnp.float32),
        grid=(b_pad // tile_b,),
        in_specs=in_specs,
        out_specs=out_spec,
        compiler_params=pltpu.CompilerParams(
            dimension_semantics=("parallel",)),
    )(z, *flat)

    return out[:B, :FEATURE_SIZE]


def init_params(key):
    """Deterministic PyTorch-Linear-style init: U(-1/sqrt(fan_in), 1/sqrt(fan_in))."""
    dims = (LATENT_DIM,) + HIDDEN + (FEATURE_SIZE,)
    params = []
    for i in range(len(dims) - 1):
        fan_in, fan_out = dims[i], dims[i + 1]
        key, kw, kb = jax.random.split(key, 3)
        bound = 1.0 / jnp.sqrt(jnp.float32(fan_in))
        w = jax.random.uniform(kw, (fan_in, fan_out), jnp.float32, -bound, bound)
        b = jax.random.uniform(kb, (fan_out,), jnp.float32, -bound, bound)
        params.append((w, b))
    return params


def reference_forward(z, params):
    """Plain-JAX fp32 reference for correctness check."""
    h = z
    for i, (w, b) in enumerate(params):
        h = h @ w + b
        if i < len(params) - 1:
            h = jnp.where(h > 0, h, 0.2 * h)
        else:
            h = jnp.tanh(h)
    return h


if __name__ == "__main__":
    key = jax.random.PRNGKey(0)
    kz, kp = jax.random.split(key)
    z = jax.random.normal(kz, (BATCH, LATENT_DIM), jnp.float32)
    params = init_params(kp)

    out = jax.block_until_ready(generator_forward(z, params))
    ref = reference_forward(z, params)

    assert out.shape == (BATCH, FEATURE_SIZE), out.shape
    err = float(jnp.max(jnp.abs(out - ref)))
    # bf16 weights/activations -> loosened tolerance vs fp32 reference.
    assert err < 5e-2, err
    print("KERNEL_OK")
</pallas_src>

<mosaic_0001>
module attributes {stable_mosaic.version = 11 : i64} {
  func.func @generator_kernel(%arg0: i32, %arg1: memref<32x32xbf16, #tpu.memory_space<vmem>>, %arg2: memref<32x128xbf16, #tpu.memory_space<vmem>>, %arg3: memref<1x128xf32, #tpu.memory_space<vmem>>, %arg4: memref<128x256xbf16, #tpu.memory_space<vmem>>, %arg5: memref<1x256xf32, #tpu.memory_space<vmem>>, %arg6: memref<256x512xbf16, #tpu.memory_space<vmem>>, %arg7: memref<1x512xf32, #tpu.memory_space<vmem>>, %arg8: memref<512x1024xbf16, #tpu.memory_space<vmem>>, %arg9: memref<1x1024xf32, #tpu.memory_space<vmem>>, %arg10: memref<1024x128xbf16, #tpu.memory_space<vmem>>, %arg11: memref<1x128xf32, #tpu.memory_space<vmem>>, %arg12: memref<32x128xf32, #tpu.memory_space<vmem>>) attributes {dimension_semantics = [#tpu.dimension_semantics<parallel>], iteration_bounds = array<i64: 3>, scalar_prefetch = 0 : i64, scratch_operands = 0 : i64, tpu.core_type = #tpu.core_type<tc>, window_params = [{transform_indices = @transform_0, window_bounds = array<i64: 32, 32>}, {pipeline_mode = #tpu.pipeline_mode<synchronous>, transform_indices = @transform_1, window_bounds = array<i64: 32, 128>}, {pipeline_mode = #tpu.pipeline_mode<synchronous>, transform_indices = @transform_2, window_bounds = array<i64: 1, 128>}, {pipeline_mode = #tpu.pipeline_mode<synchronous>, transform_indices = @transform_3, window_bounds = array<i64: 128, 256>}, {pipeline_mode = #tpu.pipeline_mode<synchronous>, transform_indices = @transform_4, window_bounds = array<i64: 1, 256>}, {pipeline_mode = #tpu.pipeline_mode<synchronous>, transform_indices = @transform_5, window_bounds = array<i64: 256, 512>}, {pipeline_mode = #tpu.pipeline_mode<synchronous>, transform_indices = @transform_6, window_bounds = array<i64: 1, 512>}, {pipeline_mode = #tpu.pipeline_mode<synchronous>, transform_indices = @transform_7, window_bounds = array<i64: 512, 1024>}, {pipeline_mode = #tpu.pipeline_mode<synchronous>, transform_indices = @transform_8, window_bounds = array<i64: 1, 1024>}, {pipeline_mode = #tpu.pipeline_mode<synchronous>, transform_indices = @transform_9, window_bounds = array<i64: 1024, 128>}, {pipeline_mode = #tpu.pipeline_mode<synchronous>, transform_indices = @transform_10, window_bounds = array<i64: 1, 128>}, {transform_indices = @transform_11, window_bounds = array<i64: 32, 128>}]} {
    %c0 = arith.constant 0 : index
    %c0_0 = arith.constant 0 : index
    %0 = vector.load %arg1[%c0, %c0_0] : memref<32x32xbf16, #tpu.memory_space<vmem>>, vector<32x32xbf16>
    %c0_1 = arith.constant 0 : index
    %c0_2 = arith.constant 0 : index
    %1 = vector.load %arg2[%c0_1, %c0_2] : memref<32x128xbf16, #tpu.memory_space<vmem>>, vector<32x128xbf16>
    %cst = arith.constant dense<0.000000e+00> : vector<32x128xf32>
    %2 = tpu.matmul %0, %1, %cst {dimension_numbers = #tpu.dot_dimension_numbers<[1], [0], [0], [1], [0, 0, 1, 1], [], []>} : vector<32x32xbf16>, vector<32x128xbf16>, vector<32x128xf32> -> vector<32x128xf32>
    %c0_3 = arith.constant 0 : index
    %c0_4 = arith.constant 0 : index
    %3 = vector.load %arg3[%c0_3, %c0_4] : memref<1x128xf32, #tpu.memory_space<vmem>>, vector<1x128xf32>
    %4 = vector.broadcast %3 : vector<1x128xf32> to vector<32x128xf32>
    %5 = arith.addf %2, %4 : vector<32x128xf32>
    %cst_5 = arith.constant 2.000000e-01 : f32
    %6 = vector.broadcast %cst_5 : f32 to vector<32x128xf32>
    %7 = arith.mulf %6, %5 : vector<32x128xf32>
    %8 = arith.maximumf %5, %7 : vector<32x128xf32>
    %9 = arith.truncf %8 : vector<32x128xf32> to vector<32x128xbf16>
    %c0_6 = arith.constant 0 : index
    %c0_7 = arith.constant 0 : index
    %10 = vector.load %arg4[%c0_6, %c0_7] : memref<128x256xbf16, #tpu.memory_space<vmem>>, vector<128x256xbf16>
    %cst_8 = arith.constant dense<0.000000e+00> : vector<32x256xf32>
    %11 = tpu.matmul %9, %10, %cst_8 {dimension_numbers = #tpu.dot_dimension_numbers<[1], [0], [0], [1], [0, 0, 1, 1], [], []>} : vector<32x128xbf16>, vector<128x256xbf16>, vector<32x256xf32> -> vector<32x256xf32>
    %c0_9 = arith.constant 0 : index
    %c0_10 = arith.constant 0 : index
    %12 = vector.load %arg5[%c0_9, %c0_10] : memref<1x256xf32, #tpu.memory_space<vmem>>, vector<1x256xf32>
    %13 = vector.broadcast %12 : vector<1x256xf32> to vector<32x256xf32>
    %14 = arith.addf %11, %13 : vector<32x256xf32>
    %cst_11 = arith.constant 2.000000e-01 : f32
    %15 = vector.broadcast %cst_11 : f32 to vector<32x256xf32>
    %16 = arith.mulf %15, %14 : vector<32x256xf32>
    %17 = arith.maximumf %14, %16 : vector<32x256xf32>
    %18 = arith.truncf %17 : vector<32x256xf32> to vector<32x256xbf16>
    %c0_12 = arith.constant 0 : index
    %c0_13 = arith.constant 0 : index
    %19 = vector.load %arg6[%c0_12, %c0_13] : memref<256x512xbf16, #tpu.memory_space<vmem>>, vector<256x512xbf16>
    %cst_14 = arith.constant dense<0.000000e+00> : vector<32x512xf32>
    %20 = tpu.matmul %18, %19, %cst_14 {dimension_numbers = #tpu.dot_dimension_numbers<[1], [0], [0], [1], [0, 0, 1, 1], [], []>} : vector<32x256xbf16>, vector<256x512xbf16>, vector<32x512xf32> -> vector<32x512xf32>
    %c0_15 = arith.constant 0 : index
    %c0_16 = arith.constant 0 : index
    %21 = vector.load %arg7[%c0_15, %c0_16] : memref<1x512xf32, #tpu.memory_space<vmem>>, vector<1x512xf32>
    %22 = vector.broadcast %21 : vector<1x512xf32> to vector<32x512xf32>
    %23 = arith.addf %20, %22 : vector<32x512xf32>
    %cst_17 = arith.constant 2.000000e-01 : f32
    %24 = vector.broadcast %cst_17 : f32 to vector<32x512xf32>
    %25 = arith.mulf %24, %23 : vector<32x512xf32>
    %26 = arith.maximumf %23, %25 : vector<32x512xf32>
    %27 = arith.truncf %26 : vector<32x512xf32> to vector<32x512xbf16>
    %c0_18 = arith.constant 0 : index
    %c0_19 = arith.constant 0 : index
    %28 = vector.load %arg8[%c0_18, %c0_19] : memref<512x1024xbf16, #tpu.memory_space<vmem>>, vector<512x1024xbf16>
    %cst_20 = arith.constant dense<0.000000e+00> : vector<32x1024xf32>
    %29 = tpu.matmul %27, %28, %cst_20 {dimension_numbers = #tpu.dot_dimension_numbers<[1], [0], [0], [1], [0, 0, 1, 1], [], []>} : vector<32x512xbf16>, vector<512x1024xbf16>, vector<32x1024xf32> -> vector<32x1024xf32>
    %c0_21 = arith.constant 0 : index
    %c0_22 = arith.constant 0 : index
    %30 = vector.load %arg9[%c0_21, %c0_22] : memref<1x1024xf32, #tpu.memory_space<vmem>>, vector<1x1024xf32>
    %31 = vector.broadcast %30 : vector<1x1024xf32> to vector<32x1024xf32>
    %32 = arith.addf %29, %31 : vector<32x1024xf32>
    %cst_23 = arith.constant 2.000000e-01 : f32
    %33 = vector.broadcast %cst_23 : f32 to vector<32x1024xf32>
    %34 = arith.mulf %33, %32 : vector<32x1024xf32>
    %35 = arith.maximumf %32, %34 : vector<32x1024xf32>
    %36 = arith.truncf %35 : vector<32x1024xf32> to vector<32x1024xbf16>
    %c0_24 = arith.constant 0 : index
    %c0_25 = arith.constant 0 : index
    %37 = vector.load %arg10[%c0_24, %c0_25] : memref<1024x128xbf16, #tpu.memory_space<vmem>>, vector<1024x128xbf16>
    %cst_26 = arith.constant dense<0.000000e+00> : vector<32x128xf32>
    %38 = tpu.matmul %36, %37, %cst_26 {dimension_numbers = #tpu.dot_dimension_numbers<[1], [0], [0], [1], [0, 0, 1, 1], [], []>} : vector<32x1024xbf16>, vector<1024x128xbf16>, vector<32x128xf32> -> vector<32x128xf32>
    %c0_27 = arith.constant 0 : index
    %c0_28 = arith.constant 0 : index
    %39 = vector.load %arg11[%c0_27, %c0_28] : memref<1x128xf32, #tpu.memory_space<vmem>>, vector<1x128xf32>
    %40 = vector.broadcast %39 : vector<1x128xf32> to vector<32x128xf32>
    %41 = arith.addf %38, %40 : vector<32x128xf32>
    %42 = math.tanh %41 : vector<32x128xf32>
    %c0_29 = arith.constant 0 : index
    %c0_30 = arith.constant 0 : index
    %43 = vector.load %arg12[%c0_29, %c0_30] : memref<32x128xf32, #tpu.memory_space<vmem>>, vector<32x128xf32>
    tpu.vector_store %arg12[%c0_29, %c0_30], %42 {strides = array<i32>} : memref<32x128xf32, #tpu.memory_space<vmem>>, vector<32x128xf32>,
    return
  }
  func.func @transform_0(%arg0: i32) -> (i32, i32) {
    %c0_i32 = arith.constant 0 : i32
    %c0_i32_0 = arith.constant 0 : i32
    return %arg0, %c0_i32 : i32, i32
  }
  func.func @transform_1(%arg0: i32) -> (i32, i32) {
    %c0_i32 = arith.constant 0 : i32
    %c0_i32_0 = arith.constant 0 : i32
    %c0_i32_1 = arith.constant 0 : i32
    return %c0_i32, %c0_i32_0 : i32, i32
  }
  func.func @transform_2(%arg0: i32) -> (i32, i32) {
    %c0_i32 = arith.constant 0 : i32
    %c0_i32_0 = arith.constant 0 : i32
    %c0_i32_1 = arith.constant 0 : i32
    return %c0_i32, %c0_i32_0 : i32, i32
  }
  func.func @transform_3(%arg0: i32) -> (i32, i32) {
    %c0_i32 = arith.constant 0 : i32
    %c0_i32_0 = arith.constant 0 : i32
    %c0_i32_1 = arith.constant 0 : i32
    return %c0_i32, %c0_i32_0 : i32, i32
  }
  func.func @transform_4(%arg0: i32) -> (i32, i32) {
    %c0_i32 = arith.constant 0 : i32
    %c0_i32_0 = arith.constant 0 : i32
    %c0_i32_1 = arith.constant 0 : i32
    return %c0_i32, %c0_i32_0 : i32, i32
  }
  func.func @transform_5(%arg0: i32) -> (i32, i32) {
    %c0_i32 = arith.constant 0 : i32
    %c0_i32_0 = arith.constant 0 : i32
    %c0_i32_1 = arith.constant 0 : i32
    return %c0_i32, %c0_i32_0 : i32, i32
  }
  func.func @transform_6(%arg0: i32) -> (i32, i32) {
    %c0_i32 = arith.constant 0 : i32
    %c0_i32_0 = arith.constant 0 : i32
    %c0_i32_1 = arith.constant 0 : i32
    return %c0_i32, %c0_i32_0 : i32, i32
  }
  func.func @transform_7(%arg0: i32) -> (i32, i32) {
    %c0_i32 = arith.constant 0 : i32
    %c0_i32_0 = arith.constant 0 : i32
    %c0_i32_1 = arith.constant 0 : i32
    return %c0_i32, %c0_i32_0 : i32, i32
  }
  func.func @transform_8(%arg0: i32) -> (i32, i32) {
    %c0_i32 = arith.constant 0 : i32
    %c0_i32_0 = arith.constant 0 : i32
    %c0_i32_1 = arith.constant 0 : i32
    return %c0_i32, %c0_i32_0 : i32, i32
  }
  func.func @transform_9(%arg0: i32) -> (i32, i32) {
    %c0_i32 = arith.constant 0 : i32
    %c0_i32_0 = arith.constant 0 : i32
    %c0_i32_1 = arith.constant 0 : i32
    return %c0_i32, %c0_i32_0 : i32, i32
  }
  func.func @transform_10(%arg0: i32) -> (i32, i32) {
    %c0_i32 = arith.constant 0 : i32
    %c0_i32_0 = arith.constant 0 : i32
    %c0_i32_1 = arith.constant 0 : i32
    return %c0_i32, %c0_i32_0 : i32, i32
  }
  func.func @transform_11(%arg0: i32) -> (i32, i32) {
    %c0_i32 = arith.constant 0 : i32
    %c0_i32_0 = arith.constant 0 : i32
    return %arg0, %c0_i32 : i32, i32
  }
}

</mosaic_0001>

<llo_original>
// kernel: tpu_custom_call.1
$region0: #{tpu_custom_call.1}
  #allocation0 [shape = 'u32[]', space=smem, size = 0x4, offset = 0x4, fixed_abs, tag = 'smem constant byte address 0x4 - core index']
  #allocation1 [shape = 'u32[144,128]{1,0:T(1,128)}', space=vmem, size = 0x12000, scoped, tag = 'internal scratch']
  %s0 = inlined_call_operand.vmem [shape: bf16[96,32], index: 0, kind: input, shape index: {}]
  %s1 = inlined_call_operand.vmem [shape: bf16[32,128], index: 1, kind: input, shape index: {}]
  %s2 = inlined_call_operand.vmem [shape: f32[1,128], index: 2, kind: input, shape index: {}]
  %s3 = inlined_call_operand.hbm [shape: bf16[128,256], index: 3, kind: input, shape index: {}]
  %s4 = inlined_call_operand.vmem [shape: f32[1,256], index: 4, kind: input, shape index: {}]
  %s5 = inlined_call_operand.hbm [shape: bf16[256,512], index: 5, kind: input, shape index: {}]
  %s6 = inlined_call_operand.vmem [shape: f32[1,512], index: 6, kind: input, shape index: {}]
  %s7 = inlined_call_operand.hbm [shape: bf16[512,1024], index: 7, kind: input, shape index: {}]
  %s8 = inlined_call_operand.vmem [shape: f32[1,1024], index: 8, kind: input, shape index: {}]
  %s9 = inlined_call_operand.hbm [shape: bf16[1024,128], index: 9, kind: input, shape index: {}]
  %s10 = inlined_call_operand.vmem [shape: f32[1,128], index: 10, kind: input, shape index: {}]
  %s11 = inlined_call_operand.hbm [shape: f32[96,128], index: 11, kind: output, shape index: {}]
  %s12 = sld [smem:[#allocation0]]
  $region93: #{tpu_custom_call.1} parent=0
    _
  %s14 = ssub.s32 1, %s12
  %s15 = scalar_select 0, %s14, %s12
  $region1: #{tpu_custom_call.1} parent=0
    #allocation2 [shape = 'u8[65536]{0}', space=vmem, size = 0x10000, scoped, tag = 'input window, operand 3, single buffered']
    #allocation3 [shape = 's32[2]{0}', space=sflag, size = 0x8, scoped, tag = 'scoped memory for tpu_custom_call.1']
    #allocation4 [shape = 's32[2]{0}', space=sflag, size = 0x8, scoped, tag = 'scoped memory for tpu_custom_call.1']
    #allocation5 [shape = 'u8[262144]{0}', space=vmem, size = 0x40000, scoped, tag = 'input window, operand 5, single buffered']
    #allocation6 [shape = 's32[1]{0}', space=sflag, size = 0x4, scoped, tag = 'scoped memory for tpu_custom_call.1']
    #allocation7 [shape = 'u8[1048576]{0}', space=vmem, size = 0x100000, scoped, tag = 'input window, operand 7, single buffered']
    #allocation8 [shape = 'u8[262144]{0}', space=vmem, size = 0x40000, scoped, tag = 'input window, operand 9, single buffered']
    #allocation9 [shape = 's32[1]{0}', space=sflag, size = 0x4, scoped, tag = 'scoped memory for tpu_custom_call.1']
    #allocation10 [shape = 'u8[32768]{0}', space=vmem, size = 0x8000, scoped, tag = 'output window, operand 0']
    %16 = vsyncpa [#allocation3], 0
    %17 = vsyncpa [#allocation6], 0
    %18 = vsyncpa [#allocation9], 0
    %19 = vsyncpa [#allocation4], 0
    %s20 = scalar_lea.sflag [#allocation4], 1
    %21 = vsyncpa %s20, 0
    loop: start=0, step=1, limit=5
    $region2: #{tpu_custom_call.1} parent=1 // loop_pre_header
      _
    $region3: #{tpu_custom_call.1} parent=1 // loop_header
      %s23 = sphi 0, %s27
      %p24 = scmp.ge.s32.totalorder %s23, 5
      %s33 = sphi 0, %s35
      %s36 = sphi 0, %s33
      %s37 = sphi 0, %s36
      %s53 = sphi 0, %s37
      %s57 = sphi 0, %s57
      %s59 = sphi 0, %s57
      %s60 = sphi 0, %s59
      %s74 = sphi 0, %s60
      %s78 = sphi 0, %s78
      %s80 = sphi 0, %s78
      %s81 = sphi 0, %s80
      %s95 = sphi 0, %s81
      %s99 = sphi 0, %s99
      %s101 = sphi 0, %s99
      %s102 = sphi 0, %s101
      %s116 = sphi 0, %s102
      %s120 = sphi 0, %s120
      %s122 = sphi 0, %s120
      %s123 = sphi 0, %s122
      %s137 = sphi 0, %s123
      %s141 = sphi 0, %s141
      %s143 = sphi 0, %s141
      %s144 = sphi 0, %s143
      %s158 = sphi 0, %s144
      %s162 = sphi 0, %s162
      %s164 = sphi 0, %s162
      %s165 = sphi 0, %s164
      %s179 = sphi 0, %s165
      %s183 = sphi 0, %s183
      %s185 = sphi 0, %s183
      %s186 = sphi 0, %s185
      %s200 = sphi 0, %s186
      %s204 = sphi 0, %s204
      %s206 = sphi 0, %s204
      %s207 = sphi 0, %s206
      %s221 = sphi 0, %s207
      %s225 = sphi 0, %s225
      %s227 = sphi 0, %s225
      %s228 = sphi 0, %s227
      %s242 = sphi 0, %s228
      %s246 = sphi 0, %s246
      %s248 = sphi 0, %s246
      %s249 = sphi 0, %s248
      %s263 = sphi 0, %s249
      %s269 = sphi 0, %s271
      %s272 = sphi 0, %s269
      %s273 = sphi 0, %s272
      %s289 = sphi 0, %s273
    $region4: #{tpu_custom_call.1} parent=1 // loop_header_branch
      %26 = sbr.rel (%p24) target = $region8
    $region5: #{tpu_custom_call.1} parent=1 // loop_body
      %s28 = ssub.s32 %s23, 1
      %s29 = ssub.s32 %s23, 2
      %s30 = sadd.s32 %s23, 1
      %s31 = ssub.s32 %s23, %s30
      %p32 = scmp.eq.s32.totalorder %s31, 0
      %s34 = sadd.s32 %s33, 1
      %s35 = scalar_select %p32, %s33, %s34
      %p38 = pneg %p32
      %p39 = scmp.eq.s32.totalorder %s23, 2
      %p40 = por %p38, %p39
      %p41 = scmp.ne.s32.totalorder %s33, %s36
      %p42 = scmp.eq.s32.totalorder %s23, 0
      %p43 = por %p41, %p42
      %p44 = scmp.ne.s32.totalorder %s33, %s36
      %p45 = scmp.eq.s32.totalorder %s28, 2
      %p46 = por %p44, %p45
      %p47 = scmp.ne.s32.totalorder %s36, %s37
      %p48 = scmp.eq.s32.totalorder %s28, 0
      %p49 = por %p47, %p48
      %p50 = scmp.ne.s32.totalorder %s36, %s37
      %p51 = scmp.eq.s32.totalorder %s29, 2
      %p52 = por %p50, %p51
      %p54 = scmp.ne.s32.totalorder %s37, %s53
      %p55 = scmp.eq.s32.totalorder %s29, 0
      %p56 = por %p54, %p55
      %s58 = sadd.s32 %s57, 1
      %p61 = scmp.eq.s32.totalorder %s23, 2
      %p62 = scmp.ne.s32.totalorder %s57, %s59
      %p63 = scmp.eq.s32.totalorder %s23, 0
      %p64 = por %p62, %p63
      %p65 = scmp.ne.s32.totalorder %s57, %s59
      %p66 = scmp.eq.s32.totalorder %s28, 2
      %p67 = por %p65, %p66
      %p68 = scmp.ne.s32.totalorder %s59, %s60
      %p69 = scmp.eq.s32.totalorder %s28, 0
      %p70 = por %p68, %p69
      %p71 = scmp.ne.s32.totalorder %s59, %s60
      %p72 = scmp.eq.s32.totalorder %s29, 2
      %p73 = por %p71, %p72
      %p75 = scmp.ne.s32.totalorder %s60, %s74
      %p76 = scmp.eq.s32.totalorder %s29, 0
      %p77 = por %p75, %p76
      %s79 = sadd.s32 %s78, 1
      %p82 = scmp.eq.s32.totalorder %s23, 2
      %p83 = scmp.ne.s32.totalorder %s78, %s80
      %p84 = scmp.eq.s32.totalorder %s23, 0
      %p85 = por %p83, %p84
      %p86 = scmp.ne.s32.totalorder %s78, %s80
      %p87 = scmp.eq.s32.totalorder %s28, 2
      %p88 = por %p86, %p87
      %p89 = scmp.ne.s32.totalorder %s80, %s81
      %p90 = scmp.eq.s32.totalorder %s28, 0
      %p91 = por %p89, %p90
      %p92 = scmp.ne.s32.totalorder %s80, %s81
      %p93 = scmp.eq.s32.totalorder %s29, 2
      %p94 = por %p92, %p93
      %p96 = scmp.ne.s32.totalorder %s81, %s95
      %p97 = scmp.eq.s32.totalorder %s29, 0
      %p98 = por %p96, %p97
      %s100 = sadd.s32 %s99, 1
      %p103 = scmp.eq.s32.totalorder %s23, 2
      %p104 = scmp.ne.s32.totalorder %s99, %s101
      %p105 = scmp.eq.s32.totalorder %s23, 0
      %p106 = por %p104, %p105
      %p107 = scmp.ne.s32.totalorder %s99, %s101
      %p108 = scmp.eq.s32.totalorder %s28, 2
      %p109 = por %p107, %p108
      %p110 = scmp.ne.s32.totalorder %s101, %s102
      %p111 = scmp.eq.s32.totalorder %s28, 0
      %p112 = por %p110, %p111
      %p113 = scmp.ne.s32.totalorder %s101, %s102
      %p114 = scmp.eq.s32.totalorder %s29, 2
      %p115 = por %p113, %p114
      %p117 = scmp.ne.s32.totalorder %s102, %s116
      %p118 = scmp.eq.s32.totalorder %s29, 0
      %p119 = por %p117, %p118
      %s121 = sadd.s32 %s120, 1
      %p124 = scmp.eq.s32.totalorder %s23, 2
      %p125 = scmp.ne.s32.totalorder %s120, %s122
      %p126 = scmp.eq.s32.totalorder %s23, 0
      %p127 = por %p125, %p126
      %p128 = scmp.ne.s32.totalorder %s120, %s122
      %p129 = scmp.eq.s32.totalorder %s28, 2
      %p130 = por %p128, %p129
      %p131 = scmp.ne.s32.totalorder %s122, %s123
      %p132 = scmp.eq.s32.totalorder %s28, 0
      %p133 = por %p131, %p132
      %p134 = scmp.ne.s32.totalorder %s122, %s123
      %p135 = scmp.eq.s32.totalorder %s29, 2
      %p136 = por %p134, %p135
      %p138 = scmp.ne.s32.totalorder %s123, %s137
      %p139 = scmp.eq.s32.totalorder %s29, 0
      %p140 = por %p138, %p139
      %s142 = sadd.s32 %s141, 1
      %p145 = scmp.eq.s32.totalorder %s23, 2
      %p146 = scmp.ne.s32.totalorder %s141, %s143
      %p147 = scmp.eq.s32.totalorder %s23, 0
      %p148 = por %p146, %p147
      %p149 = scmp.ne.s32.totalorder %s141, %s143
      %p150 = scmp.eq.s32.totalorder %s28, 2
      %p151 = por %p149, %p150
      %p152 = scmp.ne.s32.totalorder %s143, %s144
      %p153 = scmp.eq.s32.totalorder %s28, 0
      %p154 = por %p152, %p153
      %p155 = scmp.ne.s32.totalorder %s143, %s144
      %p156 = scmp.eq.s32.totalorder %s29, 2
      %p157 = por %p155, %p156
      %p159 = scmp.ne.s32.totalorder %s144, %s158
      %p160 = scmp.eq.s32.totalorder %s29, 0
      %p161 = por %p159, %p160
      %s163 = sadd.s32 %s162, 1
      %p166 = scmp.eq.s32.totalorder %s23, 2
      %p167 = scmp.ne.s32.totalorder %s162, %s164
      %p168 = scmp.eq.s32.totalorder %s23, 0
      %p169 = por %p167, %p168
      %p170 = scmp.ne.s32.totalorder %s162, %s164
      %p171 = scmp.eq.s32.totalorder %s28, 2
      %p172 = por %p170, %p171
      %p173 = scmp.ne.s32.totalorder %s164, %s165
      %p174 = scmp.eq.s32.totalorder %s28, 0
      %p175 = por %p173, %p174
      %p176 = scmp.ne.s32.totalorder %s164, %s165
      %p177 = scmp.eq.s32.totalorder %s29, 2
      %p178 = por %p176, %p177
      %p180 = scmp.ne.s32.totalorder %s165, %s179
      %p181 = scmp.eq.s32.totalorder %s29, 0
      %p182 = por %p180, %p181
      %s184 = sadd.s32 %s183, 1
      %p187 = scmp.eq.s32.totalorder %s23, 2
      %p188 = scmp.ne.s32.totalorder %s183, %s185
      %p189 = scmp.eq.s32.totalorder %s23, 0
      %p190 = por %p188, %p189
      %p191 = scmp.ne.s32.totalorder %s183, %s185
      %p192 = scmp.eq.s32.totalorder %s28, 2
      %p193 = por %p191, %p192
      %p194 = scmp.ne.s32.totalorder %s185, %s186
      %p195 = scmp.eq.s32.totalorder %s28, 0
      %p196 = por %p194, %p195
      %p197 = scmp.ne.s32.totalorder %s185, %s186
      %p198 = scmp.eq.s32.totalorder %s29, 2
      %p199 = por %p197, %p198
      %p201 = scmp.ne.s32.totalorder %s186, %s200
      %p202 = scmp.eq.s32.totalorder %s29, 0
      %p203 = por %p201, %p202
      %s205 = sadd.s32 %s204, 1
      %p208 = scmp.eq.s32.totalorder %s23, 2
      %p209 = scmp.ne.s32.totalorder %s204, %s206
      %p210 = scmp.eq.s32.totalorder %s23, 0
      %p211 = por %p209, %p210
      %p212 = scmp.ne.s32.totalorder %s204, %s206
      %p213 = scmp.eq.s32.totalorder %s28, 2
      %p214 = por %p212, %p213
      %p215 = scmp.ne.s32.totalorder %s206, %s207
      %p216 = scmp.eq.s32.totalorder %s28, 0
      %p217 = por %p215, %p216
      %p218 = scmp.ne.s32.totalorder %s206, %s207
      %p219 = scmp.eq.s32.totalorder %s29, 2
      %p220 = por %p218, %p219
      %p222 = scmp.ne.s32.totalorder %s207, %s221
      %p223 = scmp.eq.s32.totalorder %s29, 0
      %p224 = por %p222, %p223
      %s226 = sadd.s32 %s225, 1
      %p229 = scmp.eq.s32.totalorder %s23, 2
      %p230 = scmp.ne.s32.totalorder %s225, %s227
      %p231 = scmp.eq.s32.totalorder %s23, 0
      %p232 = por %p230, %p231
      %p233 = scmp.ne.s32.totalorder %s225, %s227
      %p234 = scmp.eq.s32.totalorder %s28, 2
      %p235 = por %p233, %p234
      %p236 = scmp.ne.s32.totalorder %s227, %s228
      %p237 = scmp.eq.s32.totalorder %s28, 0
      %p238 = por %p236, %p237
      %p239 = scmp.ne.s32.totalorder %s227, %s228
      %p240 = scmp.eq.s32.totalorder %s29, 2
      %p241 = por %p239, %p240
      %p243 = scmp.ne.s32.totalorder %s228, %s242
      %p244 = scmp.eq.s32.totalorder %s29, 0
      %p245 = por %p243, %p244
      %s247 = sadd.s32 %s246, 1
      %p250 = scmp.eq.s32.totalorder %s23, 2
      %p251 = scmp.ne.s32.totalorder %s246, %s248
      %p252 = scmp.eq.s32.totalorder %s23, 0
      %p253 = por %p251, %p252
      %p254 = scmp.ne.s32.totalorder %s246, %s248
      %p255 = scmp.eq.s32.totalorder %s28, 2
      %p256 = por %p254, %p255
      %p257 = scmp.ne.s32.totalorder %s248, %s249
      %p258 = scmp.eq.s32.totalorder %s28, 0
      %p259 = por %p257, %p258
      %p260 = scmp.ne.s32.totalorder %s248, %s249
      %p261 = scmp.eq.s32.totalorder %s29, 2
      %p262 = por %p260, %p261
      %p264 = scmp.ne.s32.totalorder %s249, %s263
      %p265 = scmp.eq.s32.totalorder %s29, 0
      %p266 = por %p264, %p265
      %s267 = ssub.s32 %s23, %s30
      %p268 = scmp.eq.s32.totalorder %s267, 0
      %s270 = sadd.s32 %s269, 1
      %s271 = scalar_select %p268, %s269, %s270
      %p274 = pneg %p268
      %p275 = scmp.eq.s32.totalorder %s23, 2
      %p276 = por %p274, %p275
      %p277 = scmp.ne.s32.totalorder %s269, %s272
      %p278 = scmp.eq.s32.totalorder %s23, 0
      %p279 = por %p277, %p278
      %p280 = scmp.ne.s32.totalorder %s269, %s272
      %p281 = scmp.eq.s32.totalorder %s28, 2
      %p282 = por %p280, %p281
      %p283 = scmp.ne.s32.totalorder %s272, %s273
      %p284 = scmp.eq.s32.totalorder %s28, 0
      %p285 = por %p283, %p284
      %p286 = scmp.ne.s32.totalorder %s272, %s273
      %p287 = scmp.eq.s32.totalorder %s29, 2
      %p288 = por %p286, %p287
      %p290 = scmp.ne.s32.totalorder %s273, %s289
      %p291 = scmp.eq.s32.totalorder %s29, 0
      %p292 = por %p290, %p291
      %p293 = scmp.le.s32.totalorder 1, %s23
      %p294 = scmp.lt.s32.totalorder %s23, 4
      %p295 = pnand %p293, %p294
      %p296 = pneg %p295
      // Predicated region
      $region9: #{tpu_custom_call.1} parent=5 // pred_check
        _
      $region10: #{tpu_custom_call.1} parent=5 // pred_check_branch
        %298 = sbr.rel (%p295) target = $region12
      $region11: #{tpu_custom_call.1} parent=5 // pred_region
        %s299 = ssub.s32 %s23, 1
        // Predicated region
        $region13: #{tpu_custom_call.1} parent=11 // pred_check
          %p300 = pneg %p70
        $region14: #{tpu_custom_call.1} parent=11 // pred_check_branch
          %302 = sbr.rel (%p300) target = $region16
        $region15: #{tpu_custom_call.1} parent=11 // pred_region
          _
        $region16: #{tpu_custom_call.1} parent=11 // pred_fallthru
          _
        // Predicated region
        $region17: #{tpu_custom_call.1} parent=11 // pred_check
          %p303 = pneg %p91
        $region18: #{tpu_custom_call.1} parent=11 // pred_check_branch
          %305 = sbr.rel (%p303) target = $region20
        $region19: #{tpu_custom_call.1} parent=11 // pred_region
          _
        $region20: #{tpu_custom_call.1} parent=11 // pred_fallthru
          _
        // Predicated region
        $region21: #{tpu_custom_call.1} parent=11 // pred_check
          %p306 = pneg %p112
        $region22: #{tpu_custom_call.1} parent=11 // pred_check_branch
          %308 = sbr.rel (%p306) target = $region24
        $region23: #{tpu_custom_call.1} parent=11 // pred_region
          %s310 = ssub.s32 2048, 2048
          %311 = vsyncadd [#allocation3], %s310
          %s312 = sshll.u32 [#allocation2], 4
          %s313 = int_to_ptr.vmem [resolvable:$true] %s312
          %318 = dma.hbm_to_vmem [thread:$0]  %s3, 2048, %s313, [#allocation3], 128, 128, 8
        $region24: #{tpu_custom_call.1} parent=11 // pred_fallthru
          _
        // Predicated region
        $region25: #{tpu_custom_call.1} parent=11 // pred_check
          %p319 = pneg %p133
        $region26: #{tpu_custom_call.1} parent=11 // pred_check_branch
          %321 = sbr.rel (%p319) target = $region28
        $region27: #{tpu_custom_call.1} parent=11 // pred_region
          _
        $region28: #{tpu_custom_call.1} parent=11 // pred_fallthru
          _
        // Predicated region
        $region29: #{tpu_custom_call.1} parent=11 // pred_check
          %p322 = pneg %p154
        $region30: #{tpu_custom_call.1} parent=11 // pred_check_branch
          %324 = sbr.rel (%p322) target = $region32
        $region31: #{tpu_custom_call.1} parent=11 // pred_region
          %s326 = ssub.s32 8192, 8192
          %327 = vsyncadd [#allocation6], %s326
          %s328 = sshll.u32 [#allocation5], 4
          %s329 = int_to_ptr.vmem [resolvable:$true] %s328
          %334 = dma.hbm_to_vmem [thread:$0]  %s5, 8192, %s329, [#allocation6], 256, 256, 16
        $region32: #{tpu_custom_call.1} parent=11 // pred_fallthru
          _
        // Predicated region
        $region33: #{tpu_custom_call.1} parent=11 // pred_check
          %p335 = pneg %p175
        $region34: #{tpu_custom_call.1} parent=11 // pred_check_branch
          %337 = sbr.rel (%p335) target = $region36
        $region35: #{tpu_custom_call.1} parent=11 // pred_region
          _
        $region36: #{tpu_custom_call.1} parent=11 // pred_fallthru
          _
        // Predicated region
        $region37: #{tpu_custom_call.1} parent=11 // pred_check
          %p338 = pneg %p196
        $region38: #{tpu_custom_call.1} parent=11 // pred_check_branch
          %340 = sbr.rel (%p338) target = $region40
        $region39: #{tpu_custom_call.1} parent=11 // pred_region
          %s342 = ssub.s32 32768, 32768
          %343 = vsyncadd [#allocation6], %s342
          %s344 = sshll.u32 [#allocation7], 4
          %s345 = int_to_ptr.vmem [resolvable:$true] %s344
          %350 = dma.hbm_to_vmem [thread:$0]  %s7, 32768, %s345, [#allocation6], 512, 512, 32
        $region40: #{tpu_custom_call.1} parent=11 // pred_fallthru
          _
        // Predicated region
        $region41: #{tpu_custom_call.1} parent=11 // pred_check
          %p351 = pneg %p217
        $region42: #{tpu_custom_call.1} parent=11 // pred_check_branch
          %353 = sbr.rel (%p351) target = $region44
        $region43: #{tpu_custom_call.1} parent=11 // pred_region
          _
        $region44: #{tpu_custom_call.1} parent=11 // pred_fallthru
          _
        // Predicated region
        $region45: #{tpu_custom_call.1} parent=11 // pred_check
          %p354 = pneg %p238
        $region46: #{tpu_custom_call.1} parent=11 // pred_check_branch
          %356 = sbr.rel (%p354) target = $region48
        $region47: #{tpu_custom_call.1} parent=11 // pred_region
          %s358 = ssub.s32 8192, 8192
          %359 = vsyncadd [#allocation9], %s358
          %s360 = sshll.u32 [#allocation8], 4
          %s361 = int_to_ptr.vmem [resolvable:$true] %s360
          %366 = dma.hbm_to_vmem [thread:$0]  %s9, 8192, %s361, [#allocation9], 64, 64, 4
        $region48: #{tpu_custom_call.1} parent=11 // pred_fallthru
          _
        // Predicated region
        $region49: #{tpu_custom_call.1} parent=11 // pred_check
          %p367 = pneg %p259
        $region50: #{tpu_custom_call.1} parent=11 // pred_check_branch
          %369 = sbr.rel (%p367) target = $region52
        $region51: #{tpu_custom_call.1} parent=11 // pred_region
          _
        $region52: #{tpu_custom_call.1} parent=11 // pred_fallthru
          _
      $region12: #{tpu_custom_call.1} parent=5 // pred_fallthru
        _
      %p370 = scmp.lt.s32.totalorder %s23, 3
      // Predicated region
      $region53: #{tpu_custom_call.1} parent=5 // pred_check
        %p371 = pneg %p370
      $region54: #{tpu_custom_call.1} parent=5 // pred_check_branch
        %373 = sbr.rel (%p371) target = $region56
      $region55: #{tpu_custom_call.1} parent=5 // pred_region
        // Predicated region
        $region57: #{tpu_custom_call.1} parent=55 // pred_check
          %p374 = pneg %p43
        $region58: #{tpu_custom_call.1} parent=55 // pred_check_branch
          %376 = sbr.rel (%p374) target = $region60
        $region59: #{tpu_custom_call.1} parent=55 // pred_region
          %s377 = smul.u32 4, %s23
          %p378 = scmp.lt.s32.totalorder %s377, 11
          %s379 = scalar_select %p378, %s377, 11
          %s380 = smul.addr %s379, 4
          %s381 = scalar_lea.vmem %s0, %s380
          %s382 = smul.u32 4, %s23
        $region60: #{tpu_custom_call.1} parent=55 // pred_fallthru
          _
      $region56: #{tpu_custom_call.1} parent=5 // pred_fallthru
        _
      %p383 = scmp.le.s32.totalorder 1, %s23
      %p384 = scmp.lt.s32.totalorder %s23, 4
      %p385 = pnand %p383, %p384
      %p386 = pneg %p385
      // Predicated region
      $region61: #{tpu_custom_call.1} parent=5 // pred_check
        _
      $region62: #{tpu_custom_call.1} parent=5 // pred_check_branch
        %388 = sbr.rel (%p385) target = $region64
      $region63: #{tpu_custom_call.1} parent=5 // pred_region
        %s389 = ssub.s32 %s23, 1
        // Predicated region
        $region65: #{tpu_custom_call.1} parent=63 // pred_check
          %p390 = pneg %p112
        $region66: #{tpu_custom_call.1} parent=63 // pred_check_branch
          %392 = sbr.rel (%p390) target = $region68
        $region67: #{tpu_custom_call.1} parent=63 // pred_region
          %393 = dma.done [#allocation3], 2048
        $region68: #{tpu_custom_call.1} parent=63 // pred_fallthru
          _
        // Predicated region
        $region69: #{tpu_custom_call.1} parent=63 // pred_check
          %p394 = pneg %p154
        $region70: #{tpu_custom_call.1} parent=63 // pred_check_branch
          %396 = sbr.rel (%p394) target = $region72
        $region71: #{tpu_custom_call.1} parent=63 // pred_region
          %397 = dma.done [#allocation6], 8192
        $region72: #{tpu_custom_call.1} parent=63 // pred_fallthru
          _
        // Predicated region
        $region73: #{tpu_custom_call.1} parent=63 // pred_check
          %p398 = pneg %p196
        $region74: #{tpu_custom_call.1} parent=63 // pred_check_branch
          %400 = sbr.rel (%p398) target = $region76
        $region75: #{tpu_custom_call.1} parent=63 // pred_region
          %401 = dma.done [#allocation6], 32768
        $region76: #{tpu_custom_call.1} parent=63 // pred_fallthru
          _
        // Predicated region
        $region77: #{tpu_custom_call.1} parent=63 // pred_check
          %p402 = pneg %p238
        $region78: #{tpu_custom_call.1} parent=63 // pred_check_branch
          %404 = sbr.rel (%p402) target = $region80
        $region79: #{tpu_custom_call.1} parent=63 // pred_region
          %405 = dma.done [#allocation9], 8192
        $region80: #{tpu_custom_call.1} parent=63 // pred_fallthru
          _
        %s406 = smul.u32 4, %s28
        %p407 = scmp.lt.s32.totalorder %s406, 11
        %s408 = scalar_select %p407, %s406, 11
        %s409 = smul.addr %s408, 4
        %s410 = scalar_lea.vmem %s0, %s409
        %p411 = pneg %p49
        %p412 = pneg %p46
        %p413 = pneg %p70
        %p414 = pneg %p67
        %p415 = pneg %p91
        %p416 = pneg %p88
        %p417 = pneg %p112
        %p418 = pneg %p109
        %p419 = pneg %p133
        %p420 = pneg %p130
        %p421 = pneg %p154
        %p422 = pneg %p151
        %p423 = pneg %p175
        %p424 = pneg %p172
        %p425 = pneg %p196
        %p426 = pneg %p193
        %p427 = pneg %p217
        %p428 = pneg %p214
        %p429 = pneg %p238
        %p430 = pneg %p235
        %p431 = pneg %p259
        %p432 = pneg %p256
        %p433 = pneg %p285
        %p434 = pneg %p282
        %s435 = sand.u32 %s272, 1
        %s436 = scalar_lea.sflag [#allocation4], %s435
        %s437 = sand.u32 %s272, 1
        %s438 = smul.addr %s437, 32
        %s439 = scalar_lea.vmem [#allocation10], %s438
        %s440 = smul.u32 4, %s28
        %p441 = scmp.lt.s32.totalorder %s440, 11
        %s442 = scalar_select %p441, %s440, 11
        %s443 = smul.addr %s442, 4
        %s444 = scalar_lea.vmem %s0, %s443
        %s445 = smul.u32 4, %s28
        %s446 = smul.u32 4, %s28
        %v448 = vld [vmem:[%s444] sm:$0xf]
        %v449 = vld [vmem:[%s444 + $0x4] sm:$0xf]
        %v450 = vld [vmem:[%s444 + $0x8] sm:$0xf]
        %v451 = vld [vmem:[%s444 + $0xc] sm:$0xf]
        %v452 = vld [vmem:[%s1] sm:$0xf]
        %v453 = vld [vmem:[%s1 + $0x4] sm:$0xf]
        %v454 = vld [vmem:[%s1 + $0x8] sm:$0xf]
        %v455 = vld [vmem:[%s1 + $0xc] sm:$0xf]
        %v456 = vld [vmem:[%s2] sm:$0x1]
        %v458 = vlaneseq
        %v459 = vshrl.u32 %v458, 7
        %v460 = vsub.s32 0, %v459
        %v461 = vrot.slane %v456, %v460
        %v467 = vunpack.c.l.b16 %v448
        %v468 = vunpack.c.l.b16 %v449
        %v469 = vunpack.c.l.b16 %v450
        %v470 = vunpack.c.l.b16 %v451
        %v471 = vpack.c.b16 %v468, %v467
        %v472 = vpack.c.b16 %v470, %v469
        %v477 = vunpack.c.l.b16 %v452
        %v478 = vunpack.c.l.b16 %v453
        %v479 = vunpack.c.l.b16 %v454
        %v480 = vunpack.c.l.b16 %v455
        %v481 = vpack.c.b16 %v478, %v477
        %v482 = vpack.c.b16 %v480, %v479
        %vm485 = vcmask 261120
        %v487 = vsel %vm485, %v471, 0
        %v490 = vsel %vm485, %v472, 0
        %492 = vmatprep.subr.bf16.mxu0 0
        %493 = vmatpush1.bf16.msra.mxu0 %v481
        %494 = vmatprep.subr.bf16.mxu0 0
        %495 = vmatpush1.bf16.msra.mxu0 %v482
        %496 = vmatprep.subr.bf16.mxu0 0
        %497 = vmatpush1.bf16.msra.mxu0 0
        %498 = vmatprep.subr.bf16.mxu0 0
        %499 = vmatpush1.bf16.msra.mxu0 0
        %500 = vmatprep.subr.bf16.mxu0 0
        %501 = vmatpush1.bf16.msra.mxu0 0
        %502 = vmatprep.subr.bf16.mxu0 0
        %503 = vmatpush1.bf16.msra.mxu0 0
        %504 = vmatprep.subr.bf16.mxu0 0
        %505 = vmatpush1.bf16.msra.mxu0 0
        %506 = vmatprep.subr.bf16.mxu0 0
        %507 = vmatpush1.bf16.msra.mxu0 0
        %508 = vmatprep.subr.bf16.mxu0 0
        %509 = vmatpush1.bf16.msra.mxu0 0
        %510 = vmatprep.subr.bf16.mxu0 0
        %511 = vmatpush1.bf16.msra.mxu0 0
        %512 = vmatprep.subr.bf16.mxu0 0
        %513 = vmatpush1.bf16.msra.mxu0 0
        %514 = vmatprep.subr.bf16.mxu0 0
        %515 = vmatpush1.bf16.msra.mxu0 0
        %516 = vmatprep.subr.bf16.mxu0 0
        %517 = vmatpush1.bf16.msra.mxu0 0
        %518 = vmatprep.subr.bf16.mxu0 0
        %519 = vmatpush1.bf16.msra.mxu0 0
        %520 = vmatprep.subr.bf16.mxu0 0
        %521 = vmatpush1.bf16.msra.mxu0 0
        %522 = vmatprep.subr.bf16.mxu0 0
        %523 = vmatpush1.bf16.msra.mxu0 0
        %524 = vmatprep.mubr.bf16.mxu0 0
        %525 = vmatmul.mubr.bf16.gmra.mrb[0].mxu0 %v487
        %v526 = vpop.f32.mrb[0].mxu0
        %v527 = vadd.f32 %v461, %v526
        %v528 = vpop.f32.mrb[0].mxu0
        %v529 = vpop.f32.mrb[0].mxu0
        %v530 = vadd.f32 %v461, %v529
        %v531 = vpop.f32.mrb[0].mxu0
        %532 = vmatprep.mubr.bf16.mxu0 0
        %533 = vmatmul.mubr.bf16.gmra.mrb[0].mxu0 %v490
        %v534 = vpop.f32.mrb[0].mxu0
        %v535 = vadd.f32 %v461, %v534
        %v536 = vpop.f32.mrb[0].mxu0
        %v537 = vpop.f32.mrb[0].mxu0
        %v538 = vadd.f32 %v461, %v537
        %v539 = vpop.f32.mrb[0].mxu0
        %540 = vdwg.mxu0
        %v541 = vmul.f32 %v527, 0.2
        %v542 = vmul.f32 %v530, 0.2
        %v543 = vmul.f32 %v535, 0.2
        %v544 = vmul.f32 %v538, 0.2
        %v545 = vmax.f32 %v527, %v541
        %v546 = vmax.f32 %v530, %v542
        %v547 = vmax.f32 %v535, %v543
        %v548 = vmax.f32 %v538, %v544
        %v549 = vpack.c.bf16 %v546, %v545
        %v550 = vpack.c.bf16 %v548, %v547
        %v551 = vld [vmem:[#allocation2] sm:$0xff]
        %v552 = vld [vmem:[#allocation2 + $0x8] sm:$0xff]
        %v553 = vld [vmem:[#allocation2 + $0x10] sm:$0xff]
        %v554 = vld [vmem:[#allocation2 + $0x18] sm:$0xff]
        %v555 = vld [vmem:[#allocation2 + $0x20] sm:$0xff]
        %v556 = vld [vmem:[#allocation2 + $0x28] sm:$0xff]
        %v557 = vld [vmem:[#allocation2 + $0x30] sm:$0xff]
        %v558 = vld [vmem:[#allocation2 + $0x38] sm:$0xff]
        %v559 = vld [vmem:[#allocation2 + $0x40] sm:$0xff]
        %v560 = vld [vmem:[#allocation2 + $0x48] sm:$0xff]
        %v561 = vld [vmem:[#allocation2 + $0x50] sm:$0xff]
        %v562 = vld [vmem:[#allocation2 + $0x58] sm:$0xff]
        %v563 = vld [vmem:[#allocation2 + $0x60] sm:$0xff]
        %v564 = vld [vmem:[#allocation2 + $0x68] sm:$0xff]
        %v565 = vld [vmem:[#allocation2 + $0x70] sm:$0xff]
        %v566 = vld [vmem:[#allocation2 + $0x78] sm:$0xff]
        %v567 = vld [vmem:[%s4] sm:$0x3]
        %v569 = vlaneseq
        %v570 = vshrl.u32 %v569, 7
        %v571 = vsub.s32 0, %v570
        %v572 = vrot.slane %v567, %v571
        %v573 = vlaneseq
        %v574 = vshrl.u32 %v573, 7
        %v575 = vsub.s32 1, %v574
        %v576 = vrot.slane %v567, %v575
        %v595 = vunpack.c.l.b16 %v551
        %v596 = vunpack.c.h.b16 %v551
        %v597 = vunpack.c.l.b16 %v552
        %v598 = vunpack.c.h.b16 %v552
        %v599 = vunpack.c.l.b16 %v553
        %v600 = vunpack.c.h.b16 %v553
        %v601 = vunpack.c.l.b16 %v554
        %v602 = vunpack.c.h.b16 %v554
        %v603 = vunpack.c.l.b16 %v555
        %v604 = vunpack.c.h.b16 %v555
        %v605 = vunpack.c.l.b16 %v556
        %v606 = vunpack.c.h.b16 %v556
        %v607 = vunpack.c.l.b16 %v557
        %v608 = vunpack.c.h.b16 %v557
        %v609 = vunpack.c.l.b16 %v558
        %v610 = vunpack.c.h.b16 %v558
        %v611 = vunpack.c.l.b16 %v559
        %v612 = vunpack.c.h.b16 %v559
        %v613 = vunpack.c.l.b16 %v560
        %v614 = vunpack.c.h.b16 %v560
        %v615 = vunpack.c.l.b16 %v561
        %v616 = vunpack.c.h.b16 %v561
        %v617 = vunpack.c.l.b16 %v562
        %v618 = vunpack.c.h.b16 %v562
        %v619 = vunpack.c.l.b16 %v563
        %v620 = vunpack.c.h.b16 %v563
        %v621 = vunpack.c.l.b16 %v564
        %v622 = vunpack.c.h.b16 %v564
        %v623 = vunpack.c.l.b16 %v565
        %v624 = vunpack.c.h.b16 %v565
        %v625 = vunpack.c.l.b16 %v566
        %v626 = vunpack.c.h.b16 %v566
        %v627 = vpack.c.b16 %v597, %v595
        %v628 = vpack.c.b16 %v598, %v596
        %v629 = vpack.c.b16 %v601, %v599
        %v630 = vpack.c.b16 %v602, %v600
        %v631 = vpack.c.b16 %v605, %v603
        %v632 = vpack.c.b16 %v606, %v604
        %v633 = vpack.c.b16 %v609, %v607
        %v634 = vpack.c.b16 %v610, %v608
        %v635 = vpack.c.b16 %v613, %v611
        %v636 = vpack.c.b16 %v614, %v612
        %v637 = vpack.c.b16 %v617, %v615
        %v638 = vpack.c.b16 %v618, %v616
        %v639 = vpack.c.b16 %v621, %v619
        %v640 = vpack.c.b16 %v622, %v620
        %v641 = vpack.c.b16 %v625, %v623
        %v642 = vpack.c.b16 %v626, %v624
        %659 = vmatprep.subr.bf16.mxu0 %v628
        %660 = vmatpush1.bf16.msra.mxu0 %v627
        %661 = vmatprep.subr.bf16.mxu0 %v630
        %662 = vmatpush1.bf16.msra.mxu0 %v629
        %663 = vmatprep.subr.bf16.mxu0 %v632
        %664 = vmatpush1.bf16.msra.mxu0 %v631
        %665 = vmatprep.subr.bf16.mxu0 %v634
        %666 = vmatpush1.bf16.msra.mxu0 %v633
        %667 = vmatprep.subr.bf16.mxu0 %v636
        %668 = vmatpush1.bf16.msra.mxu0 %v635
        %669 = vmatprep.subr.bf16.mxu0 %v638
        %670 = vmatpush1.bf16.msra.mxu0 %v637
        %671 = vmatprep.subr.bf16.mxu0 %v640
        %672 = vmatpush1.bf16.msra.mxu0 %v639
        %673 = vmatprep.subr.bf16.mxu0 %v642
        %674 = vmatpush1.bf16.msra.mxu0 %v641
        %675 = vmatprep.subr.bf16.mxu0 0
        %676 = vmatpush1.bf16.msra.mxu0 0
        %677 = vmatprep.subr.bf16.mxu0 0
        %678 = vmatpush1.bf16.msra.mxu0 0
        %679 = vmatprep.subr.bf16.mxu0 0
        %680 = vmatpush1.bf16.msra.mxu0 0
        %681 = vmatprep.subr.bf16.mxu0 0
        %682 = vmatpush1.bf16.msra.mxu0 0
        %683 = vmatprep.subr.bf16.mxu0 0
        %684 = vmatpush1.bf16.msra.mxu0 0
        %685 = vmatprep.subr.bf16.mxu0 0
        %686 = vmatpush1.bf16.msra.mxu0 0
        %687 = vmatprep.subr.bf16.mxu0 0
        %688 = vmatpush1.bf16.msra.mxu0 0
        %689 = vmatprep.subr.bf16.mxu0 0
        %690 = vmatpush1.bf16.msra.mxu0 0
        %691 = vmatprep.mubr.bf16.mxu0 0
        %692 = vmatmul.mubr.bf16.gmra.mrb[0].mxu0 %v549
        %v693 = vpop.f32.mrb[0].mxu0
        %v694 = vadd.f32 %v572, %v693
        %v695 = vpop.f32.mrb[0].mxu0
        %v696 = vadd.f32 %v576, %v695
        %v697 = vpop.f32.mrb[0].mxu0
        %v698 = vadd.f32 %v572, %v697
        %v699 = vpop.f32.mrb[0].mxu0
        %v700 = vadd.f32 %v576, %v699
        %701 = vmatprep.mubr.bf16.mxu0 0
        %702 = vmatmul.mubr.bf16.gmra.mrb[0].mxu0 %v550
        %v703 = vpop.f32.mrb[0].mxu0
        %v704 = vadd.f32 %v572, %v703
        %v705 = vpop.f32.mrb[0].mxu0
        %v706 = vadd.f32 %v576, %v705
        %v707 = vpop.f32.mrb[0].mxu0
        %v708 = vadd.f32 %v572, %v707
        %v709 = vpop.f32.mrb[0].mxu0
        %v710 = vadd.f32 %v576, %v709
        %711 = vdwg.mxu0
        %v712 = vmul.f32 %v694, 0.2
        %v713 = vmul.f32 %v696, 0.2
        %v714 = vmul.f32 %v698, 0.2
        %v715 = vmul.f32 %v700, 0.2
        %v716 = vmul.f32 %v704, 0.2
        %v717 = vmul.f32 %v706, 0.2
        %v718 = vmul.f32 %v708, 0.2
        %v719 = vmul.f32 %v710, 0.2
        %v720 = vmax.f32 %v694, %v712
        %v721 = vmax.f32 %v696, %v713
        %v722 = vmax.f32 %v698, %v714
        %v723 = vmax.f32 %v700, %v715
        %v724 = vmax.f32 %v704, %v716
        %v725 = vmax.f32 %v706, %v717
        %v726 = vmax.f32 %v708, %v718
        %v727 = vmax.f32 %v710, %v719
        %v728 = vpack.c.bf16 %v722, %v720
        %v729 = vpack.c.bf16 %v723, %v721
        %v730 = vpack.c.bf16 %v726, %v724
        %v731 = vpack.c.bf16 %v727, %v725
        %v732 = vld [vmem:[#allocation5] sm:$0xff]
        %v733 = vld [vmem:[#allocation5 + $0x8] sm:$0xff]
        %v734 = vld [vmem:[#allocation5 + $0x10] sm:$0xff]
        %v735 = vld [vmem:[#allocation5 + $0x18] sm:$0xff]
        %v736 = vld [vmem:[#allocation5 + $0x20] sm:$0xff]
        %v737 = vld [vmem:[#allocation5 + $0x28] sm:$0xff]
        %v738 = vld [vmem:[#allocation5 + $0x30] sm:$0xff]
        %v739 = vld [vmem:[#allocation5 + $0x38] sm:$0xff]
        %v740 = vld [vmem:[#allocation5 + $0x40] sm:$0xff]
        %v741 = vld [vmem:[#allocation5 + $0x48] sm:$0xff]
        %v742 = vld [vmem:[#allocation5 + $0x50] sm:$0xff]
        %v743 = vld [vmem:[#allocation5 + $0x58] sm:$0xff]
        %v744 = vld [vmem:[#allocation5 + $0x60] sm:$0xff]
        %v745 = vld [vmem:[#allocation5 + $0x68] sm:$0xff]
        %v746 = vld [vmem:[#allocation5 + $0x70] sm:$0xff]
        %v747 = vld [vmem:[#allocation5 + $0x78] sm:$0xff]
        %v748 = vld [vmem:[#allocation5 + $0x80] sm:$0xff]
        %v749 = vld [vmem:[#allocation5 + $0x88] sm:$0xff]
        %v750 = vld [vmem:[#allocation5 + $0x90] sm:$0xff]
        %v751 = vld [vmem:[#allocation5 + $0x98] sm:$0xff]
        %v752 = vld [vmem:[#allocation5 + $0xa0] sm:$0xff]
        %v753 = vld [vmem:[#allocation5 + $0xa8] sm:$0xff]
        %v754 = vld [vmem:[#allocation5 + $0xb0] sm:$0xff]
        %v755 = vld [vmem:[#allocation5 + $0xb8] sm:$0xff]
        %v756 = vld [vmem:[#allocation5 + $0xc0] sm:$0xff]
        %v757 = vld [vmem:[#allocation5 + $0xc8] sm:$0xff]
        %v758 = vld [vmem:[#allocation5 + $0xd0] sm:$0xff]
        %v759 = vld [vmem:[#allocation5 + $0xd8] sm:$0xff]
        %v760 = vld [vmem:[#allocation5 + $0xe0] sm:$0xff]
        %v761 = vld [vmem:[#allocation5 + $0xe8] sm:$0xff]
        %v762 = vld [vmem:[#allocation5 + $0xf0] sm:$0xff]
        %v763 = vld [vmem:[#allocation5 + $0xf8] sm:$0xff]
        %v764 = vld [vmem:[#allocation5 + $0x100] sm:$0xff]
        %v765 = vld [vmem:[#allocation5 + $0x108] sm:$0xff]
        %v766 = vld [vmem:[#allocation5 + $0x110] sm:$0xff]
        %v767 = vld [vmem:[#allocation5 + $0x118] sm:$0xff]
        %v768 = vld [vmem:[#allocation5 + $0x120] sm:$0xff]
        %v769 = vld [vmem:[#allocation5 + $0x128] sm:$0xff]
        %v770 = vld [vmem:[#allocation5 + $0x130] sm:$0xff]
        %v771 = vld [vmem:[#allocation5 + $0x138] sm:$0xff]
        %v772 = vld [vmem:[#allocation5 + $0x140] sm:$0xff]
        %v773 = vld [vmem:[#allocation5 + $0x148] sm:$0xff]
        %v774 = vld [vmem:[#allocation5 + $0x150] sm:$0xff]
        %v775 = vld [vmem:[#allocation5 + $0x158] sm:$0xff]
        %v776 = vld [vmem:[#allocation5 + $0x160] sm:$0xff]
        %v777 = vld [vmem:[#allocation5 + $0x168] sm:$0xff]
        %v778 = vld [vmem:[#allocation5 + $0x170] sm:$0xff]
        %v779 = vld [vmem:[#allocation5 + $0x178] sm:$0xff]
        %v780 = vld [vmem:[#allocation5 + $0x180] sm:$0xff]
        %v781 = vld [vmem:[#allocation5 + $0x188] sm:$0xff]
        %v782 = vld [vmem:[#allocation5 + $0x190] sm:$0xff]
        %v783 = vld [vmem:[#allocation5 + $0x198] sm:$0xff]
        %v784 = vld [vmem:[#allocation5 + $0x1a0] sm:$0xff]
        %v785 = vld [vmem:[#allocation5 + $0x1a8] sm:$0xff]
        %v786 = vld [vmem:[#allocation5 + $0x1b0] sm:$0xff]
        %v787 = vld [vmem:[#allocation5 + $0x1b8] sm:$0xff]
        %v788 = vld [vmem:[#allocation5 + $0x1c0] sm:$0xff]
        %v789 = vld [vmem:[#allocation5 + $0x1c8] sm:$0xff]
        %v790 = vld [vmem:[#allocation5 + $0x1d0] sm:$0xff]
        %v791 = vld [vmem:[#allocation5 + $0x1d8] sm:$0xff]
        %v792 = vld [vmem:[#allocation5 + $0x1e0] sm:$0xff]
        %v793 = vld [vmem:[#allocation5 + $0x1e8] sm:$0xff]
        %v794 = vld [vmem:[#allocation5 + $0x1f0] sm:$0xff]
        %v795 = vld [vmem:[#allocation5 + $0x1f8] sm:$0xff]
        %v796 = vld [vmem:[%s6] sm:$0xf]
        %v798 = vlaneseq
        %v799 = vshrl.u32 %v798, 7
        %v800 = vsub.s32 0, %v799
        %v801 = vrot.slane %v796, %v800
        %v802 = vlaneseq
        %v803 = vshrl.u32 %v802, 7
        %v804 = vsub.s32 1, %v803
        %v805 = vrot.slane %v796, %v804
        %v806 = vlaneseq
        %v807 = vshrl.u32 %v806, 7
        %v808 = vsub.s32 2, %v807
        %v809 = vrot.slane %v796, %v808
        %v810 = vlaneseq
        %v811 = vshrl.u32 %v810, 7
        %v812 = vsub.s32 3, %v811
        %v813 = vrot.slane %v796, %v812
        %v882 = vunpack.c.l.b16 %v732
        %v883 = vunpack.c.h.b16 %v732
        %v884 = vunpack.c.l.b16 %v733
        %v885 = vunpack.c.h.b16 %v733
        %v886 = vunpack.c.l.b16 %v734
        %v887 = vunpack.c.h.b16 %v734
        %v888 = vunpack.c.l.b16 %v735
        %v889 = vunpack.c.h.b16 %v735
        %v890 = vunpack.c.l.b16 %v736
        %v891 = vunpack.c.h.b16 %v736
        %v892 = vunpack.c.l.b16 %v737
        %v893 = vunpack.c.h.b16 %v737
        %v894 = vunpack.c.l.b16 %v738
        %v895 = vunpack.c.h.b16 %v738
        %v896 = vunpack.c.l.b16 %v739
        %v897 = vunpack.c.h.b16 %v739
        %v898 = vunpack.c.l.b16 %v740
        %v899 = vunpack.c.h.b16 %v740
        %v900 = vunpack.c.l.b16 %v741
        %v901 = vunpack.c.h.b16 %v741
        %v902 = vunpack.c.l.b16 %v742
        %v903 = vunpack.c.h.b16 %v742
        %v904 = vunpack.c.l.b16 %v743
        %v905 = vunpack.c.h.b16 %v743
        %v906 = vunpack.c.l.b16 %v744
        %v907 = vunpack.c.h.b16 %v744
        %v908 = vunpack.c.l.b16 %v745
        %v909 = vunpack.c.h.b16 %v745
        %v910 = vunpack.c.l.b16 %v746
        %v911 = vunpack.c.h.b16 %v746
        %v912 = vunpack.c.l.b16 %v747
        %v913 = vunpack.c.h.b16 %v747
        %v914 = vunpack.c.l.b16 %v748
        %v915 = vunpack.c.h.b16 %v748
        %v916 = vunpack.c.l.b16 %v749
        %v917 = vunpack.c.h.b16 %v749
        %v918 = vunpack.c.l.b16 %v750
        %v919 = vunpack.c.h.b16 %v750
        %v920 = vunpack.c.l.b16 %v751
        %v921 = vunpack.c.h.b16 %v751
        %v922 = vunpack.c.l.b16 %v752
        %v923 = vunpack.c.h.b16 %v752
        %v924 = vunpack.c.l.b16 %v753
        %v925 = vunpack.c.h.b16 %v753
        %v926 = vunpack.c.l.b16 %v754
        %v927 = vunpack.c.h.b16 %v754
        %v928 = vunpack.c.l.b16 %v755
        %v929 = vunpack.c.h.b16 %v755
        %v930 = vunpack.c.l.b16 %v756
        %v931 = vunpack.c.h.b16 %v756
        %v932 = vunpack.c.l.b16 %v757
        %v933 = vunpack.c.h.b16 %v757
        %v934 = vunpack.c.l.b16 %v758
        %v935 = vunpack.c.h.b16 %v758
        %v936 = vunpack.c.l.b16 %v759
        %v937 = vunpack.c.h.b16 %v759
        %v938 = vunpack.c.l.b16 %v760
        %v939 = vunpack.c.h.b16 %v760
        %v940 = vunpack.c.l.b16 %v761
        %v941 = vunpack.c.h.b16 %v761
        %v942 = vunpack.c.l.b16 %v762
        %v943 = vunpack.c.h.b16 %v762
        %v944 = vunpack.c.l.b16 %v763
        %v945 = vunpack.c.h.b16 %v763
        %v946 = vunpack.c.l.b16 %v764
        %v947 = vunpack.c.h.b16 %v764
        %v948 = vunpack.c.l.b16 %v765
        %v949 = vunpack.c.h.b16 %v765
        %v950 = vunpack.c.l.b16 %v766
        %v951 = vunpack.c.h.b16 %v766
        %v952 = vunpack.c.l.b16 %v767
        %v953 = vunpack.c.h.b16 %v767
        %v954 = vunpack.c.l.b16 %v768
        %v955 = vunpack.c.h.b16 %v768
        %v956 = vunpack.c.l.b16 %v769
        %v957 = vunpack.c.h.b16 %v769
        %v958 = vunpack.c.l.b16 %v770
        %v959 = vunpack.c.h.b16 %v770
        %v960 = vunpack.c.l.b16 %v771
        %v961 = vunpack.c.h.b16 %v771
        %v962 = vunpack.c.l.b16 %v772
        %v963 = vunpack.c.h.b16 %v772
        %v964 = vunpack.c.l.b16 %v773
        %v965 = vunpack.c.h.b16 %v773
        %v966 = vunpack.c.l.b16 %v774
        %v967 = vunpack.c.h.b16 %v774
        %v968 = vunpack.c.l.b16 %v775
        %v969 = vunpack.c.h.b16 %v775
        %v970 = vunpack.c.l.b16 %v776
        %v971 = vunpack.c.h.b16 %v776
        %v972 = vunpack.c.l.b16 %v777
        %v973 = vunpack.c.h.b16 %v777
        %v974 = vunpack.c.l.b16 %v778
        %v975 = vunpack.c.h.b16 %v778
        %v976 = vunpack.c.l.b16 %v779
        %v977 = vunpack.c.h.b16 %v779
        %v978 = vunpack.c.l.b16 %v780
        %v979 = vunpack.c.h.b16 %v780
        %v980 = vunpack.c.l.b16 %v781
        %v981 = vunpack.c.h.b16 %v781
        %v982 = vunpack.c.l.b16 %v782
        %v983 = vunpack.c.h.b16 %v782
        %v984 = vunpack.c.l.b16 %v783
        %v985 = vunpack.c.h.b16 %v783
        %v986 = vunpack.c.l.b16 %v784
        %v987 = vunpack.c.h.b16 %v784
        %v988 = vunpack.c.l.b16 %v785
        %v989 = vunpack.c.h.b16 %v785
        %v990 = vunpack.c.l.b16 %v786
        %v991 = vunpack.c.h.b16 %v786
        %v992 = vunpack.c.l.b16 %v787
        %v993 = vunpack.c.h.b16 %v787
        %v994 = vunpack.c.l.b16 %v788
        %v995 = vunpack.c.h.b16 %v788
        %v996 = vunpack.c.l.b16 %v789
        %v997 = vunpack.c.h.b16 %v789
        %v998 = vunpack.c.l.b16 %v790
        %v999 = vunpack.c.h.b16 %v790
        %v1000 = vunpack.c.l.b16 %v791
        %v1001 = vunpack.c.h.b16 %v791
        %v1002 = vunpack.c.l.b16 %v792
        %v1003 = vunpack.c.h.b16 %v792
        %v1004 = vunpack.c.l.b16 %v793
        %v1005 = vunpack.c.h.b16 %v793
        %v1006 = vunpack.c.l.b16 %v794
        %v1007 = vunpack.c.h.b16 %v794
        %v1008 = vunpack.c.l.b16 %v795
        %v1009 = vunpack.c.h.b16 %v795
        %v1010 = vpack.c.b16 %v886, %v882
        %v1011 = vpack.c.b16 %v887, %v883
        %v1012 = vpack.c.b16 %v888, %v884
        %v1013 = vpack.c.b16 %v889, %v885
        %v1014 = vpack.c.b16 %v894, %v890
        %v1015 = vpack.c.b16 %v895, %v891
        %v1016 = vpack.c.b16 %v896, %v892
        %v1017 = vpack.c.b16 %v897, %v893
        %v1018 = vpack.c.b16 %v902, %v898
        %v1019 = vpack.c.b16 %v903, %v899
        %v1020 = vpack.c.b16 %v904, %v900
        %v1021 = vpack.c.b16 %v905, %v901
        %v1022 = vpack.c.b16 %v910, %v906
        %v1023 = vpack.c.b16 %v911, %v907
        %v1024 = vpack.c.b16 %v912, %v908
        %v1025 = vpack.c.b16 %v913, %v909
        %v1026 = vpack.c.b16 %v918, %v914
        %v1027 = vpack.c.b16 %v919, %v915
        %v1028 = vpack.c.b16 %v920, %v916
        %v1029 = vpack.c.b16 %v921, %v917
        %v1030 = vpack.c.b16 %v926, %v922
        %v1031 = vpack.c.b16 %v927, %v923
        %v1032 = vpack.c.b16 %v928, %v924
        %v1033 = vpack.c.b16 %v929, %v925
        %v1034 = vpack.c.b16 %v934, %v930
        %v1035 = vpack.c.b16 %v935, %v931
        %v1036 = vpack.c.b16 %v936, %v932
        %v1037 = vpack.c.b16 %v937, %v933
        %v1038 = vpack.c.b16 %v942, %v938
        %v1039 = vpack.c.b16 %v943, %v939
        %v1040 = vpack.c.b16 %v944, %v940
        %v1041 = vpack.c.b16 %v945, %v941
        %v1042 = vpack.c.b16 %v950, %v946
        %v1043 = vpack.c.b16 %v951, %v947
        %v1044 = vpack.c.b16 %v952, %v948
        %v1045 = vpack.c.b16 %v953, %v949
        %v1046 = vpack.c.b16 %v958, %v954
        %v1047 = vpack.c.b16 %v959, %v955
        %v1048 = vpack.c.b16 %v960, %v956
        %v1049 = vpack.c.b16 %v961, %v957
        %v1050 = vpack.c.b16 %v966, %v962
        %v1051 = vpack.c.b16 %v967, %v963
        %v1052 = vpack.c.b16 %v968, %v964
        %v1053 = vpack.c.b16 %v969, %v965
        %v1054 = vpack.c.b16 %v974, %v970
        %v1055 = vpack.c.b16 %v975, %v971
        %v1056 = vpack.c.b16 %v976, %v972
        %v1057 = vpack.c.b16 %v977, %v973
        %v1058 = vpack.c.b16 %v982, %v978
        %v1059 = vpack.c.b16 %v983, %v979
        %v1060 = vpack.c.b16 %v984, %v980
        %v1061 = vpack.c.b16 %v985, %v981
        %v1062 = vpack.c.b16 %v990, %v986
        %v1063 = vpack.c.b16 %v991, %v987
        %v1064 = vpack.c.b16 %v992, %v988
        %v1065 = vpack.c.b16 %v993, %v989
        %v1066 = vpack.c.b16 %v998, %v994
        %v1067 = vpack.c.b16 %v999, %v995
        %v1068 = vpack.c.b16 %v1000, %v996
        %v1069 = vpack.c.b16 %v1001, %v997
        %v1070 = vpack.c.b16 %v1006, %v1002
        %v1071 = vpack.c.b16 %v1007, %v1003
        %v1072 = vpack.c.b16 %v1008, %v1004
        %v1073 = vpack.c.b16 %v1009, %v1005
        %1138 = vmatprep.subr.bf16.mxu0 %v1011
        %1139 = vmatpush1.bf16.msra.mxu0 %v1010
        %1140 = vmatprep.subr.bf16.mxu0 %v1015
        %1141 = vmatpush1.bf16.msra.mxu0 %v1014
        %1142 = vmatprep.subr.bf16.mxu0 %v1019
        %1143 = vmatpush1.bf16.msra.mxu0 %v1018
        %1144 = vmatprep.subr.bf16.mxu0 %v1023
        %1145 = vmatpush1.bf16.msra.mxu0 %v1022
        %1146 = vmatprep.subr.bf16.mxu0 %v1027
        %1147 = vmatpush1.bf16.msra.mxu0 %v1026
        %1148 = vmatprep.subr.bf16.mxu0 %v1031
        %1149 = vmatpush1.bf16.msra.mxu0 %v1030
        %1150 = vmatprep.subr.bf16.mxu0 %v1035
        %1151 = vmatpush1.bf16.msra.mxu0 %v1034
        %1152 = vmatprep.subr.bf16.mxu0 %v1039
        %1153 = vmatpush1.bf16.msra.mxu0 %v1038
        %1154 = vmatprep.subr.bf16.mxu0 %v1043
        %1155 = vmatpush1.bf16.msra.mxu0 %v1042
        %1156 = vmatprep.subr.bf16.mxu0 %v1047
        %1157 = vmatpush1.bf16.msra.mxu0 %v1046
        %1158 = vmatprep.subr.bf16.mxu0 %v1051
        %1159 = vmatpush1.bf16.msra.mxu0 %v1050
        %1160 = vmatprep.subr.bf16.mxu0 %v1055
        %1161 = vmatpush1.bf16.msra.mxu0 %v1054
        %1162 = vmatprep.subr.bf16.mxu0 %v1059
        %1163 = vmatpush1.bf16.msra.mxu0 %v1058
        %1164 = vmatprep.subr.bf16.mxu0 %v1063
        %1165 = vmatpush1.bf16.msra.mxu0 %v1062
        %1166 = vmatprep.subr.bf16.mxu0 %v1067
        %1167 = vmatpush1.bf16.msra.mxu0 %v1066
        %1168 = vmatprep.subr.bf16.mxu0 %v1071
        %1169 = vmatpush1.bf16.msra.mxu0 %v1070
        %1170 = vmatprep.mubr.bf16.mxu0 %v729
        %1171 = vmatmul.mubr.bf16.gmra.mrb[0].mxu0 %v728
        %v1172 = vpop.f32.mrb[0].mxu0
        %v1173 = vadd.f32 %v801, %v1172
        %v1174 = vpop.f32.mrb[0].mxu0
        %v1175 = vadd.f32 %v805, %v1174
        %v1176 = vpop.f32.mrb[0].mxu0
        %v1177 = vadd.f32 %v801, %v1176
        %v1178 = vpop.f32.mrb[0].mxu0
        %v1179 = vadd.f32 %v805, %v1178
        %1180 = vmatprep.mubr.bf16.mxu0 %v731
        %1181 = vmatmul.mubr.bf16.gmra.mrb[0].mxu0 %v730
        %v1182 = vpop.f32.mrb[0].mxu0
        %v1183 = vadd.f32 %v801, %v1182
        %v1184 = vpop.f32.mrb[0].mxu0
        %v1185 = vadd.f32 %v805, %v1184
        %v1186 = vpop.f32.mrb[0].mxu0
        %v1187 = vadd.f32 %v801, %v1186
        %v1188 = vpop.f32.mrb[0].mxu0
        %v1189 = vadd.f32 %v805, %v1188
        %1190 = vdwg.mxu0
        %1191 = vmatprep.subr.bf16.mxu0 %v1013
        %1192 = vmatpush1.bf16.msra.mxu0 %v1012
        %1193 = vmatprep.subr.bf16.mxu0 %v1017
        %1194 = vmatpush1.bf16.msra.mxu0 %v1016
        %1195 = vmatprep.subr.bf16.mxu0 %v1021
        %1196 = vmatpush1.bf16.msra.mxu0 %v1020
        %1197 = vmatprep.subr.bf16.mxu0 %v1025
        %1198 = vmatpush1.bf16.msra.mxu0 %v1024
        %1199 = vmatprep.subr.bf16.mxu0 %v1029
        %1200 = vmatpush1.bf16.msra.mxu0 %v1028
        %1201 = vmatprep.subr.bf16.mxu0 %v1033
        %1202 = vmatpush1.bf16.msra.mxu0 %v1032
        %1203 = vmatprep.subr.bf16.mxu0 %v1037
        %1204 = vmatpush1.bf16.msra.mxu0 %v1036
        %1205 = vmatprep.subr.bf16.mxu0 %v1041
        %1206 = vmatpush1.bf16.msra.mxu0 %v1040
        %1207 = vmatprep.subr.bf16.mxu0 %v1045
        %1208 = vmatpush1.bf16.msra.mxu0 %v1044
        %1209 = vmatprep.subr.bf16.mxu0 %v1049
        %1210 = vmatpush1.bf16.msra.mxu0 %v1048
        %1211 = vmatprep.subr.bf16.mxu0 %v1053
        %1212 = vmatpush1.bf16.msra.mxu0 %v1052
        %1213 = vmatprep.subr.bf16.mxu0 %v1057
        %1214 = vmatpush1.bf16.msra.mxu0 %v1056
        %1215 = vmatprep.subr.bf16.mxu0 %v1061
        %1216 = vmatpush1.bf16.msra.mxu0 %v1060
        %1217 = vmatprep.subr.bf16.mxu0 %v1065
        %1218 = vmatpush1.bf16.msra.mxu0 %v1064
        %1219 = vmatprep.subr.bf16.mxu0 %v1069
        %1220 = vmatpush1.bf16.msra.mxu0 %v1068
        %1221 = vmatprep.subr.bf16.mxu0 %v1073
        %1222 = vmatpush1.bf16.msra.mxu0 %v1072
        %1223 = vmatprep.mubr.bf16.mxu0 %v729
        %1224 = vmatmul.mubr.bf16.gmra.mrb[0].mxu0 %v728
        %v1225 = vpop.f32.mrb[0].mxu0
        %v1226 = vadd.f32 %v809, %v1225
        %v1227 = vpop.f32.mrb[0].mxu0
        %v1228 = vadd.f32 %v813, %v1227
        %v1229 = vpop.f32.mrb[0].mxu0
        %v1230 = vadd.f32 %v809, %v1229
        %v1231 = vpop.f32.mrb[0].mxu0
        %v1232 = vadd.f32 %v813, %v1231
        %1233 = vmatprep.mubr.bf16.mxu0 %v731
        %1234 = vmatmul.mubr.bf16.gmra.mrb[0].mxu0 %v730
        %v1235 = vpop.f32.mrb[0].mxu0
        %v1236 = vadd.f32 %v809, %v1235
        %v1237 = vpop.f32.mrb[0].mxu0
        %v1238 = vadd.f32 %v813, %v1237
        %v1239 = vpop.f32.mrb[0].mxu0
        %v1240 = vadd.f32 %v809, %v1239
        %v1241 = vpop.f32.mrb[0].mxu0
        %v1242 = vadd.f32 %v813, %v1241
        %1243 = vdwg.mxu0
        %v1244 = vmul.f32 %v1173, 0.2
        %v1245 = vmul.f32 %v1175, 0.2
        %v1246 = vmul.f32 %v1226, 0.2
        %v1247 = vmul.f32 %v1228, 0.2
        %v1248 = vmul.f32 %v1177, 0.2
        %v1249 = vmul.f32 %v1179, 0.2
        %v1250 = vmul.f32 %v1230, 0.2
        %v1251 = vmul.f32 %v1232, 0.2
        %v1252 = vmul.f32 %v1183, 0.2
        %v1253 = vmul.f32 %v1185, 0.2
        %v1254 = vmul.f32 %v1236, 0.2
        %v1255 = vmul.f32 %v1238, 0.2
        %v1256 = vmul.f32 %v1187, 0.2
        %v1257 = vmul.f32 %v1189, 0.2
        %v1258 = vmul.f32 %v1240, 0.2
        %v1259 = vmul.f32 %v1242, 0.2
        %v1260 = vmax.f32 %v1173, %v1244
        %v1261 = vmax.f32 %v1175, %v1245
        %v1262 = vmax.f32 %v1226, %v1246
        %v1263 = vmax.f32 %v1228, %v1247
        %v1264 = vmax.f32 %v1177, %v1248
        %v1265 = vmax.f32 %v1179, %v1249
        %v1266 = vmax.f32 %v1230, %v1250
        %v1267 = vmax.f32 %v1232, %v1251
        %v1268 = vmax.f32 %v1183, %v1252
        %v1269 = vmax.f32 %v1185, %v1253
        %v1270 = vmax.f32 %v1236, %v1254
        %v1271 = vmax.f32 %v1238, %v1255
        %v1272 = vmax.f32 %v1187, %v1256
        %v1273 = vmax.f32 %v1189, %v1257
        %v1274 = vmax.f32 %v1240, %v1258
        %v1275 = vmax.f32 %v1242, %v1259
        %v1276 = vpack.c.bf16 %v1264, %v1260
        %v1277 = vpack.c.bf16 %v1265, %v1261
        %v1278 = vpack.c.bf16 %v1266, %v1262
        %v1279 = vpack.c.bf16 %v1267, %v1263
        %v1280 = vpack.c.bf16 %v1272, %v1268
        %v1281 = vpack.c.bf16 %v1273, %v1269
        %v1282 = vpack.c.bf16 %v1274, %v1270
        %v1283 = vpack.c.bf16 %v1275, %v1271
        %v1284 = vld [vmem:[#allocation7] sm:$0xff]
        %v1285 = vld [vmem:[#allocation7 + $0x8] sm:$0xff]
        %v1286 = vld [vmem:[#allocation7 + $0x10] sm:$0xff]
        %v1287 = vld [vmem:[#allocation7 + $0x18] sm:$0xff]
        %v1288 = vld [vmem:[#allocation7 + $0x20] sm:$0xff]
        %v1289 = vld [vmem:[#allocation7 + $0x28] sm:$0xff]
        %v1290 = vld [vmem:[#allocation7 + $0x30] sm:$0xff]
        %v1291 = vld [vmem:[#allocation7 + $0x38] sm:$0xff]
        %v1292 = vld [vmem:[#allocation7 + $0x40] sm:$0xff]
        %v1293 = vld [vmem:[#allocation7 + $0x48] sm:$0xff]
        %v1294 = vld [vmem:[#allocation7 + $0x50] sm:$0xff]
        %v1295 = vld [vmem:[#allocation7 + $0x58] sm:$0xff]
        %v1296 = vld [vmem:[#allocation7 + $0x60] sm:$0xff]
        %v1297 = vld [vmem:[#allocation7 + $0x68] sm:$0xff]
        %v1298 = vld [vmem:[#allocation7 + $0x70] sm:$0xff]
        %v1299 = vld [vmem:[#allocation7 + $0x78] sm:$0xff]
        %v1300 = vld [vmem:[#allocation7 + $0x80] sm:$0xff]
        %v1301 = vld [vmem:[#allocation7 + $0x88] sm:$0xff]
        %v1302 = vld [vmem:[#allocation7 + $0x90] sm:$0xff]
        %v1303 = vld [vmem:[#allocation7 + $0x98] sm:$0xff]
        %v1304 = vld [vmem:[#allocation7 + $0xa0] sm:$0xff]
        %v1305 = vld [vmem:[#allocation7 + $0xa8] sm:$0xff]
        %v1306 = vld [vmem:[#allocation7 + $0xb0] sm:$0xff]
        %v1307 = vld [vmem:[#allocation7 + $0xb8] sm:$0xff]
        %v1308 = vld [vmem:[#allocation7 + $0xc0] sm:$0xff]
        %v1309 = vld [vmem:[#allocation7 + $0xc8] sm:$0xff]
        %v1310 = vld [vmem:[#allocation7 + $0xd0] sm:$0xff]
        %v1311 = vld [vmem:[#allocation7 + $0xd8] sm:$0xff]
        %v1312 = vld [vmem:[#allocation7 + $0xe0] sm:$0xff]
        %v1313 = vld [vmem:[#allocation7 + $0xe8] sm:$0xff]
        %v1314 = vld [vmem:[#allocation7 + $0xf0] sm:$0xff]
        %v1315 = vld [vmem:[#allocation7 + $0xf8] sm:$0xff]
        %v1316 = vld [vmem:[#allocation7 + $0x100] sm:$0xff]
        %v1317 = vld [vmem:[#allocation7 + $0x108] sm:$0xff]
        %v1318 = vld [vmem:[#allocation7 + $0x110] sm:$0xff]
        %v1319 = vld [vmem:[#allocation7 + $0x118] sm:$0xff]
        %v1320 = vld [vmem:[#allocation7 + $0x120] sm:$0xff]
        %v1321 = vld [vmem:[#allocation7 + $0x128] sm:$0xff]
        %v1322 = vld [vmem:[#allocation7 + $0x130] sm:$0xff]
        %v1323 = vld [vmem:[#allocation7 + $0x138] sm:$0xff]
        %v1324 = vld [vmem:[#allocation7 + $0x140] sm:$0xff]
        %v1325 = vld [vmem:[#allocation7 + $0x148] sm:$0xff]
        %v1326 = vld [vmem:[#allocation7 + $0x150] sm:$0xff]
        %v1327 = vld [vmem:[#allocation7 + $0x158] sm:$0xff]
        %v1328 = vld [vmem:[#allocation7 + $0x160] sm:$0xff]
        %v1329 = vld [vmem:[#allocation7 + $0x168] sm:$0xff]
        %v1330 = vld [vmem:[#allocation7 + $0x170] sm:$0xff]
        %v1331 = vld [vmem:[#allocation7 + $0x178] sm:$0xff]
        %v1332 = vld [vmem:[#allocation7 + $0x180] sm:$0xff]
        %v1333 = vld [vmem:[#allocation7 + $0x188] sm:$0xff]
        %v1334 = vld [vmem:[#allocation7 + $0x190] sm:$0xff]
        %v1335 = vld [vmem:[#allocation7 + $0x198] sm:$0xff]
        %v1336 = vld [vmem:[#allocation7 + $0x1a0] sm:$0xff]
        %v1337 = vld [vmem:[#allocation7 + $0x1a8] sm:$0xff]
        %v1338 = vld [vmem:[#allocation7 + $0x1b0] sm:$0xff]
        %v1339 = vld [vmem:[#allocation7 + $0x1b8] sm:$0xff]
        %v1340 = vld [vmem:[#allocation7 + $0x1c0] sm:$0xff]
        %v1341 = vld [vmem:[#allocation7 + $0x1c8] sm:$0xff]
        %v1342 = vld [vmem:[#allocation7 + $0x1d0] sm:$0xff]
        %v1343 = vld [vmem:[#allocation7 + $0x1d8] sm:$0xff]
        %v1344 = vld [vmem:[#allocation7 + $0x1e0] sm:$0xff]
        %v1345 = vld [vmem:[#allocation7 + $0x1e8] sm:$0xff]
        %v1346 = vld [vmem:[#allocation7 + $0x1f0] sm:$0xff]
        %v1347 = vld [vmem:[#allocation7 + $0x1f8] sm:$0xff]
        %v1348 = vld [vmem:[#allocation7 + $0x200] sm:$0xff]
        %v1349 = vld [vmem:[#allocation7 + $0x208] sm:$0xff]
        %v1350 = vld [vmem:[#allocation7 + $0x210] sm:$0xff]
        %v1351 = vld [vmem:[#allocation7 + $0x218] sm:$0xff]
        %v1352 = vld [vmem:[#allocation7 + $0x220] sm:$0xff]
        %v1353 = vld [vmem:[#allocation7 + $0x228] sm:$0xff]
        %v1354 = vld [vmem:[#allocation7 + $0x230] sm:$0xff]
        %v1355 = vld [vmem:[#allocation7 + $0x238] sm:$0xff]
        %v1356 = vld [vmem:[#allocation7 + $0x240] sm:$0xff]
        %v1357 = vld [vmem:[#allocation7 + $0x248] sm:$0xff]
        %v1358 = vld [vmem:[#allocation7 + $0x250] sm:$0xff]
        %v1359 = vld [vmem:[#allocation7 + $0x258] sm:$0xff]
        %v1360 = vld [vmem:[#allocation7 + $0x260] sm:$0xff]
        %v1361 = vld [vmem:[#allocation7 + $0x268] sm:$0xff]
        %v1362 = vld [vmem:[#allocation7 + $0x270] sm:$0xff]
        %v1363 = vld [vmem:[#allocation7 + $0x278] sm:$0xff]
        %v1364 = vld [vmem:[#allocation7 + $0x280] sm:$0xff]
        %v1365 = vld [vmem:[#allocation7 + $0x288] sm:$0xff]
        %v1366 = vld [vmem:[#allocation7 + $0x290] sm:$0xff]
        %v1367 = vld [vmem:[#allocation7 + $0x298] sm:$0xff]
        %v1368 = vld [vmem:[#allocation7 + $0x2a0] sm:$0xff]
        %v1369 = vld [vmem:[#allocation7 + $0x2a8] sm:$0xff]
        %v1370 = vld [vmem:[#allocation7 + $0x2b0] sm:$0xff]
        %v1371 = vld [vmem:[#allocation7 + $0x2b8] sm:$0xff]
        %v1372 = vld [vmem:[#allocation7 + $0x2c0] sm:$0xff]
        %v1373 = vld [vmem:[#allocation7 + $0x2c8] sm:$0xff]
        %v1374 = vld [vmem:[#allocation7 + $0x2d0] sm:$0xff]
        %v1375 = vld [vmem:[#allocation7 + $0x2d8] sm:$0xff]
        %v1376 = vld [vmem:[#allocation7 + $0x2e0] sm:$0xff]
        %v1377 = vld [vmem:[#allocation7 + $0x2e8] sm:$0xff]
        %v1378 = vld [vmem:[#allocation7 + $0x2f0] sm:$0xff]
        %v1379 = vld [vmem:[#allocation7 + $0x2f8] sm:$0xff]
        %v1380 = vld [vmem:[#allocation7 + $0x300] sm:$0xff]
        %v1381 = vld [vmem:[#allocation7 + $0x308] sm:$0xff]
        %v1382 = vld [vmem:[#allocation7 + $0x310] sm:$0xff]
        %v1383 = vld [vmem:[#allocation7 + $0x318] sm:$0xff]
        %v1384 = vld [vmem:[#allocation7 + $0x320] sm:$0xff]
        %v1385 = vld [vmem:[#allocation7 + $0x328] sm:$0xff]
        %v1386 = vld [vmem:[#allocation7 + $0x330] sm:$0xff]
        %v1387 = vld [vmem:[#allocation7 + $0x338] sm:$0xff]
        %v1388 = vld [vmem:[#allocation7 + $0x340] sm:$0xff]
        %v1389 = vld [vmem:[#allocation7 + $0x348] sm:$0xff]
        %v1390 = vld [vmem:[#allocation7 + $0x350] sm:$0xff]
        %v1391 = vld [vmem:[#allocation7 + $0x358] sm:$0xff]
        %v1392 = vld [vmem:[#allocation7 + $0x360] sm:$0xff]
        %v1393 = vld [vmem:[#allocation7 + $0x368] sm:$0xff]
        %v1394 = vld [vmem:[#allocation7 + $0x370] sm:$0xff]
        %v1395 = vld [vmem:[#allocation7 + $0x378] sm:$0xff]
        %v1396 = vld [vmem:[#allocation7 + $0x380] sm:$0xff]
        %v1397 = vld [vmem:[#allocation7 + $0x388] sm:$0xff]
        %v1398 = vld [vmem:[#allocation7 + $0x390] sm:$0xff]
        %v1399 = vld [vmem:[#allocation7 + $0x398] sm:$0xff]
        %v1400 = vld [vmem:[#allocation7 + $0x3a0] sm:$0xff]
        %v1401 = vld [vmem:[#allocation7 + $0x3a8] sm:$0xff]
        %v1402 = vld [vmem:[#allocation7 + $0x3b0] sm:$0xff]
        %v1403 = vld [vmem:[#allocation7 + $0x3b8] sm:$0xff]
        %v1404 = vld [vmem:[#allocation7 + $0x3c0] sm:$0xff]
        %v1405 = vld [vmem:[#allocation7 + $0x3c8] sm:$0xff]
        %v1406 = vld [vmem:[#allocation7 + $0x3d0] sm:$0xff]
        %v1407 = vld [vmem:[#allocation7 + $0x3d8] sm:$0xff]
        %v1408 = vld [vmem:[#allocation7 + $0x3e0] sm:$0xff]
        %v1409 = vld [vmem:[#allocation7 + $0x3e8] sm:$0xff]
        %v1410 = vld [vmem:[#allocation7 + $0x3f0] sm:$0xff]
        %v1411 = vld [vmem:[#allocation7 + $0x3f8] sm:$0xff]
        %v1412 = vld [vmem:[#allocation7 + $0x400] sm:$0xff]
        %v1413 = vld [vmem:[#allocation7 + $0x408] sm:$0xff]
        %v1414 = vld [vmem:[#allocation7 + $0x410] sm:$0xff]
        %v1415 = vld [vmem:[#allocation7 + $0x418] sm:$0xff]
        %v1416 = vld [vmem:[#allocation7 + $0x420] sm:$0xff]
        %v1417 = vld [vmem:[#allocation7 + $0x428] sm:$0xff]
        %v1418 = vld [vmem:[#allocation7 + $0x430] sm:$0xff]
        %v1419 = vld [vmem:[#allocation7 + $0x438] sm:$0xff]
        %v1420 = vld [vmem:[#allocation7 + $0x440] sm:$0xff]
        %v1421 = vld [vmem:[#allocation7 + $0x448] sm:$0xff]
        %v1422 = vld [vmem:[#allocation7 + $0x450] sm:$0xff]
        %v1423 = vld [vmem:[#allocation7 + $0x458] sm:$0xff]
        %v1424 = vld [vmem:[#allocation7 + $0x460] sm:$0xff]
        %v1425 = vld [vmem:[#allocation7 + $0x468] sm:$0xff]
        %v1426 = vld [vmem:[#allocation7 + $0x470] sm:$0xff]
        %v1427 = vld [vmem:[#allocation7 + $0x478] sm:$0xff]
        %v1428 = vld [vmem:[#allocation7 + $0x480] sm:$0xff]
        %v1429 = vld [vmem:[#allocation7 + $0x488] sm:$0xff]
        %v1430 = vld [vmem:[#allocation7 + $0x490] sm:$0xff]
        %v1431 = vld [vmem:[#allocation7 + $0x498] sm:$0xff]
        %v1432 = vld [vmem:[#allocation7 + $0x4a0] sm:$0xff]
        %v1433 = vld [vmem:[#allocation7 + $0x4a8] sm:$0xff]
        %v1434 = vld [vmem:[#allocation7 + $0x4b0] sm:$0xff]
        %v1435 = vld [vmem:[#allocation7 + $0x4b8] sm:$0xff]
        %v1436 = vld [vmem:[#allocation7 + $0x4c0] sm:$0xff]
        %v1437 = vld [vmem:[#allocation7 + $0x4c8] sm:$0xff]
        %v1438 = vld [vmem:[#allocation7 + $0x4d0] sm:$0xff]
        %v1439 = vld [vmem:[#allocation7 + $0x4d8] sm:$0xff]
        %v1440 = vld [vmem:[#allocation7 + $0x4e0] sm:$0xff]
        %v1441 = vld [vmem:[#allocation7 + $0x4e8] sm:$0xff]
        %v1442 = vld [vmem:[#allocation7 + $0x4f0] sm:$0xff]
        %v1443 = vld [vmem:[#allocation7 + $0x4f8] sm:$0xff]
        %v1444 = vld [vmem:[#allocation7 + $0x500] sm:$0xff]
        %v1445 = vld [vmem:[#allocation7 + $0x508] sm:$0xff]
        %v1446 = vld [vmem:[#allocation7 + $0x510] sm:$0xff]
        %v1447 = vld [vmem:[#allocation7 + $0x518] sm:$0xff]
        %v1448 = vld [vmem:[#allocation7 + $0x520] sm:$0xff]
        %v1449 = vld [vmem:[#allocation7 + $0x528] sm:$0xff]
        %v1450 = vld [vmem:[#allocation7 + $0x530] sm:$0xff]
        %v1451 = vld [vmem:[#allocation7 + $0x538] sm:$0xff]
        %v1452 = vld [vmem:[#allocation7 + $0x540] sm:$0xff]
        %v1453 = vld [vmem:[#allocation7 + $0x548] sm:$0xff]
        %v1454 = vld [vmem:[#allocation7 + $0x550] sm:$0xff]
        %v1455 = vld [vmem:[#allocation7 + $0x558] sm:$0xff]
        %v1456 = vld [vmem:[#allocation7 + $0x560] sm:$0xff]
        %v1457 = vld [vmem:[#allocation7 + $0x568] sm:$0xff]
        %v1458 = vld [vmem:[#allocation7 + $0x570] sm:$0xff]
        %v1459 = vld [vmem:[#allocation7 + $0x578] sm:$0xff]
        %v1460 = vld [vmem:[#allocation7 + $0x580] sm:$0xff]
        %v1461 = vld [vmem:[#allocation7 + $0x588] sm:$0xff]
        %v1462 = vld [vmem:[#allocation7 + $0x590] sm:$0xff]
        %v1463 = vld [vmem:[#allocation7 + $0x598] sm:$0xff]
        %v1464 = vld [vmem:[#allocation7 + $0x5a0] sm:$0xff]
        %v1465 = vld [vmem:[#allocation7 + $0x5a8] sm:$0xff]
        %v1466 = vld [vmem:[#allocation7 + $0x5b0] sm:$0xff]
        %v1467 = vld [vmem:[#allocation7 + $0x5b8] sm:$0xff]
        %v1468 = vld [vmem:[#allocation7 + $0x5c0] sm:$0xff]
        %v1469 = vld [vmem:[#allocation7 + $0x5c8] sm:$0xff]
        %v1470 = vld [vmem:[#allocation7 + $0x5d0] sm:$0xff]
        %v1471 = vld [vmem:[#allocation7 + $0x5d8] sm:$0xff]
        %v1472 = vld [vmem:[#allocation7 + $0x5e0] sm:$0xff]
        %v1473 = vld [vmem:[#allocation7 + $0x5e8] sm:$0xff]
        %v1474 = vld [vmem:[#allocation7 + $0x5f0] sm:$0xff]
        %v1475 = vld [vmem:[#allocation7 + $0x5f8] sm:$0xff]
        %v1476 = vld [vmem:[#allocation7 + $0x600] sm:$0xff]
        %v1477 = vld [vmem:[#allocation7 + $0x608] sm:$0xff]
        %v1478 = vld [vmem:[#allocation7 + $0x610] sm:$0xff]
        %v1479 = vld [vmem:[#allocation7 + $0x618] sm:$0xff]
        %v1480 = vld [vmem:[#allocation7 + $0x620] sm:$0xff]
        %v1481 = vld [vmem:[#allocation7 + $0x628] sm:$0xff]
        %v1482 = vld [vmem:[#allocation7 + $0x630] sm:$0xff]
        %v1483 = vld [vmem:[#allocation7 + $0x638] sm:$0xff]
        %v1484 = vld [vmem:[#allocation7 + $0x640] sm:$0xff]
        %v1485 = vld [vmem:[#allocation7 + $0x648] sm:$0xff]
        %v1486 = vld [vmem:[#allocation7 + $0x650] sm:$0xff]
        %v1487 = vld [vmem:[#allocation7 + $0x658] sm:$0xff]
        %v1488 = vld [vmem:[#allocation7 + $0x660] sm:$0xff]
        %v1489 = vld [vmem:[#allocation7 + $0x668] sm:$0xff]
        %v1490 = vld [vmem:[#allocation7 + $0x670] sm:$0xff]
        %v1491 = vld [vmem:[#allocation7 + $0x678] sm:$0xff]
        %v1492 = vld [vmem:[#allocation7 + $0x680] sm:$0xff]
        %v1493 = vld [vmem:[#allocation7 + $0x688] sm:$0xff]
        %v1494 = vld [vmem:[#allocation7 + $0x690] sm:$0xff]
        %v1495 = vld [vmem:[#allocation7 + $0x698] sm:$0xff]
        %v1496 = vld [vmem:[#allocation7 + $0x6a0] sm:$0xff]
        %v1497 = vld [vmem:[#allocation7 + $0x6a8] sm:$0xff]
        %v1498 = vld [vmem:[#allocation7 + $0x6b0] sm:$0xff]
        %v1499 = vld [vmem:[#allocation7 + $0x6b8] sm:$0xff]
        %v1500 = vld [vmem:[#allocation7 + $0x6c0] sm:$0xff]
        %v1501 = vld [vmem:[#allocation7 + $0x6c8] sm:$0xff]
        %v1502 = vld [vmem:[#allocation7 + $0x6d0] sm:$0xff]
        %v1503 = vld [vmem:[#allocation7 + $0x6d8] sm:$0xff]
        %v1504 = vld [vmem:[#allocation7 + $0x6e0] sm:$0xff]
        %v1505 = vld [vmem:[#allocation7 + $0x6e8] sm:$0xff]
        %v1506 = vld [vmem:[#allocation7 + $0x6f0] sm:$0xff]
        %v1507 = vld [vmem:[#allocation7 + $0x6f8] sm:$0xff]
        %v1508 = vld [vmem:[#allocation7 + $0x700] sm:$0xff]
        %v1509 = vld [vmem:[#allocation7 + $0x708] sm:$0xff]
        %v1510 = vld [vmem:[#allocation7 + $0x710] sm:$0xff]
        %v1511 = vld [vmem:[#allocation7 + $0x718] sm:$0xff]
        %v1512 = vld [vmem:[#allocation7 + $0x720] sm:$0xff]
        %v1513 = vld [vmem:[#allocation7 + $0x728] sm:$0xff]
        %v1514 = vld [vmem:[#allocation7 + $0x730] sm:$0xff]
        %v1515 = vld [vmem:[#allocation7 + $0x738] sm:$0xff]
        %v1516 = vld [vmem:[#allocation7 + $0x740] sm:$0xff]
        %v1517 = vld [vmem:[#allocation7 + $0x748] sm:$0xff]
        %v1518 = vld [vmem:[#allocation7 + $0x750] sm:$0xff]
        %v1519 = vld [vmem:[#allocation7 + $0x758] sm:$0xff]
        %v1520 = vld [vmem:[#allocation7 + $0x760] sm:$0xff]
        %v1521 = vld [vmem:[#allocation7 + $0x768] sm:$0xff]
        %v1522 = vld [vmem:[#allocation7 + $0x770] sm:$0xff]
        %v1523 = vld [vmem:[#allocation7 + $0x778] sm:$0xff]
        %v1524 = vld [vmem:[#allocation7 + $0x780] sm:$0xff]
        %v1525 = vld [vmem:[#allocation7 + $0x788] sm:$0xff]
        %v1526 = vld [vmem:[#allocation7 + $0x790] sm:$0xff]
        %v1527 = vld [vmem:[#allocation7 + $0x798] sm:$0xff]
        %v1528 = vld [vmem:[#allocation7 + $0x7a0] sm:$0xff]
        %v1529 = vld [vmem:[#allocation7 + $0x7a8] sm:$0xff]
        %v1530 = vld [vmem:[#allocation7 + $0x7b0] sm:$0xff]
        %v1531 = vld [vmem:[#allocation7 + $0x7b8] sm:$0xff]
        %v1532 = vld [vmem:[#allocation7 + $0x7c0] sm:$0xff]
        %v1533 = vld [vmem:[#allocation7 + $0x7c8] sm:$0xff]
        %v1534 = vld [vmem:[#allocation7 + $0x7d0] sm:$0xff]
        %v1535 = vld [vmem:[#allocation7 + $0x7d8] sm:$0xff]
        %v1536 = vld [vmem:[#allocation7 + $0x7e0] sm:$0xff]
        %v1537 = vld [vmem:[#allocation7 + $0x7e8] sm:$0xff]
        %v1538 = vld [vmem:[#allocation7 + $0x7f0] sm:$0xff]
        %v1539 = vld [vmem:[#allocation7 + $0x7f8] sm:$0xff]
        %v1540 = vld [vmem:[%s8] sm:$0xff]
        %v1542 = vlaneseq
        %v1543 = vshrl.u32 %v1542, 7
        %v1544 = vsub.s32 0, %v1543
        %v1545 = vrot.slane %v1540, %v1544
        %v1546 = vlaneseq
        %v1547 = vshrl.u32 %v1546, 7
        %v1548 = vsub.s32 1, %v1547
        %v1549 = vrot.slane %v1540, %v1548
        %v1550 = vlaneseq
        %v1551 = vshrl.u32 %v1550, 7
        %v1552 = vsub.s32 2, %v1551
        %v1553 = vrot.slane %v1540, %v1552
        %v1554 = vlaneseq
        %v1555 = vshrl.u32 %v1554, 7
        %v1556 = vsub.s32 3, %v1555
        %v1557 = vrot.slane %v1540, %v1556
        %v1558 = vlaneseq
        %v1559 = vshrl.u32 %v1558, 7
        %v1560 = vsub.s32 4, %v1559
        %v1561 = vrot.slane %v1540, %v1560
        %v1562 = vlaneseq
        %v1563 = vshrl.u32 %v1562, 7
        %v1564 = vsub.s32 5, %v1563
        %v1565 = vrot.slane %v1540, %v1564
        %v1566 = vlaneseq
        %v1567 = vshrl.u32 %v1566, 7
        %v1568 = vsub.s32 6, %v1567
        %v1569 = vrot.slane %v1540, %v1568
        %v1570 = vlaneseq
        %v1571 = vshrl.u32 %v1570, 7
        %v1572 = vsub.s32 7, %v1571
        %v1573 = vrot.slane %v1540, %v1572
        %v1838 = vunpack.c.l.b16 %v1284
        %v1839 = vunpack.c.h.b16 %v1284
        %v1840 = vunpack.c.l.b16 %v1285
        %v1841 = vunpack.c.h.b16 %v1285
        %v1842 = vunpack.c.l.b16 %v1286
        %v1843 = vunpack.c.h.b16 %v1286
        %v1844 = vunpack.c.l.b16 %v1287
        %v1845 = vunpack.c.h.b16 %v1287
        %v1846 = vunpack.c.l.b16 %v1288
        %v1847 = vunpack.c.h.b16 %v1288
        %v1848 = vunpack.c.l.b16 %v1289
        %v1849 = vunpack.c.h.b16 %v1289
        %v1850 = vunpack.c.l.b16 %v1290
        %v1851 = vunpack.c.h.b16 %v1290
        %v1852 = vunpack.c.l.b16 %v1291
        %v1853 = vunpack.c.h.b16 %v1291
        %v1854 = vunpack.c.l.b16 %v1292
        %v1855 = vunpack.c.h.b16 %v1292
        %v1856 = vunpack.c.l.b16 %v1293
        %v1857 = vunpack.c.h.b16 %v1293
        %v1858 = vunpack.c.l.b16 %v1294
        %v1859 = vunpack.c.h.b16 %v1294
        %v1860 = vunpack.c.l.b16 %v1295
        %v1861 = vunpack.c.h.b16 %v1295
        %v1862 = vunpack.c.l.b16 %v1296
        %v1863 = vunpack.c.h.b16 %v1296
        %v1864 = vunpack.c.l.b16 %v1297
        %v1865 = vunpack.c.h.b16 %v1297
        %v1866 = vunpack.c.l.b16 %v1298
        %v1867 = vunpack.c.h.b16 %v1298
        %v1868 = vunpack.c.l.b16 %v1299
        %v1869 = vunpack.c.h.b16 %v1299
        %v1870 = vunpack.c.l.b16 %v1300
        %v1871 = vunpack.c.h.b16 %v1300
        %v1872 = vunpack.c.l.b16 %v1301
        %v1873 = vunpack.c.h.b16 %v1301
        %v1874 = vunpack.c.l.b16 %v1302
        %v1875 = vunpack.c.h.b16 %v1302
        %v1876 = vunpack.c.l.b16 %v1303
        %v1877 = vunpack.c.h.b16 %v1303
        %v1878 = vunpack.c.l.b16 %v1304
        %v1879 = vunpack.c.h.b16 %v1304
        %v1880 = vunpack.c.l.b16 %v1305
        %v1881 = vunpack.c.h.b16 %v1305
        %v1882 = vunpack.c.l.b16 %v1306
        %v1883 = vunpack.c.h.b16 %v1306
        %v1884 = vunpack.c.l.b16 %v1307
        %v1885 = vunpack.c.h.b16 %v1307
        %v1886 = vunpack.c.l.b16 %v1308
        %v1887 = vunpack.c.h.b16 %v1308
        %v1888 = vunpack.c.l.b16 %v1309
        %v1889 = vunpack.c.h.b16 %v1309
        %v1890 = vunpack.c.l.b16 %v1310
        %v1891 = vunpack.c.h.b16 %v1310
        %v1892 = vunpack.c.l.b16 %v1311
        %v1893 = vunpack.c.h.b16 %v1311
        %v1894 = vunpack.c.l.b16 %v1312
        %v1895 = vunpack.c.h.b16 %v1312
        %v1896 = vunpack.c.l.b16 %v1313
        %v1897 = vunpack.c.h.b16 %v1313
        %v1898 = vunpack.c.l.b16 %v1314
        %v1899 = vunpack.c.h.b16 %v1314
        %v1900 = vunpack.c.l.b16 %v1315
        %v1901 = vunpack.c.h.b16 %v1315
        %v1902 = vunpack.c.l.b16 %v1316
        %v1903 = vunpack.c.h.b16 %v1316
        %v1904 = vunpack.c.l.b16 %v1317
        %v1905 = vunpack.c.h.b16 %v1317
        %v1906 = vunpack.c.l.b16 %v1318
        %v1907 = vunpack.c.h.b16 %v1318
        %v1908 = vunpack.c.l.b16 %v1319
        %v1909 = vunpack.c.h.b16 %v1319
        %v1910 = vunpack.c.l.b16 %v1320
        %v1911 = vunpack.c.h.b16 %v1320
        %v1912 = vunpack.c.l.b16 %v1321
        %v1913 = vunpack.c.h.b16 %v1321
        %v1914 = vunpack.c.l.b16 %v1322
        %v1915 = vunpack.c.h.b16 %v1322
        %v1916 = vunpack.c.l.b16 %v1323
        %v1917 = vunpack.c.h.b16 %v1323
        %v1918 = vunpack.c.l.b16 %v1324
        %v1919 = vunpack.c.h.b16 %v1324
        %v1920 = vunpack.c.l.b16 %v1325
        %v1921 = vunpack.c.h.b16 %v1325
        %v1922 = vunpack.c.l.b16 %v1326
        %v1923 = vunpack.c.h.b16 %v1326
        %v1924 = vunpack.c.l.b16 %v1327
        %v1925 = vunpack.c.h.b16 %v1327
        %v1926 = vunpack.c.l.b16 %v1328
        %v1927 = vunpack.c.h.b16 %v1328
        %v1928 = vunpack.c.l.b16 %v1329
        %v1929 = vunpack.c.h.b16 %v1329
        %v1930 = vunpack.c.l.b16 %v1330
        %v1931 = vunpack.c.h.b16 %v1330
        %v1932 = vunpack.c.l.b16 %v1331
        %v1933 = vunpack.c.h.b16 %v1331
        %v1934 = vunpack.c.l.b16 %v1332
        %v1935 = vunpack.c.h.b16 %v1332
        %v1936 = vunpack.c.l.b16 %v1333
        %v1937 = vunpack.c.h.b16 %v1333
        %v1938 = vunpack.c.l.b16 %v1334
        %v1939 = vunpack.c.h.b16 %v1334
        %v1940 = vunpack.c.l.b16 %v1335
        %v1941 = vunpack.c.h.b16 %v1335
        %v1942 = vunpack.c.l.b16 %v1336
        %v1943 = vunpack.c.h.b16 %v1336
        %v1944 = vunpack.c.l.b16 %v1337
        %v1945 = vunpack.c.h.b16 %v1337
        %v1946 = vunpack.c.l.b16 %v1338
        %v1947 = vunpack.c.h.b16 %v1338
        %v1948 = vunpack.c.l.b16 %v1339
        %v1949 = vunpack.c.h.b16 %v1339
        %v1950 = vunpack.c.l.b16 %v1340
        %v1951 = vunpack.c.h.b16 %v1340
        %v1952 = vunpack.c.l.b16 %v1341
        %v1953 = vunpack.c.h.b16 %v1341
        %v1954 = vunpack.c.l.b16 %v1342
        %v1955 = vunpack.c.h.b16 %v1342
        %v1956 = vunpack.c.l.b16 %v1343
        %v1957 = vunpack.c.h.b16 %v1343
        %v1958 = vunpack.c.l.b16 %v1344
        %v1959 = vunpack.c.h.b16 %v1344
        %v1960 = vunpack.c.l.b16 %v1345
        %v1961 = vunpack.c.h.b16 %v1345
        %v1962 = vunpack.c.l.b16 %v1346
        %v1963 = vunpack.c.h.b16 %v1346
        %v1964 = vunpack.c.l.b16 %v1347
        %v1965 = vunpack.c.h.b16 %v1347
        %v1966 = vunpack.c.l.b16 %v1348
        %v1967 = vunpack.c.h.b16 %v1348
        %v1968 = vunpack.c.l.b16 %v1349
        %v1969 = vunpack.c.h.b16 %v1349
        %v1970 = vunpack.c.l.b16 %v1350
        %v1971 = vunpack.c.h.b16 %v1350
        %v1972 = vunpack.c.l.b16 %v1351
        %v1973 = vunpack.c.h.b16 %v1351
        %v1974 = vunpack.c.l.b16 %v1352
        %v1975 = vunpack.c.h.b16 %v1352
        %v1976 = vunpack.c.l.b16 %v1353
        %v1977 = vunpack.c.h.b16 %v1353
        %v1978 = vunpack.c.l.b16 %v1354
        %v1979 = vunpack.c.h.b16 %v1354
        %v1980 = vunpack.c.l.b16 %v1355
        %v1981 = vunpack.c.h.b16 %v1355
        %v1982 = vunpack.c.l.b16 %v1356
        %v1983 = vunpack.c.h.b16 %v1356
        %v1984 = vunpack.c.l.b16 %v1357
        %v1985 = vunpack.c.h.b16 %v1357
        %v1986 = vunpack.c.l.b16 %v1358
        %v1987 = vunpack.c.h.b16 %v1358
        %v1988 = vunpack.c.l.b16 %v1359
        %v1989 = vunpack.c.h.b16 %v1359
        %v1990 = vunpack.c.l.b16 %v1360
        %v1991 = vunpack.c.h.b16 %v1360
        %v1992 = vunpack.c.l.b16 %v1361
        %v1993 = vunpack.c.h.b16 %v1361
        %v1994 = vunpack.c.l.b16 %v1362
        %v1995 = vunpack.c.h.b16 %v1362
        %v1996 = vunpack.c.l.b16 %v1363
        %v1997 = vunpack.c.h.b16 %v1363
        %v1998 = vunpack.c.l.b16 %v1364
        %v1999 = vunpack.c.h.b16 %v1364
        %v2000 = vunpack.c.l.b16 %v1365
        %v2001 = vunpack.c.h.b16 %v1365
        %v2002 = vunpack.c.l.b16 %v1366
        %v2003 = vunpack.c.h.b16 %v1366
        %v2004 = vunpack.c.l.b16 %v1367
        %v2005 = vunpack.c.h.b16 %v1367
        %v2006 = vunpack.c.l.b16 %v1368
        %v2007 = vunpack.c.h.b16 %v1368
        %v2008 = vunpack.c.l.b16 %v1369
        %v2009 = vunpack.c.h.b16 %v1369
        %v2010 = vunpack.c.l.b16 %v1370
        %v2011 = vunpack.c.h.b16 %v1370
        %v2012 = vunpack.c.l.b16 %v1371
        %v2013 = vunpack.c.h.b16 %v1371
        %v2014 = vunpack.c.l.b16 %v1372
        %v2015 = vunpack.c.h.b16 %v1372
        %v2016 = vunpack.c.l.b16 %v1373
        %v2017 = vunpack.c.h.b16 %v1373
        %v2018 = vunpack.c.l.b16 %v1374
        %v2019 = vunpack.c.h.b16 %v1374
        %v2020 = vunpack.c.l.b16 %v1375
        %v2021 = vunpack.c.h.b16 %v1375
        %v2022 = vunpack.c.l.b16 %v1376
        %v2023 = vunpack.c.h.b16 %v1376
        %v2024 = vunpack.c.l.b16 %v1377
        %v2025 = vunpack.c.h.b16 %v1377
        %v2026 = vunpack.c.l.b16 %v1378
        %v2027 = vunpack.c.h.b16 %v1378
        %v2028 = vunpack.c.l.b16 %v1379
        %v2029 = vunpack.c.h.b16 %v1379
        %v2030 = vunpack.c.l.b16 %v1380
        %v2031 = vunpack.c.h.b16 %v1380
        %v2032 = vunpack.c.l.b16 %v1381
        %v2033 = vunpack.c.h.b16 %v1381
        %v2034 = vunpack.c.l.b16 %v1382
        %v2035 = vunpack.c.h.b16 %v1382
        %v2036 = vunpack.c.l.b16 %v1383
        %v2037 = vunpack.c.h.b16 %v1383
        %v2038 = vunpack.c.l.b16 %v1384
        %v2039 = vunpack.c.h.b16 %v1384
        %v2040 = vunpack.c.l.b16 %v1385
        %v2041 = vunpack.c.h.b16 %v1385
        %v2042 = vunpack.c.l.b16 %v1386
        %v2043 = vunpack.c.h.b16 %v1386
        %v2044 = vunpack.c.l.b16 %v1387
        %v2045 = vunpack.c.h.b16 %v1387
        %v2046 = vunpack.c.l.b16 %v1388
        %v2047 = vunpack.c.h.b16 %v1388
        %v2048 = vunpack.c.l.b16 %v1389
        %v2049 = vunpack.c.h.b16 %v1389
        %v2050 = vunpack.c.l.b16 %v1390
        %v2051 = vunpack.c.h.b16 %v1390
        %v2052 = vunpack.c.l.b16 %v1391
        %v2053 = vunpack.c.h.b16 %v1391
        %v2054 = vunpack.c.l.b16 %v1392
        %v2055 = vunpack.c.h.b16 %v1392
        %v2056 = vunpack.c.l.b16 %v1393
        %v2057 = vunpack.c.h.b16 %v1393
        %v2058 = vunpack.c.l.b16 %v1394
        %v2059 = vunpack.c.h.b16 %v1394
        %v2060 = vunpack.c.l.b16 %v1395
        %v2061 = vunpack.c.h.b16 %v1395
        %v2062 = vunpack.c.l.b16 %v1396
        %v2063 = vunpack.c.h.b16 %v1396
        %v2064 = vunpack.c.l.b16 %v1397
        %v2065 = vunpack.c.h.b16 %v1397
        %v2066 = vunpack.c.l.b16 %v1398
        %v2067 = vunpack.c.h.b16 %v1398
        %v2068 = vunpack.c.l.b16 %v1399
        %v2069 = vunpack.c.h.b16 %v1399
        %v2070 = vunpack.c.l.b16 %v1400
        %v2071 = vunpack.c.h.b16 %v1400
        %v2072 = vunpack.c.l.b16 %v1401
        %v2073 = vunpack.c.h.b16 %v1401
        %v2074 = vunpack.c.l.b16 %v1402
        %v2075 = vunpack.c.h.b16 %v1402
        %v2076 = vunpack.c.l.b16 %v1403
        %v2077 = vunpack.c.h.b16 %v1403
        %v2078 = vunpack.c.l.b16 %v1404
        %v2079 = vunpack.c.h.b16 %v1404
        %v2080 = vunpack.c.l.b16 %v1405
        %v2081 = vunpack.c.h.b16 %v1405
        %v2082 = vunpack.c.l.b16 %v1406
        %v2083 = vunpack.c.h.b16 %v1406
        %v2084 = vunpack.c.l.b16 %v1407
        %v2085 = vunpack.c.h.b16 %v1407
        %v2086 = vunpack.c.l.b16 %v1408
        %v2087 = vunpack.c.h.b16 %v1408
        %v2088 = vunpack.c.l.b16 %v1409
        %v2089 = vunpack.c.h.b16 %v1409
        %v2090 = vunpack.c.l.b16 %v1410
        %v2091 = vunpack.c.h.b16 %v1410
        %v2092 = vunpack.c.l.b16 %v1411
        %v2093 = vunpack.c.h.b16 %v1411
        %v2094 = vunpack.c.l.b16 %v1412
        %v2095 = vunpack.c.h.b16 %v1412
        %v2096 = vunpack.c.l.b16 %v1413
        %v2097 = vunpack.c.h.b16 %v1413
        %v2098 = vunpack.c.l.b16 %v1414
        %v2099 = vunpack.c.h.b16 %v1414
        %v2100 = vunpack.c.l.b16 %v1415
        %v2101 = vunpack.c.h.b16 %v1415
        %v2102 = vunpack.c.l.b16 %v1416
        %v2103 = vunpack.c.h.b16 %v1416
        %v2104 = vunpack.c.l.b16 %v1417
        %v2105 = vunpack.c.h.b16 %v1417
        %v2106 = vunpack.c.l.b16 %v1418
        %v2107 = vunpack.c.h.b16 %v1418
        %v2108 = vunpack.c.l.b16 %v1419
        %v2109 = vunpack.c.h.b16 %v1419
        %v2110 = vunpack.c.l.b16 %v1420
        %v2111 = vunpack.c.h.b16 %v1420
        %v2112 = vunpack.c.l.b16 %v1421
        %v2113 = vunpack.c.h.b16 %v1421
        %v2114 = vunpack.c.l.b16 %v1422
        %v2115 = vunpack.c.h.b16 %v1422
        %v2116 = vunpack.c.l.b16 %v1423
        %v2117 = vunpack.c.h.b16 %v1423
        %v2118 = vunpack.c.l.b16 %v1424
        %v2119 = vunpack.c.h.b16 %v1424
        %v2120 = vunpack.c.l.b16 %v1425
        %v2121 = vunpack.c.h.b16 %v1425
        %v2122 = vunpack.c.l.b16 %v1426
        %v2123 = vunpack.c.h.b16 %v1426
        %v2124 = vunpack.c.l.b16 %v1427
        %v2125 = vunpack.c.h.b16 %v1427
        %v2126 = vunpack.c.l.b16 %v1428
        %v2127 = vunpack.c.h.b16 %v1428
        %v2128 = vunpack.c.l.b16 %v1429
        %v2129 = vunpack.c.h.b16 %v1429
        %v2130 = vunpack.c.l.b16 %v1430
        %v2131 = vunpack.c.h.b16 %v1430
        %v2132 = vunpack.c.l.b16 %v1431
        %v2133 = vunpack.c.h.b16 %v1431
        %v2134 = vunpack.c.l.b16 %v1432
        %v2135 = vunpack.c.h.b16 %v1432
        %v2136 = vunpack.c.l.b16 %v1433
        %v2137 = vunpack.c.h.b16 %v1433
        %v2138 = vunpack.c.l.b16 %v1434
        %v2139 = vunpack.c.h.b16 %v1434
        %v2140 = vunpack.c.l.b16 %v1435
        %v2141 = vunpack.c.h.b16 %v1435
        %v2142 = vunpack.c.l.b16 %v1436
        %v2143 = vunpack.c.h.b16 %v1436
        %v2144 = vunpack.c.l.b16 %v1437
        %v2145 = vunpack.c.h.b16 %v1437
        %v2146 = vunpack.c.l.b16 %v1438
        %v2147 = vunpack.c.h.b16 %v1438
        %v2148 = vunpack.c.l.b16 %v1439
        %v2149 = vunpack.c.h.b16 %v1439
        %v2150 = vunpack.c.l.b16 %v1440
        %v2151 = vunpack.c.h.b16 %v1440
        %v2152 = vunpack.c.l.b16 %v1441
        %v2153 = vunpack.c.h.b16 %v1441
        %v2154 = vunpack.c.l.b16 %v1442
        %v2155 = vunpack.c.h.b16 %v1442
        %v2156 = vunpack.c.l.b16 %v1443
        %v2157 = vunpack.c.h.b16 %v1443
        %v2158 = vunpack.c.l.b16 %v1444
        %v2159 = vunpack.c.h.b16 %v1444
        %v2160 = vunpack.c.l.b16 %v1445
        %v2161 = vunpack.c.h.b16 %v1445
        %v2162 = vunpack.c.l.b16 %v1446
        %v2163 = vunpack.c.h.b16 %v1446
        %v2164 = vunpack.c.l.b16 %v1447
        %v2165 = vunpack.c.h.b16 %v1447
        %v2166 = vunpack.c.l.b16 %v1448
        %v2167 = vunpack.c.h.b16 %v1448
        %v2168 = vunpack.c.l.b16 %v1449
        %v2169 = vunpack.c.h.b16 %v1449
        %v2170 = vunpack.c.l.b16 %v1450
        %v2171 = vunpack.c.h.b16 %v1450
        %v2172 = vunpack.c.l.b16 %v1451
        %v2173 = vunpack.c.h.b16 %v1451
        %v2174 = vunpack.c.l.b16 %v1452
        %v2175 = vunpack.c.h.b16 %v1452
        %v2176 = vunpack.c.l.b16 %v1453
        %v2177 = vunpack.c.h.b16 %v1453
        %v2178 = vunpack.c.l.b16 %v1454
        %v2179 = vunpack.c.h.b16 %v1454
        %v2180 = vunpack.c.l.b16 %v1455
        %v2181 = vunpack.c.h.b16 %v1455
        %v2182 = vunpack.c.l.b16 %v1456
        %v2183 = vunpack.c.h.b16 %v1456
        %v2184 = vunpack.c.l.b16 %v1457
        %v2185 = vunpack.c.h.b16 %v1457
        %v2186 = vunpack.c.l.b16 %v1458
        %v2187 = vunpack.c.h.b16 %v1458
        %v2188 = vunpack.c.l.b16 %v1459
        %v2189 = vunpack.c.h.b16 %v1459
        %v2190 = vunpack.c.l.b16 %v1460
        %v2191 = vunpack.c.h.b16 %v1460
        %v2192 = vunpack.c.l.b16 %v1461
        %v2193 = vunpack.c.h.b16 %v1461
        %v2194 = vunpack.c.l.b16 %v1462
        %v2195 = vunpack.c.h.b16 %v1462
        %v2196 = vunpack.c.l.b16 %v1463
        %v2197 = vunpack.c.h.b16 %v1463
        %v2198 = vunpack.c.l.b16 %v1464
        %v2199 = vunpack.c.h.b16 %v1464
        %v2200 = vunpack.c.l.b16 %v1465
        %v2201 = vunpack.c.h.b16 %v1465
        %v2202 = vunpack.c.l.b16 %v1466
        %v2203 = vunpack.c.h.b16 %v1466
        %v2204 = vunpack.c.l.b16 %v1467
        %v2205 = vunpack.c.h.b16 %v1467
        %v2206 = vunpack.c.l.b16 %v1468
        %v2207 = vunpack.c.h.b16 %v1468
        %v2208 = vunpack.c.l.b16 %v1469
        %v2209 = vunpack.c.h.b16 %v1469
        %v2210 = vunpack.c.l.b16 %v1470
        %v2211 = vunpack.c.h.b16 %v1470
        %v2212 = vunpack.c.l.b16 %v1471
        %v2213 = vunpack.c.h.b16 %v1471
        %v2214 = vunpack.c.l.b16 %v1472
        %v2215 = vunpack.c.h.b16 %v1472
        %v2216 = vunpack.c.l.b16 %v1473
        %v2217 = vunpack.c.h.b16 %v1473
        %v2218 = vunpack.c.l.b16 %v1474
        %v2219 = vunpack.c.h.b16 %v1474
        %v2220 = vunpack.c.l.b16 %v1475
        %v2221 = vunpack.c.h.b16 %v1475
        %v2222 = vunpack.c.l.b16 %v1476
        %v2223 = vunpack.c.h.b16 %v1476
        %v2224 = vunpack.c.l.b16 %v1477
        %v2225 = vunpack.c.h.b16 %v1477
        %v2226 = vunpack.c.l.b16 %v1478
        %v2227 = vunpack.c.h.b16 %v1478
        %v2228 = vunpack.c.l.b16 %v1479
        %v2229 = vunpack.c.h.b16 %v1479
        %v2230 = vunpack.c.l.b16 %v1480
        %v2231 = vunpack.c.h.b16 %v1480
        %v2232 = vunpack.c.l.b16 %v1481
        %v2233 = vunpack.c.h.b16 %v1481
        %v2234 = vunpack.c.l.b16 %v1482
        %v2235 = vunpack.c.h.b16 %v1482
        %v2236 = vunpack.c.l.b16 %v1483
        %v2237 = vunpack.c.h.b16 %v1483
        %v2238 = vunpack.c.l.b16 %v1484
        %v2239 = vunpack.c.h.b16 %v1484
        %v2240 = vunpack.c.l.b16 %v1485
        %v2241 = vunpack.c.h.b16 %v1485
        %v2242 = vunpack.c.l.b16 %v1486
        %v2243 = vunpack.c.h.b16 %v1486
        %v2244 = vunpack.c.l.b16 %v1487
        %v2245 = vunpack.c.h.b16 %v1487
        %v2246 = vunpack.c.l.b16 %v1488
        %v2247 = vunpack.c.h.b16 %v1488
        %v2248 = vunpack.c.l.b16 %v1489
        %v2249 = vunpack.c.h.b16 %v1489
        %v2250 = vunpack.c.l.b16 %v1490
        %v2251 = vunpack.c.h.b16 %v1490
        %v2252 = vunpack.c.l.b16 %v1491
        %v2253 = vunpack.c.h.b16 %v1491
        %v2254 = vunpack.c.l.b16 %v1492
        %v2255 = vunpack.c.h.b16 %v1492
        %v2256 = vunpack.c.l.b16 %v1493
        %v2257 = vunpack.c.h.b16 %v1493
        %v2258 = vunpack.c.l.b16 %v1494
        %v2259 = vunpack.c.h.b16 %v1494
        %v2260 = vunpack.c.l.b16 %v1495
        %v2261 = vunpack.c.h.b16 %v1495
        %v2262 = vunpack.c.l.b16 %v1496
        %v2263 = vunpack.c.h.b16 %v1496
        %v2264 = vunpack.c.l.b16 %v1497
        %v2265 = vunpack.c.h.b16 %v1497
        %v2266 = vunpack.c.l.b16 %v1498
        %v2267 = vunpack.c.h.b16 %v1498
        %v2268 = vunpack.c.l.b16 %v1499
        %v2269 = vunpack.c.h.b16 %v1499
        %v2270 = vunpack.c.l.b16 %v1500
        %v2271 = vunpack.c.h.b16 %v1500
        %v2272 = vunpack.c.l.b16 %v1501
        %v2273 = vunpack.c.h.b16 %v1501
        %v2274 = vunpack.c.l.b16 %v1502
        %v2275 = vunpack.c.h.b16 %v1502
        %v2276 = vunpack.c.l.b16 %v1503
        %v2277 = vunpack.c.h.b16 %v1503
        %v2278 = vunpack.c.l.b16 %v1504
        %v2279 = vunpack.c.h.b16 %v1504
        %v2280 = vunpack.c.l.b16 %v1505
        %v2281 = vunpack.c.h.b16 %v1505
        %v2282 = vunpack.c.l.b16 %v1506
        %v2283 = vunpack.c.h.b16 %v1506
        %v2284 = vunpack.c.l.b16 %v1507
        %v2285 = vunpack.c.h.b16 %v1507
        %v2286 = vunpack.c.l.b16 %v1508
        %v2287 = vunpack.c.h.b16 %v1508
        %v2288 = vunpack.c.l.b16 %v1509
        %v2289 = vunpack.c.h.b16 %v1509
        %v2290 = vunpack.c.l.b16 %v1510
        %v2291 = vunpack.c.h.b16 %v1510
        %v2292 = vunpack.c.l.b16 %v1511
        %v2293 = vunpack.c.h.b16 %v1511
        %v2294 = vunpack.c.l.b16 %v1512
        %v2295 = vunpack.c.h.b16 %v1512
        %v2296 = vunpack.c.l.b16 %v1513
        %v2297 = vunpack.c.h.b16 %v1513
        %v2298 = vunpack.c.l.b16 %v1514
        %v2299 = vunpack.c.h.b16 %v1514
        %v2300 = vunpack.c.l.b16 %v1515
        %v2301 = vunpack.c.h.b16 %v1515
        %v2302 = vunpack.c.l.b16 %v1516
        %v2303 = vunpack.c.h.b16 %v1516
        %v2304 = vunpack.c.l.b16 %v1517
        %v2305 = vunpack.c.h.b16 %v1517
        %v2306 = vunpack.c.l.b16 %v1518
        %v2307 = vunpack.c.h.b16 %v1518
        %v2308 = vunpack.c.l.b16 %v1519
        %v2309 = vunpack.c.h.b16 %v1519
        %v2310 = vunpack.c.l.b16 %v1520
        %v2311 = vunpack.c.h.b16 %v1520
        %v2312 = vunpack.c.l.b16 %v1521
        %v2313 = vunpack.c.h.b16 %v1521
        %v2314 = vunpack.c.l.b16 %v1522
        %v2315 = vunpack.c.h.b16 %v1522
        %v2316 = vunpack.c.l.b16 %v1523
        %v2317 = vunpack.c.h.b16 %v1523
        %v2318 = vunpack.c.l.b16 %v1524
        %v2319 = vunpack.c.h.b16 %v1524
        %v2320 = vunpack.c.l.b16 %v1525
        %v2321 = vunpack.c.h.b16 %v1525
        %v2322 = vunpack.c.l.b16 %v1526
        %v2323 = vunpack.c.h.b16 %v1526
        %v2324 = vunpack.c.l.b16 %v1527
        %v2325 = vunpack.c.h.b16 %v1527
        %v2326 = vunpack.c.l.b16 %v1528
        %v2327 = vunpack.c.h.b16 %v1528
        %v2328 = vunpack.c.l.b16 %v1529
        %v2329 = vunpack.c.h.b16 %v1529
        %v2330 = vunpack.c.l.b16 %v1530
        %v2331 = vunpack.c.h.b16 %v1530
        %v2332 = vunpack.c.l.b16 %v1531
        %v2333 = vunpack.c.h.b16 %v1531
        %v2334 = vunpack.c.l.b16 %v1532
        %v2335 = vunpack.c.h.b16 %v1532
        %v2336 = vunpack.c.l.b16 %v1533
        %v2337 = vunpack.c.h.b16 %v1533
        %v2338 = vunpack.c.l.b16 %v1534
        %v2339 = vunpack.c.h.b16 %v1534
        %v2340 = vunpack.c.l.b16 %v1535
        %v2341 = vunpack.c.h.b16 %v1535
        %v2342 = vunpack.c.l.b16 %v1536
        %v2343 = vunpack.c.h.b16 %v1536
        %v2344 = vunpack.c.l.b16 %v1537
        %v2345 = vunpack.c.h.b16 %v1537
        %v2346 = vunpack.c.l.b16 %v1538
        %v2347 = vunpack.c.h.b16 %v1538
        %v2348 = vunpack.c.l.b16 %v1539
        %v2349 = vunpack.c.h.b16 %v1539
        %v2350 = vpack.c.b16 %v1846, %v1838
        %v2351 = vpack.c.b16 %v1847, %v1839
        %v2352 = vpack.c.b16 %v1848, %v1840
        %v2353 = vpack.c.b16 %v1849, %v1841
        %v2354 = vpack.c.b16 %v1850, %v1842
        %v2355 = vpack.c.b16 %v1851, %v1843
        %v2356 = vpack.c.b16 %v1852, %v1844
        %v2357 = vpack.c.b16 %v1853, %v1845
        %v2358 = vpack.c.b16 %v1862, %v1854
        %v2359 = vpack.c.b16 %v1863, %v1855
        %v2360 = vpack.c.b16 %v1864, %v1856
        %v2361 = vpack.c.b16 %v1865, %v1857
        %v2362 = vpack.c.b16 %v1866, %v1858
        %v2363 = vpack.c.b16 %v1867, %v1859
        %v2364 = vpack.c.b16 %v1868, %v1860
        %v2365 = vpack.c.b16 %v1869, %v1861
        %v2366 = vpack.c.b16 %v1878, %v1870
        %v2367 = vpack.c.b16 %v1879, %v1871
        %v2368 = vpack.c.b16 %v1880, %v1872
        %v2369 = vpack.c.b16 %v1881, %v1873
        %v2370 = vpack.c.b16 %v1882, %v1874
        %v2371 = vpack.c.b16 %v1883, %v1875
        %v2372 = vpack.c.b16 %v1884, %v1876
        %v2373 = vpack.c.b16 %v1885, %v1877
        %v2374 = vpack.c.b16 %v1894, %v1886
        %v2375 = vpack.c.b16 %v1895, %v1887
        %v2376 = vpack.c.b16 %v1896, %v1888
        %v2377 = vpack.c.b16 %v1897, %v1889
        %v2378 = vpack.c.b16 %v1898, %v1890
        %v2379 = vpack.c.b16 %v1899, %v1891
        %v2380 = vpack.c.b16 %v1900, %v1892
        %v2381 = vpack.c.b16 %v1901, %v1893
        %v2382 = vpack.c.b16 %v1910, %v1902
        %v2383 = vpack.c.b16 %v1911, %v1903
        %v2384 = vpack.c.b16 %v1912, %v1904
        %v2385 = vpack.c.b16 %v1913, %v1905
        %v2386 = vpack.c.b16 %v1914, %v1906
        %v2387 = vpack.c.b16 %v1915, %v1907
        %v2388 = vpack.c.b16 %v1916, %v1908
        %v2389 = vpack.c.b16 %v1917, %v1909
        %v2390 = vpack.c.b16 %v1926, %v1918
        %v2391 = vpack.c.b16 %v1927, %v1919
        %v2392 = vpack.c.b16 %v1928, %v1920
        %v2393 = vpack.c.b16 %v1929, %v1921
        %v2394 = vpack.c.b16 %v1930, %v1922
        %v2395 = vpack.c.b16 %v1931, %v1923
        %v2396 = vpack.c.b16 %v1932, %v1924
        %v2397 = vpack.c.b16 %v1933, %v1925
        %v2398 = vpack.c.b16 %v1942, %v1934
        %v2399 = vpack.c.b16 %v1943, %v1935
        %v2400 = vpack.c.b16 %v1944, %v1936
        %v2401 = vpack.c.b16 %v1945, %v1937
        %v2402 = vpack.c.b16 %v1946, %v1938
        %v2403 = vpack.c.b16 %v1947, %v1939
        %v2404 = vpack.c.b16 %v1948, %v1940
        %v2405 = vpack.c.b16 %v1949, %v1941
        %v2406 = vpack.c.b16 %v1958, %v1950
        %v2407 = vpack.c.b16 %v1959, %v1951
        %v2408 = vpack.c.b16 %v1960, %v1952
        %v2409 = vpack.c.b16 %v1961, %v1953
        %v2410 = vpack.c.b16 %v1962, %v1954
        %v2411 = vpack.c.b16 %v1963, %v1955
        %v2412 = vpack.c.b16 %v1964, %v1956
        %v2413 = vpack.c.b16 %v1965, %v1957
        %v2414 = vpack.c.b16 %v1974, %v1966
        %v2415 = vpack.c.b16 %v1975, %v1967
        %v2416 = vpack.c.b16 %v1976, %v1968
        %v2417 = vpack.c.b16 %v1977, %v1969
        %v2418 = vpack.c.b16 %v1978, %v1970
        %v2419 = vpack.c.b16 %v1979, %v1971
        %v2420 = vpack.c.b16 %v1980, %v1972
        %v2421 = vpack.c.b16 %v1981, %v1973
        %v2422 = vpack.c.b16 %v1990, %v1982
        %v2423 = vpack.c.b16 %v1991, %v1983
        %v2424 = vpack.c.b16 %v1992, %v1984
        %v2425 = vpack.c.b16 %v1993, %v1985
        %v2426 = vpack.c.b16 %v1994, %v1986
        %v2427 = vpack.c.b16 %v1995, %v1987
        %v2428 = vpack.c.b16 %v1996, %v1988
        %v2429 = vpack.c.b16 %v1997, %v1989
        %v2430 = vpack.c.b16 %v2006, %v1998
        %v2431 = vpack.c.b16 %v2007, %v1999
        %v2432 = vpack.c.b16 %v2008, %v2000
        %v2433 = vpack.c.b16 %v2009, %v2001
        %v2434 = vpack.c.b16 %v2010, %v2002
        %v2435 = vpack.c.b16 %v2011, %v2003
        %v2436 = vpack.c.b16 %v2012, %v2004
        %v2437 = vpack.c.b16 %v2013, %v2005
        %v2438 = vpack.c.b16 %v2022, %v2014
        %v2439 = vpack.c.b16 %v2023, %v2015
        %v2440 = vpack.c.b16 %v2024, %v2016
        %v2441 = vpack.c.b16 %v2025, %v2017
        %v2442 = vpack.c.b16 %v2026, %v2018
        %v2443 = vpack.c.b16 %v2027, %v2019
        %v2444 = vpack.c.b16 %v2028, %v2020
        %v2445 = vpack.c.b16 %v2029, %v2021
        %v2446 = vpack.c.b16 %v2038, %v2030
        %v2447 = vpack.c.b16 %v2039, %v2031
        %v2448 = vpack.c.b16 %v2040, %v2032
        %v2449 = vpack.c.b16 %v2041, %v2033
        %v2450 = vpack.c.b16 %v2042, %v2034
        %v2451 = vpack.c.b16 %v2043, %v2035
        %v2452 = vpack.c.b16 %v2044, %v2036
        %v2453 = vpack.c.b16 %v2045, %v2037
        %v2454 = vpack.c.b16 %v2054, %v2046
        %v2455 = vpack.c.b16 %v2055, %v2047
        %v2456 = vpack.c.b16 %v2056, %v2048
        %v2457 = vpack.c.b16 %v2057, %v2049
        %v2458 = vpack.c.b16 %v2058, %v2050
        %v2459 = vpack.c.b16 %v2059, %v2051
        %v2460 = vpack.c.b16 %v2060, %v2052
        %v2461 = vpack.c.b16 %v2061, %v2053
        %v2462 = vpack.c.b16 %v2070, %v2062
        %v2463 = vpack.c.b16 %v2071, %v2063
        %v2464 = vpack.c.b16 %v2072, %v2064
        %v2465 = vpack.c.b16 %v2073, %v2065
        %v2466 = vpack.c.b16 %v2074, %v2066
        %v2467 = vpack.c.b16 %v2075, %v2067
        %v2468 = vpack.c.b16 %v2076, %v2068
        %v2469 = vpack.c.b16 %v2077, %v2069
        %v2470 = vpack.c.b16 %v2086, %v2078
        %v2471 = vpack.c.b16 %v2087, %v2079
        %v2472 = vpack.c.b16 %v2088, %v2080
        %v2473 = vpack.c.b16 %v2089, %v2081
        %v2474 = vpack.c.b16 %v2090, %v2082
        %v2475 = vpack.c.b16 %v2091, %v2083
        %v2476 = vpack.c.b16 %v2092, %v2084
        %v2477 = vpack.c.b16 %v2093, %v2085
        %v2478 = vpack.c.b16 %v2102, %v2094
        %v2479 = vpack.c.b16 %v2103, %v2095
        %v2480 = vpack.c.b16 %v2104, %v2096
        %v2481 = vpack.c.b16 %v2105, %v2097
        %v2482 = vpack.c.b16 %v2106, %v2098
        %v2483 = vpack.c.b16 %v2107, %v2099
        %v2484 = vpack.c.b16 %v2108, %v2100
        %v2485 = vpack.c.b16 %v2109, %v2101
        %v2486 = vpack.c.b16 %v2118, %v2110
        %v2487 = vpack.c.b16 %v2119, %v2111
        %v2488 = vpack.c.b16 %v2120, %v2112
        %v2489 = vpack.c.b16 %v2121, %v2113
        %v2490 = vpack.c.b16 %v2122, %v2114
        %v2491 = vpack.c.b16 %v2123, %v2115
        %v2492 = vpack.c.b16 %v2124, %v2116
        %v2493 = vpack.c.b16 %v2125, %v2117
        %v2494 = vpack.c.b16 %v2134, %v2126
        %v2495 = vpack.c.b16 %v2135, %v2127
        %v2496 = vpack.c.b16 %v2136, %v2128
        %v2497 = vpack.c.b16 %v2137, %v2129
        %v2498 = vpack.c.b16 %v2138, %v2130
        %v2499 = vpack.c.b16 %v2139, %v2131
        %v2500 = vpack.c.b16 %v2140, %v2132
        %v2501 = vpack.c.b16 %v2141, %v2133
        %v2502 = vpack.c.b16 %v2150, %v2142
        %v2503 = vpack.c.b16 %v2151, %v2143
        %v2504 = vpack.c.b16 %v2152, %v2144
        %v2505 = vpack.c.b16 %v2153, %v2145
        %v2506 = vpack.c.b16 %v2154, %v2146
        %v2507 = vpack.c.b16 %v2155, %v2147
        %v2508 = vpack.c.b16 %v2156, %v2148
        %v2509 = vpack.c.b16 %v2157, %v2149
        %v2510 = vpack.c.b16 %v2166, %v2158
        %v2511 = vpack.c.b16 %v2167, %v2159
        %v2512 = vpack.c.b16 %v2168, %v2160
        %v2513 = vpack.c.b16 %v2169, %v2161
        %v2514 = vpack.c.b16 %v2170, %v2162
        %v2515 = vpack.c.b16 %v2171, %v2163
        %v2516 = vpack.c.b16 %v2172, %v2164
        %v2517 = vpack.c.b16 %v2173, %v2165
        %v2518 = vpack.c.b16 %v2182, %v2174
        %v2519 = vpack.c.b16 %v2183, %v2175
        %v2520 = vpack.c.b16 %v2184, %v2176
        %v2521 = vpack.c.b16 %v2185, %v2177
        %v2522 = vpack.c.b16 %v2186, %v2178
        %v2523 = vpack.c.b16 %v2187, %v2179
        %v2524 = vpack.c.b16 %v2188, %v2180
        %v2525 = vpack.c.b16 %v2189, %v2181
        %v2526 = vpack.c.b16 %v2198, %v2190
        %v2527 = vpack.c.b16 %v2199, %v2191
        %v2528 = vpack.c.b16 %v2200, %v2192
        %v2529 = vpack.c.b16 %v2201, %v2193
        %v2530 = vpack.c.b16 %v2202, %v2194
        %v2531 = vpack.c.b16 %v2203, %v2195
        %v2532 = vpack.c.b16 %v2204, %v2196
        %v2533 = vpack.c.b16 %v2205, %v2197
        %v2534 = vpack.c.b16 %v2214, %v2206
        %v2535 = vpack.c.b16 %v2215, %v2207
        %v2536 = vpack.c.b16 %v2216, %v2208
        %v2537 = vpack.c.b16 %v2217, %v2209
        %v2538 = vpack.c.b16 %v2218, %v2210
        %v2539 = vpack.c.b16 %v2219, %v2211
        %v2540 = vpack.c.b16 %v2220, %v2212
        %v2541 = vpack.c.b16 %v2221, %v2213
        %v2542 = vpack.c.b16 %v2230, %v2222
        %v2543 = vpack.c.b16 %v2231, %v2223
        %v2544 = vpack.c.b16 %v2232, %v2224
        %v2545 = vpack.c.b16 %v2233, %v2225
        %v2546 = vpack.c.b16 %v2234, %v2226
        %v2547 = vpack.c.b16 %v2235, %v2227
        %v2548 = vpack.c.b16 %v2236, %v2228
        %v2549 = vpack.c.b16 %v2237, %v2229
        %v2550 = vpack.c.b16 %v2246, %v2238
        %v2551 = vpack.c.b16 %v2247, %v2239
        %v2552 = vpack.c.b16 %v2248, %v2240
        %v2553 = vpack.c.b16 %v2249, %v2241
        %v2554 = vpack.c.b16 %v2250, %v2242
        %v2555 = vpack.c.b16 %v2251, %v2243
        %v2556 = vpack.c.b16 %v2252, %v2244
        %v2557 = vpack.c.b16 %v2253, %v2245
        %v2558 = vpack.c.b16 %v2262, %v2254
        %v2559 = vpack.c.b16 %v2263, %v2255
        %v2560 = vpack.c.b16 %v2264, %v2256
        %v2561 = vpack.c.b16 %v2265, %v2257
        %v2562 = vpack.c.b16 %v2266, %v2258
        %v2563 = vpack.c.b16 %v2267, %v2259
        %v2564 = vpack.c.b16 %v2268, %v2260
        %v2565 = vpack.c.b16 %v2269, %v2261
        %v2566 = vpack.c.b16 %v2278, %v2270
        %v2567 = vpack.c.b16 %v2279, %v2271
        %v2568 = vpack.c.b16 %v2280, %v2272
        %v2569 = vpack.c.b16 %v2281, %v2273
        %v2570 = vpack.c.b16 %v2282, %v2274
        %v2571 = vpack.c.b16 %v2283, %v2275
        %v2572 = vpack.c.b16 %v2284, %v2276
        %v2573 = vpack.c.b16 %v2285, %v2277
        %v2574 = vpack.c.b16 %v2294, %v2286
        %v2575 = vpack.c.b16 %v2295, %v2287
        %v2576 = vpack.c.b16 %v2296, %v2288
        %v2577 = vpack.c.b16 %v2297, %v2289
        %v2578 = vpack.c.b16 %v2298, %v2290
        %v2579 = vpack.c.b16 %v2299, %v2291
        %v2580 = vpack.c.b16 %v2300, %v2292
        %v2581 = vpack.c.b16 %v2301, %v2293
        %v2582 = vpack.c.b16 %v2310, %v2302
        %v2583 = vpack.c.b16 %v2311, %v2303
        %v2584 = vpack.c.b16 %v2312, %v2304
        %v2585 = vpack.c.b16 %v2313, %v2305
        %v2586 = vpack.c.b16 %v2314, %v2306
        %v2587 = vpack.c.b16 %v2315, %v2307
        %v2588 = vpack.c.b16 %v2316, %v2308
        %v2589 = vpack.c.b16 %v2317, %v2309
        %v2590 = vpack.c.b16 %v2326, %v2318
        %v2591 = vpack.c.b16 %v2327, %v2319
        %v2592 = vpack.c.b16 %v2328, %v2320
        %v2593 = vpack.c.b16 %v2329, %v2321
        %v2594 = vpack.c.b16 %v2330, %v2322
        %v2595 = vpack.c.b16 %v2331, %v2323
        %v2596 = vpack.c.b16 %v2332, %v2324
        %v2597 = vpack.c.b16 %v2333, %v2325
        %v2598 = vpack.c.b16 %v2342, %v2334
        %v2599 = vpack.c.b16 %v2343, %v2335
        %v2600 = vpack.c.b16 %v2344, %v2336
        %v2601 = vpack.c.b16 %v2345, %v2337
        %v2602 = vpack.c.b16 %v2346, %v2338
        %v2603 = vpack.c.b16 %v2347, %v2339
        %v2604 = vpack.c.b16 %v2348, %v2340
        %v2605 = vpack.c.b16 %v2349, %v2341
        %2862 = vmatprep.subr.bf16.mxu0 %v2351
        %2863 = vmatpush1.bf16.msra.mxu0 %v2350
        %2864 = vmatprep.subr.bf16.mxu0 %v2359
        %2865 = vmatpush1.bf16.msra.mxu0 %v2358
        %2866 = vmatprep.subr.bf16.mxu0 %v2367
        %2867 = vmatpush1.bf16.msra.mxu0 %v2366
        %2868 = vmatprep.subr.bf16.mxu0 %v2375
        %2869 = vmatpush1.bf16.msra.mxu0 %v2374
        %2870 = vmatprep.subr.bf16.mxu0 %v2383
        %2871 = vmatpush1.bf16.msra.mxu0 %v2382
        %2872 = vmatprep.subr.bf16.mxu0 %v2391
        %2873 = vmatpush1.bf16.msra.mxu0 %v2390
        %2874 = vmatprep.subr.bf16.mxu0 %v2399
        %2875 = vmatpush1.bf16.msra.mxu0 %v2398
        %2876 = vmatprep.subr.bf16.mxu0 %v2407
        %2877 = vmatpush1.bf16.msra.mxu0 %v2406
        %2878 = vmatprep.subr.bf16.mxu0 %v2415
        %2879 = vmatpush1.bf16.msra.mxu0 %v2414
        %2880 = vmatprep.subr.bf16.mxu0 %v2423
        %2881 = vmatpush1.bf16.msra.mxu0 %v2422
        %2882 = vmatprep.subr.bf16.mxu0 %v2431
        %2883 = vmatpush1.bf16.msra.mxu0 %v2430
        %2884 = vmatprep.subr.bf16.mxu0 %v2439
        %2885 = vmatpush1.bf16.msra.mxu0 %v2438
        %2886 = vmatprep.subr.bf16.mxu0 %v2447
        %2887 = vmatpush1.bf16.msra.mxu0 %v2446
        %2888 = vmatprep.subr.bf16.mxu0 %v2455
        %2889 = vmatpush1.bf16.msra.mxu0 %v2454
        %2890 = vmatprep.subr.bf16.mxu0 %v2463
        %2891 = vmatpush1.bf16.msra.mxu0 %v2462
        %2892 = vmatprep.subr.bf16.mxu0 %v2471
        %2893 = vmatpush1.bf16.msra.mxu0 %v2470
        %2894 = vmatprep.mubr.bf16.mxu0 %v1277
        %2895 = vmatmul.mubr.bf16.gmra.mrb[0].mxu0 %v1276
        %v2896 = vpop.f32.mrb[0].mxu0
        %v2897 = vadd.f32 %v1545, %v2896
        %v2898 = vpop.f32.mrb[0].mxu0
        %v2899 = vadd.f32 %v1549, %v2898
        %v2900 = vpop.f32.mrb[0].mxu0
        %v2901 = vadd.f32 %v1545, %v2900
        %v2902 = vpop.f32.mrb[0].mxu0
        %v2903 = vadd.f32 %v1549, %v2902
        %2904 = vmatprep.mubr.bf16.mxu0 %v1281
        %2905 = vmatmul.mubr.bf16.gmra.mrb[0].mxu0 %v1280
        %v2906 = vpop.f32.mrb[0].mxu0
        %v2907 = vadd.f32 %v1545, %v2906
        %v2908 = vpop.f32.mrb[0].mxu0
        %v2909 = vadd.f32 %v1549, %v2908
        %v2910 = vpop.f32.mrb[0].mxu0
        %v2911 = vadd.f32 %v1545, %v2910
        %v2912 = vpop.f32.mrb[0].mxu0
        %v2913 = vadd.f32 %v1549, %v2912
        %2914 = vdwg.mxu0
        %2915 = vmatprep.subr.bf16.mxu0 %v2479
        %2916 = vmatpush1.bf16.msra.mxu0 %v2478
        %2917 = vmatprep.subr.bf16.mxu0 %v2487
        %2918 = vmatpush1.bf16.msra.mxu0 %v2486
        %2919 = vmatprep.subr.bf16.mxu0 %v2495
        %2920 = vmatpush1.bf16.msra.mxu0 %v2494
        %2921 = vmatprep.subr.bf16.mxu0 %v2503
        %2922 = vmatpush1.bf16.msra.mxu0 %v2502
        %2923 = vmatprep.subr.bf16.mxu0 %v2511
        %2924 = vmatpush1.bf16.msra.mxu0 %v2510
        %2925 = vmatprep.subr.bf16.mxu0 %v2519
        %2926 = vmatpush1.bf16.msra.mxu0 %v2518
        %2927 = vmatprep.subr.bf16.mxu0 %v2527
        %2928 = vmatpush1.bf16.msra.mxu0 %v2526
        %2929 = vmatprep.subr.bf16.mxu0 %v2535
        %2930 = vmatpush1.bf16.msra.mxu0 %v2534
        %2931 = vmatprep.subr.bf16.mxu0 %v2543
        %2932 = vmatpush1.bf16.msra.mxu0 %v2542
        %2933 = vmatprep.subr.bf16.mxu0 %v2551
        %2934 = vmatpush1.bf16.msra.mxu0 %v2550
        %2935 = vmatprep.subr.bf16.mxu0 %v2559
        %2936 = vmatpush1.bf16.msra.mxu0 %v2558
        %2937 = vmatprep.subr.bf16.mxu0 %v2567
        %2938 = vmatpush1.bf16.msra.mxu0 %v2566
        %2939 = vmatprep.subr.bf16.mxu0 %v2575
        %2940 = vmatpush1.bf16.msra.mxu0 %v2574
        %2941 = vmatprep.subr.bf16.mxu0 %v2583
        %2942 = vmatpush1.bf16.msra.mxu0 %v2582
        %2943 = vmatprep.subr.bf16.mxu0 %v2591
        %2944 = vmatpush1.bf16.msra.mxu0 %v2590
        %2945 = vmatprep.subr.bf16.mxu0 %v2599
        %2946 = vmatpush1.bf16.msra.mxu0 %v2598
        %2947 = vmatprep.mubr.bf16.mxu0 %v1279
        %2948 = vmatmul.mubr.bf16.gmra.mrb[0].mxu0 %v1278
        %v2949 = vpop.f32.mrb[0].mxu0
        %v2950 = vadd.f32 %v2897, %v2949
        %v2951 = vpop.f32.mrb[0].mxu0
        %v2952 = vadd.f32 %v2899, %v2951
        %v2953 = vpop.f32.mrb[0].mxu0
        %v2954 = vadd.f32 %v2901, %v2953
        %v2955 = vpop.f32.mrb[0].mxu0
        %v2956 = vadd.f32 %v2903, %v2955
        %2957 = vmatprep.mubr.bf16.mxu0 %v1283
        %2958 = vmatmul.mubr.bf16.gmra.mrb[0].mxu0 %v1282
        %v2959 = vpop.f32.mrb[0].mxu0
        %v2960 = vadd.f32 %v2907, %v2959
        %v2961 = vpop.f32.mrb[0].mxu0
        %v2962 = vadd.f32 %v2909, %v2961
        %v2963 = vpop.f32.mrb[0].mxu0
        %v2964 = vadd.f32 %v2911, %v2963
        %v2965 = vpop.f32.mrb[0].mxu0
        %v2966 = vadd.f32 %v2913, %v2965
        %2967 = vdwg.mxu0
        %2968 = vmatprep.subr.bf16.mxu0 %v2353
        %2969 = vmatpush1.bf16.msra.mxu0 %v2352
        %2970 = vmatprep.subr.bf16.mxu0 %v2361
        %2971 = vmatpush1.bf16.msra.mxu0 %v2360
        %2972 = vmatprep.subr.bf16.mxu0 %v2369
        %2973 = vmatpush1.bf16.msra.mxu0 %v2368
        %2974 = vmatprep.subr.bf16.mxu0 %v2377
        %2975 = vmatpush1.bf16.msra.mxu0 %v2376
        %2976 = vmatprep.subr.bf16.mxu0 %v2385
        %2977 = vmatpush1.bf16.msra.mxu0 %v2384
        %2978 = vmatprep.subr.bf16.mxu0 %v2393
        %2979 = vmatpush1.bf16.msra.mxu0 %v2392
        %2980 = vmatprep.subr.bf16.mxu0 %v2401
        %2981 = vmatpush1.bf16.msra.mxu0 %v2400
        %2982 = vmatprep.subr.bf16.mxu0 %v2409
        %2983 = vmatpush1.bf16.msra.mxu0 %v2408
        %2984 = vmatprep.subr.bf16.mxu0 %v2417
        %2985 = vmatpush1.bf16.msra.mxu0 %v2416
        %2986 = vmatprep.subr.bf16.mxu0 %v2425
        %2987 = vmatpush1.bf16.msra.mxu0 %v2424
        %2988 = vmatprep.subr.bf16.mxu0 %v2433
        %2989 = vmatpush1.bf16.msra.mxu0 %v2432
        %2990 = vmatprep.subr.bf16.mxu0 %v2441
        %2991 = vmatpush1.bf16.msra.mxu0 %v2440
        %2992 = vmatprep.subr.bf16.mxu0 %v2449
        %2993 = vmatpush1.bf16.msra.mxu0 %v2448
        %2994 = vmatprep.subr.bf16.mxu0 %v2457
        %2995 = vmatpush1.bf16.msra.mxu0 %v2456
        %2996 = vmatprep.subr.bf16.mxu0 %v2465
        %2997 = vmatpush1.bf16.msra.mxu0 %v2464
        %2998 = vmatprep.subr.bf16.mxu0 %v2473
        %2999 = vmatpush1.bf16.msra.mxu0 %v2472
        %3000 = vmatprep.mubr.bf16.mxu0 %v1277
        %3001 = vmatmul.mubr.bf16.gmra.mrb[0].mxu0 %v1276
        %v3002 = vpop.f32.mrb[0].mxu0
        %v3003 = vadd.f32 %v1553, %v3002
        %v3004 = vpop.f32.mrb[0].mxu0
        %v3005 = vadd.f32 %v1557, %v3004
        %v3006 = vpop.f32.mrb[0].mxu0
        %v3007 = vadd.f32 %v1553, %v3006
        %v3008 = vpop.f32.mrb[0].mxu0
        %v3009 = vadd.f32 %v1557, %v3008
        %3010 = vmatprep.mubr.bf16.mxu0 %v1281
        %3011 = vmatmul.mubr.bf16.gmra.mrb[0].mxu0 %v1280
        %v3012 = vpop.f32.mrb[0].mxu0
        %v3013 = vadd.f32 %v1553, %v3012
        %v3014 = vpop.f32.mrb[0].mxu0
        %v3015 = vadd.f32 %v1557, %v3014
        %v3016 = vpop.f32.mrb[0].mxu0
        %v3017 = vadd.f32 %v1553, %v3016
        %v3018 = vpop.f32.mrb[0].mxu0
        %v3019 = vadd.f32 %v1557, %v3018
        %3020 = vdwg.mxu0
        %3021 = vmatprep.subr.bf16.mxu0 %v2481
        %3022 = vmatpush1.bf16.msra.mxu0 %v2480
        %3023 = vmatprep.subr.bf16.mxu0 %v2489
        %3024 = vmatpush1.bf16.msra.mxu0 %v2488
        %3025 = vmatprep.subr.bf16.mxu0 %v2497
        %3026 = vmatpush1.bf16.msra.mxu0 %v2496
        %3027 = vmatprep.subr.bf16.mxu0 %v2505
        %3028 = vmatpush1.bf16.msra.mxu0 %v2504
        %3029 = vmatprep.subr.bf16.mxu0 %v2513
        %3030 = vmatpush1.bf16.msra.mxu0 %v2512
        %3031 = vmatprep.subr.bf16.mxu0 %v2521
        %3032 = vmatpush1.bf16.msra.mxu0 %v2520
        %3033 = vmatprep.subr.bf16.mxu0 %v2529
        %3034 = vmatpush1.bf16.msra.mxu0 %v2528
        %3035 = vmatprep.subr.bf16.mxu0 %v2537
        %3036 = vmatpush1.bf16.msra.mxu0 %v2536
        %3037 = vmatprep.subr.bf16.mxu0 %v2545
        %3038 = vmatpush1.bf16.msra.mxu0 %v2544
        %3039 = vmatprep.subr.bf16.mxu0 %v2553
        %3040 = vmatpush1.bf16.msra.mxu0 %v2552
        %3041 = vmatprep.subr.bf16.mxu0 %v2561
        %3042 = vmatpush1.bf16.msra.mxu0 %v2560
        %3043 = vmatprep.subr.bf16.mxu0 %v2569
        %3044 = vmatpush1.bf16.msra.mxu0 %v2568
        %3045 = vmatprep.subr.bf16.mxu0 %v2577
        %3046 = vmatpush1.bf16.msra.mxu0 %v2576
        %3047 = vmatprep.subr.bf16.mxu0 %v2585
        %3048 = vmatpush1.bf16.msra.mxu0 %v2584
        %3049 = vmatprep.subr.bf16.mxu0 %v2593
        %3050 = vmatpush1.bf16.msra.mxu0 %v2592
        %3051 = vmatprep.subr.bf16.mxu0 %v2601
        %3052 = vmatpush1.bf16.msra.mxu0 %v2600
        %3053 = vmatprep.mubr.bf16.mxu0 %v1279
        %3054 = vmatmul.mubr.bf16.gmra.mrb[0].mxu0 %v1278
        %v3055 = vpop.f32.mrb[0].mxu0
        %v3056 = vadd.f32 %v3003, %v3055
        %v3057 = vpop.f32.mrb[0].mxu0
        %v3058 = vadd.f32 %v3005, %v3057
        %v3059 = vpop.f32.mrb[0].mxu0
        %v3060 = vadd.f32 %v3007, %v3059
        %v3061 = vpop.f32.mrb[0].mxu0
        %v3062 = vadd.f32 %v3009, %v3061
        %3063 = vmatprep.mubr.bf16.mxu0 %v1283
        %3064 = vmatmul.mubr.bf16.gmra.mrb[0].mxu0 %v1282
        %v3065 = vpop.f32.mrb[0].mxu0
        %v3066 = vadd.f32 %v3013, %v3065
        %v3067 = vpop.f32.mrb[0].mxu0
        %v3068 = vadd.f32 %v3015, %v3067
        %v3069 = vpop.f32.mrb[0].mxu0
        %v3070 = vadd.f32 %v3017, %v3069
        %v3071 = vpop.f32.mrb[0].mxu0
        %v3072 = vadd.f32 %v3019, %v3071
        %3073 = vdwg.mxu0
        %3074 = vmatprep.subr.bf16.mxu0 %v2355
        %3075 = vmatpush1.bf16.msra.mxu0 %v2354
        %3076 = vmatprep.subr.bf16.mxu0 %v2363
        %3077 = vmatpush1.bf16.msra.mxu0 %v2362
        %3078 = vmatprep.subr.bf16.mxu0 %v2371
        %3079 = vmatpush1.bf16.msra.mxu0 %v2370
        %3080 = vmatprep.subr.bf16.mxu0 %v2379
        %3081 = vmatpush1.bf16.msra.mxu0 %v2378
        %3082 = vmatprep.subr.bf16.mxu0 %v2387
        %3083 = vmatpush1.bf16.msra.mxu0 %v2386
        %3084 = vmatprep.subr.bf16.mxu0 %v2395
        %3085 = vmatpush1.bf16.msra.mxu0 %v2394
        %3086 = vmatprep.subr.bf16.mxu0 %v2403
        %3087 = vmatpush1.bf16.msra.mxu0 %v2402
        %3088 = vmatprep.subr.bf16.mxu0 %v2411
        %3089 = vmatpush1.bf16.msra.mxu0 %v2410
        %3090 = vmatprep.subr.bf16.mxu0 %v2419
        %3091 = vmatpush1.bf16.msra.mxu0 %v2418
        %3092 = vmatprep.subr.bf16.mxu0 %v2427
        %3093 = vmatpush1.bf16.msra.mxu0 %v2426
        %3094 = vmatprep.subr.bf16.mxu0 %v2435
        %3095 = vmatpush1.bf16.msra.mxu0 %v2434
        %3096 = vmatprep.subr.bf16.mxu0 %v2443
        %3097 = vmatpush1.bf16.msra.mxu0 %v2442
        %3098 = vmatprep.subr.bf16.mxu0 %v2451
        %3099 = vmatpush1.bf16.msra.mxu0 %v2450
        %3100 = vmatprep.subr.bf16.mxu0 %v2459
        %3101 = vmatpush1.bf16.msra.mxu0 %v2458
        %3102 = vmatprep.subr.bf16.mxu0 %v2467
        %3103 = vmatpush1.bf16.msra.mxu0 %v2466
        %3104 = vmatprep.subr.bf16.mxu0 %v2475
        %3105 = vmatpush1.bf16.msra.mxu0 %v2474
        %3106 = vmatprep.mubr.bf16.mxu0 %v1277
        %3107 = vmatmul.mubr.bf16.gmra.mrb[0].mxu0 %v1276
        %v3108 = vpop.f32.mrb[0].mxu0
        %v3109 = vadd.f32 %v1561, %v3108
        %v3110 = vpop.f32.mrb[0].mxu0
        %v3111 = vadd.f32 %v1565, %v3110
        %v3112 = vpop.f32.mrb[0].mxu0
        %v3113 = vadd.f32 %v1561, %v3112
        %v3114 = vpop.f32.mrb[0].mxu0
        %v3115 = vadd.f32 %v1565, %v3114
        %3116 = vmatprep.mubr.bf16.mxu0 %v1281
        %3117 = vmatmul.mubr.bf16.gmra.mrb[0].mxu0 %v1280
        %v3118 = vpop.f32.mrb[0].mxu0
        %v3119 = vadd.f32 %v1561, %v3118
        %v3120 = vpop.f32.mrb[0].mxu0
        %v3121 = vadd.f32 %v1565, %v3120
        %v3122 = vpop.f32.mrb[0].mxu0
        %v3123 = vadd.f32 %v1561, %v3122
        %v3124 = vpop.f32.mrb[0].mxu0
        %v3125 = vadd.f32 %v1565, %v3124
        %3126 = vdwg.mxu0
        %3127 = vmatprep.subr.bf16.mxu0 %v2483
        %3128 = vmatpush1.bf16.msra.mxu0 %v2482
        %3129 = vmatprep.subr.bf16.mxu0 %v2491
        %3130 = vmatpush1.bf16.msra.mxu0 %v2490
        %3131 = vmatprep.subr.bf16.mxu0 %v2499
        %3132 = vmatpush1.bf16.msra.mxu0 %v2498
        %3133 = vmatprep.subr.bf16.mxu0 %v2507
        %3134 = vmatpush1.bf16.msra.mxu0 %v2506
        %3135 = vmatprep.subr.bf16.mxu0 %v2515
        %3136 = vmatpush1.bf16.msra.mxu0 %v2514
        %3137 = vmatprep.subr.bf16.mxu0 %v2523
        %3138 = vmatpush1.bf16.msra.mxu0 %v2522
        %3139 = vmatprep.subr.bf16.mxu0 %v2531
        %3140 = vmatpush1.bf16.msra.mxu0 %v2530
        %3141 = vmatprep.subr.bf16.mxu0 %v2539
        %3142 = vmatpush1.bf16.msra.mxu0 %v2538
        %3143 = vmatprep.subr.bf16.mxu0 %v2547
        %3144 = vmatpush1.bf16.msra.mxu0 %v2546
        %3145 = vmatprep.subr.bf16.mxu0 %v2555
        %3146 = vmatpush1.bf16.msra.mxu0 %v2554
        %3147 = vmatprep.subr.bf16.mxu0 %v2563
        %3148 = vmatpush1.bf16.msra.mxu0 %v2562
        %3149 = vmatprep.subr.bf16.mxu0 %v2571
        %3150 = vmatpush1.bf16.msra.mxu0 %v2570
        %3151 = vmatprep.subr.bf16.mxu0 %v2579
        %3152 = vmatpush1.bf16.msra.mxu0 %v2578
        %3153 = vmatprep.subr.bf16.mxu0 %v2587
        %3154 = vmatpush1.bf16.msra.mxu0 %v2586
        %3155 = vmatprep.subr.bf16.mxu0 %v2595
        %3156 = vmatpush1.bf16.msra.mxu0 %v2594
        %3157 = vmatprep.subr.bf16.mxu0 %v2603
        %3158 = vmatpush1.bf16.msra.mxu0 %v2602
        %3159 = vmatprep.mubr.bf16.mxu0 %v1279
        %3160 = vmatmul.mubr.bf16.gmra.mrb[0].mxu0 %v1278
        %v3161 = vpop.f32.mrb[0].mxu0
        %v3162 = vadd.f32 %v3109, %v3161
        %v3163 = vpop.f32.mrb[0].mxu0
        %v3164 = vadd.f32 %v3111, %v3163
        %v3165 = vpop.f32.mrb[0].mxu0
        %v3166 = vadd.f32 %v3113, %v3165
        %v3167 = vpop.f32.mrb[0].mxu0
        %v3168 = vadd.f32 %v3115, %v3167
        %3169 = vmatprep.mubr.bf16.mxu0 %v1283
        %3170 = vmatmul.mubr.bf16.gmra.mrb[0].mxu0 %v1282
        %v3171 = vpop.f32.mrb[0].mxu0
        %v3172 = vadd.f32 %v3119, %v3171
        %v3173 = vpop.f32.mrb[0].mxu0
        %v3174 = vadd.f32 %v3121, %v3173
        %v3175 = vpop.f32.mrb[0].mxu0
        %v3176 = vadd.f32 %v3123, %v3175
        %v3177 = vpop.f32.mrb[0].mxu0
        %v3178 = vadd.f32 %v3125, %v3177
        %3179 = vdwg.mxu0
        %3180 = vmatprep.subr.bf16.mxu0 %v2357
        %3181 = vmatpush1.bf16.msra.mxu0 %v2356
        %3182 = vmatprep.subr.bf16.mxu0 %v2365
        %3183 = vmatpush1.bf16.msra.mxu0 %v2364
        %3184 = vmatprep.subr.bf16.mxu0 %v2373
        %3185 = vmatpush1.bf16.msra.mxu0 %v2372
        %3186 = vmatprep.subr.bf16.mxu0 %v2381
        %3187 = vmatpush1.bf16.msra.mxu0 %v2380
        %3188 = vmatprep.subr.bf16.mxu0 %v2389
        %3189 = vmatpush1.bf16.msra.mxu0 %v2388
        %3190 = vmatprep.subr.bf16.mxu0 %v2397
        %3191 = vmatpush1.bf16.msra.mxu0 %v2396
        %3192 = vmatprep.subr.bf16.mxu0 %v2405
        %3193 = vmatpush1.bf16.msra.mxu0 %v2404
        %3194 = vmatprep.subr.bf16.mxu0 %v2413
        %3195 = vmatpush1.bf16.msra.mxu0 %v2412
        %3196 = vmatprep.subr.bf16.mxu0 %v2421
        %3197 = vmatpush1.bf16.msra.mxu0 %v2420
        %3198 = vmatprep.subr.bf16.mxu0 %v2429
        %3199 = vmatpush1.bf16.msra.mxu0 %v2428
        %3200 = vmatprep.subr.bf16.mxu0 %v2437
        %3201 = vmatpush1.bf16.msra.mxu0 %v2436
        %3202 = vmatprep.subr.bf16.mxu0 %v2445
        %3203 = vmatpush1.bf16.msra.mxu0 %v2444
        %3204 = vmatprep.subr.bf16.mxu0 %v2453
        %3205 = vmatpush1.bf16.msra.mxu0 %v2452
        %3206 = vmatprep.subr.bf16.mxu0 %v2461
        %3207 = vmatpush1.bf16.msra.mxu0 %v2460
        %3208 = vmatprep.subr.bf16.mxu0 %v2469
        %3209 = vmatpush1.bf16.msra.mxu0 %v2468
        %3210 = vmatprep.subr.bf16.mxu0 %v2477
        %3211 = vmatpush1.bf16.msra.mxu0 %v2476
        %3212 = vmatprep.mubr.bf16.mxu0 %v1277
        %3213 = vmatmul.mubr.bf16.gmra.mrb[0].mxu0 %v1276
        %v3214 = vpop.f32.mrb[0].mxu0
        %v3215 = vadd.f32 %v1569, %v3214
        %v3216 = vpop.f32.mrb[0].mxu0
        %v3217 = vadd.f32 %v1573, %v3216
        %v3218 = vpop.f32.mrb[0].mxu0
        %v3219 = vadd.f32 %v1569, %v3218
        %v3220 = vpop.f32.mrb[0].mxu0
        %v3221 = vadd.f32 %v1573, %v3220
        %3222 = vmatprep.mubr.bf16.mxu0 %v1281
        %3223 = vmatmul.mubr.bf16.gmra.mrb[0].mxu0 %v1280
        %v3224 = vpop.f32.mrb[0].mxu0
        %v3225 = vadd.f32 %v1569, %v3224
        %v3226 = vpop.f32.mrb[0].mxu0
        %v3227 = vadd.f32 %v1573, %v3226
        %v3228 = vpop.f32.mrb[0].mxu0
        %v3229 = vadd.f32 %v1569, %v3228
        %v3230 = vpop.f32.mrb[0].mxu0
        %v3231 = vadd.f32 %v1573, %v3230
        %3232 = vdwg.mxu0
        %3233 = vmatprep.subr.bf16.mxu0 %v2485
        %3234 = vmatpush1.bf16.msra.mxu0 %v2484
        %3235 = vmatprep.subr.bf16.mxu0 %v2493
        %3236 = vmatpush1.bf16.msra.mxu0 %v2492
        %3237 = vmatprep.subr.bf16.mxu0 %v2501
        %3238 = vmatpush1.bf16.msra.mxu0 %v2500
        %3239 = vmatprep.subr.bf16.mxu0 %v2509
        %3240 = vmatpush1.bf16.msra.mxu0 %v2508
        %3241 = vmatprep.subr.bf16.mxu0 %v2517
        %3242 = vmatpush1.bf16.msra.mxu0 %v2516
        %3243 = vmatprep.subr.bf16.mxu0 %v2525
        %3244 = vmatpush1.bf16.msra.mxu0 %v2524
        %3245 = vmatprep.subr.bf16.mxu0 %v2533
        %3246 = vmatpush1.bf16.msra.mxu0 %v2532
        %3247 = vmatprep.subr.bf16.mxu0 %v2541
        %3248 = vmatpush1.bf16.msra.mxu0 %v2540
        %3249 = vmatprep.subr.bf16.mxu0 %v2549
        %3250 = vmatpush1.bf16.msra.mxu0 %v2548
        %3251 = vmatprep.subr.bf16.mxu0 %v2557
        %3252 = vmatpush1.bf16.msra.mxu0 %v2556
        %3253 = vmatprep.subr.bf16.mxu0 %v2565
        %3254 = vmatpush1.bf16.msra.mxu0 %v2564
        %3255 = vmatprep.subr.bf16.mxu0 %v2573
        %3256 = vmatpush1.bf16.msra.mxu0 %v2572
        %3257 = vmatprep.subr.bf16.mxu0 %v2581
        %3258 = vmatpush1.bf16.msra.mxu0 %v2580
        %3259 = vmatprep.subr.bf16.mxu0 %v2589
        %3260 = vmatpush1.bf16.msra.mxu0 %v2588
        %3261 = vmatprep.subr.bf16.mxu0 %v2597
        %3262 = vmatpush1.bf16.msra.mxu0 %v2596
        %3263 = vmatprep.subr.bf16.mxu0 %v2605
        %3264 = vmatpush1.bf16.msra.mxu0 %v2604
        %3265 = vmatprep.mubr.bf16.mxu0 %v1279
        %3266 = vmatmul.mubr.bf16.gmra.mrb[0].mxu0 %v1278
        %v3267 = vpop.f32.mrb[0].mxu0
        %v3268 = vadd.f32 %v3215, %v3267
        %v3269 = vpop.f32.mrb[0].mxu0
        %v3270 = vadd.f32 %v3217, %v3269
        %v3271 = vpop.f32.mrb[0].mxu0
        %v3272 = vadd.f32 %v3219, %v3271
        %v3273 = vpop.f32.mrb[0].mxu0
        %v3274 = vadd.f32 %v3221, %v3273
        %3275 = vmatprep.mubr.bf16.mxu0 %v1283
        %3276 = vmatmul.mubr.bf16.gmra.mrb[0].mxu0 %v1282
        %v3277 = vpop.f32.mrb[0].mxu0
        %v3278 = vadd.f32 %v3225, %v3277
        %v3279 = vpop.f32.mrb[0].mxu0
        %v3280 = vadd.f32 %v3227, %v3279
        %v3281 = vpop.f32.mrb[0].mxu0
        %v3282 = vadd.f32 %v3229, %v3281
        %v3283 = vpop.f32.mrb[0].mxu0
        %v3284 = vadd.f32 %v3231, %v3283
        %3285 = vdwg.mxu0
        %v3286 = vmul.f32 %v2950, 0.2
        %v3287 = vmul.f32 %v2952, 0.2
        %v3288 = vmul.f32 %v3056, 0.2
        %v3289 = vmul.f32 %v3058, 0.2
        %v3290 = vmul.f32 %v3162, 0.2
        %v3291 = vmul.f32 %v3164, 0.2
        %v3292 = vmul.f32 %v3268, 0.2
        %v3293 = vmul.f32 %v3270, 0.2
        %v3294 = vmul.f32 %v2954, 0.2
        %v3295 = vmul.f32 %v2956, 0.2
        %v3296 = vmul.f32 %v3060, 0.2
        %v3297 = vmul.f32 %v3062, 0.2
        %v3298 = vmul.f32 %v3166, 0.2
        %v3299 = vmul.f32 %v3168, 0.2
        %v3300 = vmul.f32 %v3272, 0.2
        %v3301 = vmul.f32 %v3274, 0.2
        %v3302 = vmul.f32 %v2960, 0.2
        %v3303 = vmul.f32 %v2962, 0.2
        %v3304 = vmul.f32 %v3066, 0.2
        %v3305 = vmul.f32 %v3068, 0.2
        %v3306 = vmul.f32 %v3172, 0.2
        %v3307 = vmul.f32 %v3174, 0.2
        %v3308 = vmul.f32 %v3278, 0.2
        %v3309 = vmul.f32 %v3280, 0.2
        %v3310 = vmul.f32 %v2964, 0.2
        %v3311 = vmul.f32 %v2966, 0.2
        %v3312 = vmul.f32 %v3070, 0.2
        %v3313 = vmul.f32 %v3072, 0.2
        %v3314 = vmul.f32 %v3176, 0.2
        %v3315 = vmul.f32 %v3178, 0.2
        %v3316 = vmul.f32 %v3282, 0.2
        %v3317 = vmul.f32 %v3284, 0.2
        %v3318 = vmax.f32 %v2950, %v3286
        %v3319 = vmax.f32 %v2952, %v3287
        %v3320 = vmax.f32 %v3056, %v3288
        %v3321 = vmax.f32 %v3058, %v3289
        %v3322 = vmax.f32 %v3162, %v3290
        %v3323 = vmax.f32 %v3164, %v3291
        %v3324 = vmax.f32 %v3268, %v3292
        %v3325 = vmax.f32 %v3270, %v3293
        %v3326 = vmax.f32 %v2954, %v3294
        %v3327 = vmax.f32 %v2956, %v3295
        %v3328 = vmax.f32 %v3060, %v3296
        %v3329 = vmax.f32 %v3062, %v3297
        %v3330 = vmax.f32 %v3166, %v3298
        %v3331 = vmax.f32 %v3168, %v3299
        %v3332 = vmax.f32 %v3272, %v3300
        %v3333 = vmax.f32 %v3274, %v3301
        %v3334 = vmax.f32 %v2960, %v3302
        %v3335 = vmax.f32 %v2962, %v3303
        %v3336 = vmax.f32 %v3066, %v3304
        %v3337 = vmax.f32 %v3068, %v3305
        %v3338 = vmax.f32 %v3172, %v3306
        %v3339 = vmax.f32 %v3174, %v3307
        %v3340 = vmax.f32 %v3278, %v3308
        %v3341 = vmax.f32 %v3280, %v3309
        %v3342 = vmax.f32 %v2964, %v3310
        %v3343 = vmax.f32 %v2966, %v3311
        %v3344 = vmax.f32 %v3070, %v3312
        %v3345 = vmax.f32 %v3072, %v3313
        %v3346 = vmax.f32 %v3176, %v3314
        %v3347 = vmax.f32 %v3178, %v3315
        %v3348 = vmax.f32 %v3282, %v3316
        %v3349 = vmax.f32 %v3284, %v3317
        %v3350 = vpack.c.bf16 %v3326, %v3318
        %v3351 = vpack.c.bf16 %v3327, %v3319
        %v3352 = vpack.c.bf16 %v3328, %v3320
        %v3353 = vpack.c.bf16 %v3329, %v3321
        %v3354 = vpack.c.bf16 %v3330, %v3322
        %v3355 = vpack.c.bf16 %v3331, %v3323
        %v3356 = vpack.c.bf16 %v3332, %v3324
        %v3357 = vpack.c.bf16 %v3333, %v3325
        %v3358 = vpack.c.bf16 %v3342, %v3334
        %v3359 = vpack.c.bf16 %v3343, %v3335
        %v3360 = vpack.c.bf16 %v3344, %v3336
        %v3361 = vpack.c.bf16 %v3345, %v3337
        %v3362 = vpack.c.bf16 %v3346, %v3338
        %v3363 = vpack.c.bf16 %v3347, %v3339
        %v3364 = vpack.c.bf16 %v3348, %v3340
        %v3365 = vpack.c.bf16 %v3349, %v3341
        %v3366 = vld [vmem:[#allocation8] sm:$0xf]
        %v3367 = vld [vmem:[#allocation8 + $0x4] sm:$0xf]
        %v3368 = vld [vmem:[#allocation8 + $0x8] sm:$0xf]
        %v3369 = vld [vmem:[#allocation8 + $0xc] sm:$0xf]
        %v3370 = vld [vmem:[#allocation8 + $0x10] sm:$0xf]
        %v3371 = vld [vmem:[#allocation8 + $0x14] sm:$0xf]
        %v3372 = vld [vmem:[#allocation8 + $0x18] sm:$0xf]
        %v3373 = vld [vmem:[#allocation8 + $0x1c] sm:$0xf]
        %v3374 = vld [vmem:[#allocation8 + $0x20] sm:$0xf]
        %v3375 = vld [vmem:[#allocation8 + $0x24] sm:$0xf]
        %v3376 = vld [vmem:[#allocation8 + $0x28] sm:$0xf]
        %v3377 = vld [vmem:[#allocation8 + $0x2c] sm:$0xf]
        %v3378 = vld [vmem:[#allocation8 + $0x30] sm:$0xf]
        %v3379 = vld [vmem:[#allocation8 + $0x34] sm:$0xf]
        %v3380 = vld [vmem:[#allocation8 + $0x38] sm:$0xf]
        %v3381 = vld [vmem:[#allocation8 + $0x3c] sm:$0xf]
        %v3382 = vld [vmem:[#allocation8 + $0x40] sm:$0xf]
        %v3383 = vld [vmem:[#allocation8 + $0x44] sm:$0xf]
        %v3384 = vld [vmem:[#allocation8 + $0x48] sm:$0xf]
        %v3385 = vld [vmem:[#allocation8 + $0x4c] sm:$0xf]
        %v3386 = vld [vmem:[#allocation8 + $0x50] sm:$0xf]
        %v3387 = vld [vmem:[#allocation8 + $0x54] sm:$0xf]
        %v3388 = vld [vmem:[#allocation8 + $0x58] sm:$0xf]
        %v3389 = vld [vmem:[#allocation8 + $0x5c] sm:$0xf]
        %v3390 = vld [vmem:[#allocation8 + $0x60] sm:$0xf]
        %v3391 = vld [vmem:[#allocation8 + $0x64] sm:$0xf]
        %v3392 = vld [vmem:[#allocation8 + $0x68] sm:$0xf]
        %v3393 = vld [vmem:[#allocation8 + $0x6c] sm:$0xf]
        %v3394 = vld [vmem:[#allocation8 + $0x70] sm:$0xf]
        %v3395 = vld [vmem:[#allocation8 + $0x74] sm:$0xf]
        %v3396 = vld [vmem:[#allocation8 + $0x78] sm:$0xf]
        %v3397 = vld [vmem:[#allocation8 + $0x7c] sm:$0xf]
        %v3398 = vld [vmem:[#allocation8 + $0x80] sm:$0xf]
        %v3399 = vld [vmem:[#allocation8 + $0x84] sm:$0xf]
        %v3400 = vld [vmem:[#allocation8 + $0x88] sm:$0xf]
        %v3401 = vld [vmem:[#allocation8 + $0x8c] sm:$0xf]
        %v3402 = vld [vmem:[#allocation8 + $0x90] sm:$0xf]
        %v3403 = vld [vmem:[#allocation8 + $0x94] sm:$0xf]
        %v3404 = vld [vmem:[#allocation8 + $0x98] sm:$0xf]
        %v3405 = vld [vmem:[#allocation8 + $0x9c] sm:$0xf]
        %v3406 = vld [vmem:[#allocation8 + $0xa0] sm:$0xf]
        %v3407 = vld [vmem:[#allocation8 + $0xa4] sm:$0xf]
        %v3408 = vld [vmem:[#allocation8 + $0xa8] sm:$0xf]
        %v3409 = vld [vmem:[#allocation8 + $0xac] sm:$0xf]
        %v3410 = vld [vmem:[#allocation8 + $0xb0] sm:$0xf]
        %v3411 = vld [vmem:[#allocation8 + $0xb4] sm:$0xf]
        %v3412 = vld [vmem:[#allocation8 + $0xb8] sm:$0xf]
        %v3413 = vld [vmem:[#allocation8 + $0xbc] sm:$0xf]
        %v3414 = vld [vmem:[#allocation8 + $0xc0] sm:$0xf]
        %v3415 = vld [vmem:[#allocation8 + $0xc4] sm:$0xf]
        %v3416 = vld [vmem:[#allocation8 + $0xc8] sm:$0xf]
        %v3417 = vld [vmem:[#allocation8 + $0xcc] sm:$0xf]
        %v3418 = vld [vmem:[#allocation8 + $0xd0] sm:$0xf]
        %v3419 = vld [vmem:[#allocation8 + $0xd4] sm:$0xf]
        %v3420 = vld [vmem:[#allocation8 + $0xd8] sm:$0xf]
        %v3421 = vld [vmem:[#allocation8 + $0xdc] sm:$0xf]
        %v3422 = vld [vmem:[#allocation8 + $0xe0] sm:$0xf]
        %v3423 = vld [vmem:[#allocation8 + $0xe4] sm:$0xf]
        %v3424 = vld [vmem:[#allocation8 + $0xe8] sm:$0xf]
        %v3425 = vld [vmem:[#allocation8 + $0xec] sm:$0xf]
        %v3426 = vld [vmem:[#allocation8 + $0xf0] sm:$0xf]
        %v3427 = vld [vmem:[#allocation8 + $0xf4] sm:$0xf]
        %v3428 = vld [vmem:[#allocation8 + $0xf8] sm:$0xf]
        %v3429 = vld [vmem:[#allocation8 + $0xfc] sm:$0xf]
        %v3430 = vld [vmem:[#allocation8 + $0x100] sm:$0xf]
        %v3431 = vld [vmem:[#allocation8 + $0x104] sm:$0xf]
        %v3432 = vld [vmem:[#allocation8 + $0x108] sm:$0xf]
        %v3433 = vld [vmem:[#allocation8 + $0x10c] sm:$0xf]
        %v3434 = vld [vmem:[#allocation8 + $0x110] sm:$0xf]
        %v3435 = vld [vmem:[#allocation8 + $0x114] sm:$0xf]
        %v3436 = vld [vmem:[#allocation8 + $0x118] sm:$0xf]
        %v3437 = vld [vmem:[#allocation8 + $0x11c] sm:$0xf]
        %v3438 = vld [vmem:[#allocation8 + $0x120] sm:$0xf]
        %v3439 = vld [vmem:[#allocation8 + $0x124] sm:$0xf]
        %v3440 = vld [vmem:[#allocation8 + $0x128] sm:$0xf]
        %v3441 = vld [vmem:[#allocation8 + $0x12c] sm:$0xf]
        %v3442 = vld [vmem:[#allocation8 + $0x130] sm:$0xf]
        %v3443 = vld [vmem:[#allocation8 + $0x134] sm:$0xf]
        %v3444 = vld [vmem:[#allocation8 + $0x138] sm:$0xf]
        %v3445 = vld [vmem:[#allocation8 + $0x13c] sm:$0xf]
        %v3446 = vld [vmem:[#allocation8 + $0x140] sm:$0xf]
        %v3447 = vld [vmem:[#allocation8 + $0x144] sm:$0xf]
        %v3448 = vld [vmem:[#allocation8 + $0x148] sm:$0xf]
        %v3449 = vld [vmem:[#allocation8 + $0x14c] sm:$0xf]
        %v3450 = vld [vmem:[#allocation8 + $0x150] sm:$0xf]
        %v3451 = vld [vmem:[#allocation8 + $0x154] sm:$0xf]
        %v3452 = vld [vmem:[#allocation8 + $0x158] sm:$0xf]
        %v3453 = vld [vmem:[#allocation8 + $0x15c] sm:$0xf]
        %v3454 = vld [vmem:[#allocation8 + $0x160] sm:$0xf]
        %v3455 = vld [vmem:[#allocation8 + $0x164] sm:$0xf]
        %v3456 = vld [vmem:[#allocation8 + $0x168] sm:$0xf]
        %v3457 = vld [vmem:[#allocation8 + $0x16c] sm:$0xf]
        %v3458 = vld [vmem:[#allocation8 + $0x170] sm:$0xf]
        %v3459 = vld [vmem:[#allocation8 + $0x174] sm:$0xf]
        %v3460 = vld [vmem:[#allocation8 + $0x178] sm:$0xf]
        %v3461 = vld [vmem:[#allocation8 + $0x17c] sm:$0xf]
        %v3462 = vld [vmem:[#allocation8 + $0x180] sm:$0xf]
        %v3463 = vld [vmem:[#allocation8 + $0x184] sm:$0xf]
        %v3464 = vld [vmem:[#allocation8 + $0x188] sm:$0xf]
        %v3465 = vld [vmem:[#allocation8 + $0x18c] sm:$0xf]
        %v3466 = vld [vmem:[#allocation8 + $0x190] sm:$0xf]
        %v3467 = vld [vmem:[#allocation8 + $0x194] sm:$0xf]
        %v3468 = vld [vmem:[#allocation8 + $0x198] sm:$0xf]
        %v3469 = vld [vmem:[#allocation8 + $0x19c] sm:$0xf]
        %v3470 = vld [vmem:[#allocation8 + $0x1a0] sm:$0xf]
        %v3471 = vld [vmem:[#allocation8 + $0x1a4] sm:$0xf]
        %v3472 = vld [vmem:[#allocation8 + $0x1a8] sm:$0xf]
        %v3473 = vld [vmem:[#allocation8 + $0x1ac] sm:$0xf]
        %v3474 = vld [vmem:[#allocation8 + $0x1b0] sm:$0xf]
        %v3475 = vld [vmem:[#allocation8 + $0x1b4] sm:$0xf]
        %v3476 = vld [vmem:[#allocation8 + $0x1b8] sm:$0xf]
        %v3477 = vld [vmem:[#allocation8 + $0x1bc] sm:$0xf]
        %v3478 = vld [vmem:[#allocation8 + $0x1c0] sm:$0xf]
        %v3479 = vld [vmem:[#allocation8 + $0x1c4] sm:$0xf]
        %v3480 = vld [vmem:[#allocation8 + $0x1c8] sm:$0xf]
        %v3481 = vld [vmem:[#allocation8 + $0x1cc] sm:$0xf]
        %v3482 = vld [vmem:[#allocation8 + $0x1d0] sm:$0xf]
        %v3483 = vld [vmem:[#allocation8 + $0x1d4] sm:$0xf]
        %v3484 = vld [vmem:[#allocation8 + $0x1d8] sm:$0xf]
        %v3485 = vld [vmem:[#allocation8 + $0x1dc] sm:$0xf]
        %v3486 = vld [vmem:[#allocation8 + $0x1e0] sm:$0xf]
        %v3487 = vld [vmem:[#allocation8 + $0x1e4] sm:$0xf]
        %v3488 = vld [vmem:[#allocation8 + $0x1e8] sm:$0xf]
        %v3489 = vld [vmem:[#allocation8 + $0x1ec] sm:$0xf]
        %v3490 = vld [vmem:[#allocation8 + $0x1f0] sm:$0xf]
        %v3491 = vld [vmem:[#allocation8 + $0x1f4] sm:$0xf]
        %v3492 = vld [vmem:[#allocation8 + $0x1f8] sm:$0xf]
        %v3493 = vld [vmem:[#allocation8 + $0x1fc] sm:$0xf]
        %v3494 = vld [vmem:[%s10] sm:$0x1]
        %v3496 = vlaneseq
        %v3497 = vshrl.u32 %v3496, 7
        %v3498 = vsub.s32 0, %v3497
        %v3499 = vrot.slane %v3494, %v3498
        %v3629 = vunpack.c.l.b16 %v3366
        %v3630 = vunpack.c.l.b16 %v3367
        %v3631 = vunpack.c.l.b16 %v3368
        %v3632 = vunpack.c.l.b16 %v3369
        %v3633 = vunpack.c.l.b16 %v3370
        %v3634 = vunpack.c.l.b16 %v3371
        %v3635 = vunpack.c.l.b16 %v3372
        %v3636 = vunpack.c.l.b16 %v3373
        %v3637 = vunpack.c.l.b16 %v3374
        %v3638 = vunpack.c.l.b16 %v3375
        %v3639 = vunpack.c.l.b16 %v3376
        %v3640 = vunpack.c.l.b16 %v3377
        %v3641 = vunpack.c.l.b16 %v3378
        %v3642 = vunpack.c.l.b16 %v3379
        %v3643 = vunpack.c.l.b16 %v3380
        %v3644 = vunpack.c.l.b16 %v3381
        %v3645 = vunpack.c.l.b16 %v3382
        %v3646 = vunpack.c.l.b16 %v3383
        %v3647 = vunpack.c.l.b16 %v3384
        %v3648 = vunpack.c.l.b16 %v3385
        %v3649 = vunpack.c.l.b16 %v3386
        %v3650 = vunpack.c.l.b16 %v3387
        %v3651 = vunpack.c.l.b16 %v3388
        %v3652 = vunpack.c.l.b16 %v3389
        %v3653 = vunpack.c.l.b16 %v3390
        %v3654 = vunpack.c.l.b16 %v3391
        %v3655 = vunpack.c.l.b16 %v3392
        %v3656 = vunpack.c.l.b16 %v3393
        %v3657 = vunpack.c.l.b16 %v3394
        %v3658 = vunpack.c.l.b16 %v3395
        %v3659 = vunpack.c.l.b16 %v3396
        %v3660 = vunpack.c.l.b16 %v3397
        %v3661 = vunpack.c.l.b16 %v3398
        %v3662 = vunpack.c.l.b16 %v3399
        %v3663 = vunpack.c.l.b16 %v3400
        %v3664 = vunpack.c.l.b16 %v3401
        %v3665 = vunpack.c.l.b16 %v3402
        %v3666 = vunpack.c.l.b16 %v3403
        %v3667 = vunpack.c.l.b16 %v3404
        %v3668 = vunpack.c.l.b16 %v3405
        %v3669 = vunpack.c.l.b16 %v3406
        %v3670 = vunpack.c.l.b16 %v3407
        %v3671 = vunpack.c.l.b16 %v3408
        %v3672 = vunpack.c.l.b16 %v3409
        %v3673 = vunpack.c.l.b16 %v3410
        %v3674 = vunpack.c.l.b16 %v3411
        %v3675 = vunpack.c.l.b16 %v3412
        %v3676 = vunpack.c.l.b16 %v3413
        %v3677 = vunpack.c.l.b16 %v3414
        %v3678 = vunpack.c.l.b16 %v3415
        %v3679 = vunpack.c.l.b16 %v3416
        %v3680 = vunpack.c.l.b16 %v3417
        %v3681 = vunpack.c.l.b16 %v3418
        %v3682 = vunpack.c.l.b16 %v3419
        %v3683 = vunpack.c.l.b16 %v3420
        %v3684 = vunpack.c.l.b16 %v3421
        %v3685 = vunpack.c.l.b16 %v3422
        %v3686 = vunpack.c.l.b16 %v3423
        %v3687 = vunpack.c.l.b16 %v3424
        %v3688 = vunpack.c.l.b16 %v3425
        %v3689 = vunpack.c.l.b16 %v3426
        %v3690 = vunpack.c.l.b16 %v3427
        %v3691 = vunpack.c.l.b16 %v3428
        %v3692 = vunpack.c.l.b16 %v3429
        %v3693 = vunpack.c.l.b16 %v3430
        %v3694 = vunpack.c.l.b16 %v3431
        %v3695 = vunpack.c.l.b16 %v3432
        %v3696 = vunpack.c.l.b16 %v3433
        %v3697 = vunpack.c.l.b16 %v3434
        %v3698 = vunpack.c.l.b16 %v3435
        %v3699 = vunpack.c.l.b16 %v3436
        %v3700 = vunpack.c.l.b16 %v3437
        %v3701 = vunpack.c.l.b16 %v3438
        %v3702 = vunpack.c.l.b16 %v3439
        %v3703 = vunpack.c.l.b16 %v3440
        %v3704 = vunpack.c.l.b16 %v3441
        %v3705 = vunpack.c.l.b16 %v3442
        %v3706 = vunpack.c.l.b16 %v3443
        %v3707 = vunpack.c.l.b16 %v3444
        %v3708 = vunpack.c.l.b16 %v3445
        %v3709 = vunpack.c.l.b16 %v3446
        %v3710 = vunpack.c.l.b16 %v3447
        %v3711 = vunpack.c.l.b16 %v3448
        %v3712 = vunpack.c.l.b16 %v3449
        %v3713 = vunpack.c.l.b16 %v3450
        %v3714 = vunpack.c.l.b16 %v3451
        %v3715 = vunpack.c.l.b16 %v3452
        %v3716 = vunpack.c.l.b16 %v3453
        %v3717 = vunpack.c.l.b16 %v3454
        %v3718 = vunpack.c.l.b16 %v3455
        %v3719 = vunpack.c.l.b16 %v3456
        %v3720 = vunpack.c.l.b16 %v3457
        %v3721 = vunpack.c.l.b16 %v3458
        %v3722 = vunpack.c.l.b16 %v3459
        %v3723 = vunpack.c.l.b16 %v3460
        %v3724 = vunpack.c.l.b16 %v3461
        %v3725 = vunpack.c.l.b16 %v3462
        %v3726 = vunpack.c.l.b16 %v3463
        %v3727 = vunpack.c.l.b16 %v3464
        %v3728 = vunpack.c.l.b16 %v3465
        %v3729 = vunpack.c.l.b16 %v3466
        %v3730 = vunpack.c.l.b16 %v3467
        %v3731 = vunpack.c.l.b16 %v3468
        %v3732 = vunpack.c.l.b16 %v3469
        %v3733 = vunpack.c.l.b16 %v3470
        %v3734 = vunpack.c.l.b16 %v3471
        %v3735 = vunpack.c.l.b16 %v3472
        %v3736 = vunpack.c.l.b16 %v3473
        %v3737 = vunpack.c.l.b16 %v3474
        %v3738 = vunpack.c.l.b16 %v3475
        %v3739 = vunpack.c.l.b16 %v3476
        %v3740 = vunpack.c.l.b16 %v3477
        %v3741 = vunpack.c.l.b16 %v3478
        %v3742 = vunpack.c.l.b16 %v3479
        %v3743 = vunpack.c.l.b16 %v3480
        %v3744 = vunpack.c.l.b16 %v3481
        %v3745 = vunpack.c.l.b16 %v3482
        %v3746 = vunpack.c.l.b16 %v3483
        %v3747 = vunpack.c.l.b16 %v3484
        %v3748 = vunpack.c.l.b16 %v3485
        %v3749 = vunpack.c.l.b16 %v3486
        %v3750 = vunpack.c.l.b16 %v3487
        %v3751 = vunpack.c.l.b16 %v3488
        %v3752 = vunpack.c.l.b16 %v3489
        %v3753 = vunpack.c.l.b16 %v3490
        %v3754 = vunpack.c.l.b16 %v3491
        %v3755 = vunpack.c.l.b16 %v3492
        %v3756 = vunpack.c.l.b16 %v3493
        %v3757 = vpack.c.b16 %v3630, %v3629
        %v3758 = vpack.c.b16 %v3632, %v3631
        %v3759 = vpack.c.b16 %v3634, %v3633
        %v3760 = vpack.c.b16 %v3636, %v3635
        %v3761 = vpack.c.b16 %v3638, %v3637
        %v3762 = vpack.c.b16 %v3640, %v3639
        %v3763 = vpack.c.b16 %v3642, %v3641
        %v3764 = vpack.c.b16 %v3644, %v3643
        %v3765 = vpack.c.b16 %v3646, %v3645
        %v3766 = vpack.c.b16 %v3648, %v3647
        %v3767 = vpack.c.b16 %v3650, %v3649
        %v3768 = vpack.c.b16 %v3652, %v3651
        %v3769 = vpack.c.b16 %v3654, %v3653
        %v3770 = vpack.c.b16 %v3656, %v3655
        %v3771 = vpack.c.b16 %v3658, %v3657
        %v3772 = vpack.c.b16 %v3660, %v3659
        %v3773 = vpack.c.b16 %v3662, %v3661
        %v3774 = vpack.c.b16 %v3664, %v3663
        %v3775 = vpack.c.b16 %v3666, %v3665
        %v3776 = vpack.c.b16 %v3668, %v3667
        %v3777 = vpack.c.b16 %v3670, %v3669
        %v3778 = vpack.c.b16 %v3672, %v3671
        %v3779 = vpack.c.b16 %v3674, %v3673
        %v3780 = vpack.c.b16 %v3676, %v3675
        %v3781 = vpack.c.b16 %v3678, %v3677
        %v3782 = vpack.c.b16 %v3680, %v3679
        %v3783 = vpack.c.b16 %v3682, %v3681
        %v3784 = vpack.c.b16 %v3684, %v3683
        %v3785 = vpack.c.b16 %v3686, %v3685
        %v3786 = vpack.c.b16 %v3688, %v3687
        %v3787 = vpack.c.b16 %v3690, %v3689
        %v3788 = vpack.c.b16 %v3692, %v3691
        %v3789 = vpack.c.b16 %v3694, %v3693
        %v3790 = vpack.c.b16 %v3696, %v3695
        %v3791 = vpack.c.b16 %v3698, %v3697
        %v3792 = vpack.c.b16 %v3700, %v3699
        %v3793 = vpack.c.b16 %v3702, %v3701
        %v3794 = vpack.c.b16 %v3704, %v3703
        %v3795 = vpack.c.b16 %v3706, %v3705
        %v3796 = vpack.c.b16 %v3708, %v3707
        %v3797 = vpack.c.b16 %v3710, %v3709
        %v3798 = vpack.c.b16 %v3712, %v3711
        %v3799 = vpack.c.b16 %v3714, %v3713
        %v3800 = vpack.c.b16 %v3716, %v3715
        %v3801 = vpack.c.b16 %v3718, %v3717
        %v3802 = vpack.c.b16 %v3720, %v3719
        %v3803 = vpack.c.b16 %v3722, %v3721
        %v3804 = vpack.c.b16 %v3724, %v3723
        %v3805 = vpack.c.b16 %v3726, %v3725
        %v3806 = vpack.c.b16 %v3728, %v3727
        %v3807 = vpack.c.b16 %v3730, %v3729
        %v3808 = vpack.c.b16 %v3732, %v3731
        %v3809 = vpack.c.b16 %v3734, %v3733
        %v3810 = vpack.c.b16 %v3736, %v3735
        %v3811 = vpack.c.b16 %v3738, %v3737
        %v3812 = vpack.c.b16 %v3740, %v3739
        %v3813 = vpack.c.b16 %v3742, %v3741
        %v3814 = vpack.c.b16 %v3744, %v3743
        %v3815 = vpack.c.b16 %v3746, %v3745
        %v3816 = vpack.c.b16 %v3748, %v3747
        %v3817 = vpack.c.b16 %v3750, %v3749
        %v3818 = vpack.c.b16 %v3752, %v3751
        %v3819 = vpack.c.b16 %v3754, %v3753
        %v3820 = vpack.c.b16 %v3756, %v3755
        %3885 = vmatprep.subr.bf16.mxu0 0
        %3886 = vmatpush1.bf16.msra.mxu0 %v3757
        %3887 = vmatprep.subr.bf16.mxu0 0
        %3888 = vmatpush1.bf16.msra.mxu0 %v3758
        %3889 = vmatprep.subr.bf16.mxu0 0
        %3890 = vmatpush1.bf16.msra.mxu0 %v3759
        %3891 = vmatprep.subr.bf16.mxu0 0
        %3892 = vmatpush1.bf16.msra.mxu0 %v3760
        %3893 = vmatprep.subr.bf16.mxu0 0
        %3894 = vmatpush1.bf16.msra.mxu0 %v3761
        %3895 = vmatprep.subr.bf16.mxu0 0
        %3896 = vmatpush1.bf16.msra.mxu0 %v3762
        %3897 = vmatprep.subr.bf16.mxu0 0
        %3898 = vmatpush1.bf16.msra.mxu0 %v3763
        %3899 = vmatprep.subr.bf16.mxu0 0
        %3900 = vmatpush1.bf16.msra.mxu0 %v3764
        %3901 = vmatprep.subr.bf16.mxu0 0
        %3902 = vmatpush1.bf16.msra.mxu0 %v3765
        %3903 = vmatprep.subr.bf16.mxu0 0
        %3904 = vmatpush1.bf16.msra.mxu0 %v3766
        %3905 = vmatprep.subr.bf16.mxu0 0
        %3906 = vmatpush1.bf16.msra.mxu0 %v3767
        %3907 = vmatprep.subr.bf16.mxu0 0
        %3908 = vmatpush1.bf16.msra.mxu0 %v3768
        %3909 = vmatprep.subr.bf16.mxu0 0
        %3910 = vmatpush1.bf16.msra.mxu0 %v3769
        %3911 = vmatprep.subr.bf16.mxu0 0
        %3912 = vmatpush1.bf16.msra.mxu0 %v3770
        %3913 = vmatprep.subr.bf16.mxu0 0
        %3914 = vmatpush1.bf16.msra.mxu0 %v3771
        %3915 = vmatprep.subr.bf16.mxu0 0
        %3916 = vmatpush1.bf16.msra.mxu0 %v3772
        %3917 = vmatprep.mubr.bf16.mxu0 %v3351
        %3918 = vmatmul.mubr.bf16.gmra.mrb[0].mxu0 %v3350
        %v3919 = vpop.f32.mrb[0].mxu0
        %v3920 = vadd.f32 %v3499, %v3919
        %v3921 = vpop.f32.mrb[0].mxu0
        %v3922 = vpop.f32.mrb[0].mxu0
        %v3923 = vadd.f32 %v3499, %v3922
        %v3924 = vpop.f32.mrb[0].mxu0
        %3925 = vmatprep.mubr.bf16.mxu0 %v3359
        %3926 = vmatmul.mubr.bf16.gmra.mrb[0].mxu0 %v3358
        %v3927 = vpop.f32.mrb[0].mxu0
        %v3928 = vadd.f32 %v3499, %v3927
        %v3929 = vpop.f32.mrb[0].mxu0
        %v3930 = vpop.f32.mrb[0].mxu0
        %v3931 = vadd.f32 %v3499, %v3930
        %v3932 = vpop.f32.mrb[0].mxu0
        %3933 = vdwg.mxu0
        %3934 = vmatprep.subr.bf16.mxu0 0
        %3935 = vmatpush1.bf16.msra.mxu0 %v3773
        %3936 = vmatprep.subr.bf16.mxu0 0
        %3937 = vmatpush1.bf16.msra.mxu0 %v3774
        %3938 = vmatprep.subr.bf16.mxu0 0
        %3939 = vmatpush1.bf16.msra.mxu0 %v3775
        %3940 = vmatprep.subr.bf16.mxu0 0
        %3941 = vmatpush1.bf16.msra.mxu0 %v3776
        %3942 = vmatprep.subr.bf16.mxu0 0
        %3943 = vmatpush1.bf16.msra.mxu0 %v3777
        %3944 = vmatprep.subr.bf16.mxu0 0
        %3945 = vmatpush1.bf16.msra.mxu0 %v3778
        %3946 = vmatprep.subr.bf16.mxu0 0
        %3947 = vmatpush1.bf16.msra.mxu0 %v3779
        %3948 = vmatprep.subr.bf16.mxu0 0
        %3949 = vmatpush1.bf16.msra.mxu0 %v3780
        %3950 = vmatprep.subr.bf16.mxu0 0
        %3951 = vmatpush1.bf16.msra.mxu0 %v3781
        %3952 = vmatprep.subr.bf16.mxu0 0
        %3953 = vmatpush1.bf16.msra.mxu0 %v3782
        %3954 = vmatprep.subr.bf16.mxu0 0
        %3955 = vmatpush1.bf16.msra.mxu0 %v3783
        %3956 = vmatprep.subr.bf16.mxu0 0
        %3957 = vmatpush1.bf16.msra.mxu0 %v3784
        %3958 = vmatprep.subr.bf16.mxu0 0
        %3959 = vmatpush1.bf16.msra.mxu0 %v3785
        %3960 = vmatprep.subr.bf16.mxu0 0
        %3961 = vmatpush1.bf16.msra.mxu0 %v3786
        %3962 = vmatprep.subr.bf16.mxu0 0
        %3963 = vmatpush1.bf16.msra.mxu0 %v3787
        %3964 = vmatprep.subr.bf16.mxu0 0
        %3965 = vmatpush1.bf16.msra.mxu0 %v3788
        %3966 = vmatprep.mubr.bf16.mxu0 %v3353
        %3967 = vmatmul.mubr.bf16.gmra.mrb[0].mxu0 %v3352
        %v3968 = vpop.f32.mrb[0].mxu0
        %v3969 = vadd.f32 %v3920, %v3968
        %v3970 = vpop.f32.mrb[0].mxu0
        %v3971 = vpop.f32.mrb[0].mxu0
        %v3972 = vadd.f32 %v3923, %v3971
        %v3973 = vpop.f32.mrb[0].mxu0
        %3974 = vmatprep.mubr.bf16.mxu0 %v3361
        %3975 = vmatmul.mubr.bf16.gmra.mrb[0].mxu0 %v3360
        %v3976 = vpop.f32.mrb[0].mxu0
        %v3977 = vadd.f32 %v3928, %v3976
        %v3978 = vpop.f32.mrb[0].mxu0
        %v3979 = vpop.f32.mrb[0].mxu0
        %v3980 = vadd.f32 %v3931, %v3979
        %v3981 = vpop.f32.mrb[0].mxu0
        %3982 = vdwg.mxu0
        %3983 = vmatprep.subr.bf16.mxu0 0
        %3984 = vmatpush1.bf16.msra.mxu0 %v3789
        %3985 = vmatprep.subr.bf16.mxu0 0
        %3986 = vmatpush1.bf16.msra.mxu0 %v3790
        %3987 = vmatprep.subr.bf16.mxu0 0
        %3988 = vmatpush1.bf16.msra.mxu0 %v3791
        %3989 = vmatprep.subr.bf16.mxu0 0
        %3990 = vmatpush1.bf16.msra.mxu0 %v3792
        %3991 = vmatprep.subr.bf16.mxu0 0
        %3992 = vmatpush1.bf16.msra.mxu0 %v3793
        %3993 = vmatprep.subr.bf16.mxu0 0
        %3994 = vmatpush1.bf16.msra.mxu0 %v3794
        %3995 = vmatprep.subr.bf16.mxu0 0
        %3996 = vmatpush1.bf16.msra.mxu0 %v3795
        %3997 = vmatprep.subr.bf16.mxu0 0
        %3998 = vmatpush1.bf16.msra.mxu0 %v3796
        %3999 = vmatprep.subr.bf16.mxu0 0
        %4000 = vmatpush1.bf16.msra.mxu0 %v3797
        %4001 = vmatprep.subr.bf16.mxu0 0
        %4002 = vmatpush1.bf16.msra.mxu0 %v3798
        %4003 = vmatprep.subr.bf16.mxu0 0
        %4004 = vmatpush1.bf16.msra.mxu0 %v3799
        %4005 = vmatprep.subr.bf16.mxu0 0
        %4006 = vmatpush1.bf16.msra.mxu0 %v3800
        %4007 = vmatprep.subr.bf16.mxu0 0
        %4008 = vmatpush1.bf16.msra.mxu0 %v3801
        %4009 = vmatprep.subr.bf16.mxu0 0
        %4010 = vmatpush1.bf16.msra.mxu0 %v3802
        %4011 = vmatprep.subr.bf16.mxu0 0
        %4012 = vmatpush1.bf16.msra.mxu0 %v3803
        %4013 = vmatprep.subr.bf16.mxu0 0
        %4014 = vmatpush1.bf16.msra.mxu0 %v3804
        %4015 = vmatprep.mubr.bf16.mxu0 %v3355
        %4016 = vmatmul.mubr.bf16.gmra.mrb[0].mxu0 %v3354
        %v4017 = vpop.f32.mrb[0].mxu0
        %v4018 = vadd.f32 %v3969, %v4017
        %v4019 = vpop.f32.mrb[0].mxu0
        %v4020 = vpop.f32.mrb[0].mxu0
        %v4021 = vadd.f32 %v3972, %v4020
        %v4022 = vpop.f32.mrb[0].mxu0
        %4023 = vmatprep.mubr.bf16.mxu0 %v3363
        %4024 = vmatmul.mubr.bf16.gmra.mrb[0].mxu0 %v3362
        %v4025 = vpop.f32.mrb[0].mxu0
        %v4026 = vadd.f32 %v3977, %v4025
        %v4027 = vpop.f32.mrb[0].mxu0
        %v4028 = vpop.f32.mrb[0].mxu0
        %v4029 = vadd.f32 %v3980, %v4028
        %v4030 = vpop.f32.mrb[0].mxu0
        %4031 = vdwg.mxu0
        %4032 = vmatprep.subr.bf16.mxu0 0
        %4033 = vmatpush1.bf16.msra.mxu0 %v3805
        %4034 = vmatprep.subr.bf16.mxu0 0
        %4035 = vmatpush1.bf16.msra.mxu0 %v3806
        %4036 = vmatprep.subr.bf16.mxu0 0
        %4037 = vmatpush1.bf16.msra.mxu0 %v3807
        %4038 = vmatprep.subr.bf16.mxu0 0
        %4039 = vmatpush1.bf16.msra.mxu0 %v3808
        %4040 = vmatprep.subr.bf16.mxu0 0
        %4041 = vmatpush1.bf16.msra.mxu0 %v3809
        %4042 = vmatprep.subr.bf16.mxu0 0
        %4043 = vmatpush1.bf16.msra.mxu0 %v3810
        %4044 = vmatprep.subr.bf16.mxu0 0
        %4045 = vmatpush1.bf16.msra.mxu0 %v3811
        %4046 = vmatprep.subr.bf16.mxu0 0
        %4047 = vmatpush1.bf16.msra.mxu0 %v3812
        %4048 = vmatprep.subr.bf16.mxu0 0
        %4049 = vmatpush1.bf16.msra.mxu0 %v3813
        %4050 = vmatprep.subr.bf16.mxu0 0
        %4051 = vmatpush1.bf16.msra.mxu0 %v3814
        %4052 = vmatprep.subr.bf16.mxu0 0
        %4053 = vmatpush1.bf16.msra.mxu0 %v3815
        %4054 = vmatprep.subr.bf16.mxu0 0
        %4055 = vmatpush1.bf16.msra.mxu0 %v3816
        %4056 = vmatprep.subr.bf16.mxu0 0
        %4057 = vmatpush1.bf16.msra.mxu0 %v3817
        %4058 = vmatprep.subr.bf16.mxu0 0
        %4059 = vmatpush1.bf16.msra.mxu0 %v3818
        %4060 = vmatprep.subr.bf16.mxu0 0
        %4061 = vmatpush1.bf16.msra.mxu0 %v3819
        %4062 = vmatprep.subr.bf16.mxu0 0
        %4063 = vmatpush1.bf16.msra.mxu0 %v3820
        %4064 = vmatprep.mubr.bf16.mxu0 %v3357
        %4065 = vmatmul.mubr.bf16.gmra.mrb[0].mxu0 %v3356
        %v4066 = vpop.f32.mrb[0].mxu0
        %v4067 = vadd.f32 %v4018, %v4066
        %v4068 = vpop.f32.mrb[0].mxu0
        %v4069 = vpop.f32.mrb[0].mxu0
        %v4070 = vadd.f32 %v4021, %v4069
        %v4071 = vpop.f32.mrb[0].mxu0
        %4072 = vmatprep.mubr.bf16.mxu0 %v3365
        %4073 = vmatmul.mubr.bf16.gmra.mrb[0].mxu0 %v3364
        %v4074 = vpop.f32.mrb[0].mxu0
        %v4075 = vadd.f32 %v4026, %v4074
        %v4076 = vpop.f32.mrb[0].mxu0
        %v4077 = vpop.f32.mrb[0].mxu0
        %v4078 = vadd.f32 %v4029, %v4077
        %v4079 = vpop.f32.mrb[0].mxu0
        %4080 = vdwg.mxu0
        %v4081 = vtanh.pop %v4067
        %v4082 = vtanh.pop %v4070
        %v4083 = vtanh.pop %v4075
        %v4084 = vtanh.pop %v4078
        %4085 = vst [vmem:[%s439] sm:$0xff] %v4081
        %4086 = vst [vmem:[%s439 + $0x8] sm:$0xff] %v4082
        %4087 = vst [vmem:[%s439 + $0x10] sm:$0xff] %v4083
        %4088 = vst [vmem:[%s439 + $0x18] sm:$0xff] %v4084
        %s4089 = sand.u32 %s272, 1
        %s4090 = scalar_lea.sflag [#allocation4], %s4089
        %s4091 = sand.u32 %s272, 1
        %s4092 = smul.addr %s4091, 32
        %s4093 = scalar_lea.vmem [#allocation10], %s4092
        // Predicated region
        $region81: #{tpu_custom_call.1} parent=63 // pred_check
          %p4094 = pneg %p282
        $region82: #{tpu_custom_call.1} parent=63 // pred_check_branch
          %4096 = sbr.rel (%p4094) target = $region84
        $region83: #{tpu_custom_call.1} parent=63 // pred_region
          %s4097 = smul.u32 4, %s28
          %s4099 = ssub.s32 512, 512
          %4100 = vsyncadd %s4090, %s4099
          %s4101 = smul.addr %s4097, 128
          %s4102 = scalar_lea.hbm %s11, %s4101
          %s4103 = sshll.u32 %s4093, 4
          %s4104 = int_to_ptr.vmem [resolvable:$true] %s4103
          %4109 = dma.vmem_to_hbm [thread:$0]  %s4104, 512, %s4102, %s4090, 128, 128, 8
        $region84: #{tpu_custom_call.1} parent=63 // pred_fallthru
          _
      $region64: #{tpu_custom_call.1} parent=5 // pred_fallthru
        _
      %p4110 = scmp.le.s32.totalorder 2, %s23
      // Predicated region
      $region85: #{tpu_custom_call.1} parent=5 // pred_check
        %p4111 = pneg %p4110
      $region86: #{tpu_custom_call.1} parent=5 // pred_check_branch
        %4113 = sbr.rel (%p4111) target = $region88
      $region87: #{tpu_custom_call.1} parent=5 // pred_region
        %s4114 = ssub.s32 %s23, 2
        // Predicated region
        $region89: #{tpu_custom_call.1} parent=87 // pred_check
          %p4115 = pneg %p288
        $region90: #{tpu_custom_call.1} parent=87 // pred_check_branch
          %4117 = sbr.rel (%p4115) target = $region92
        $region91: #{tpu_custom_call.1} parent=87 // pred_region
          %s4118 = sand.u32 %s273, 1
          %s4119 = scalar_lea.sflag [#allocation4], %s4118
          %s4120 = sand.u32 %s273, 1
          %s4121 = smul.addr %s4120, 32
          %s4122 = scalar_lea.vmem [#allocation10], %s4121
          %4123 = dma.done %s4119, 512
        $region92: #{tpu_custom_call.1} parent=87 // pred_fallthru
          _
      $region88: #{tpu_custom_call.1} parent=5 // pred_fallthru
        _
    $region6: #{tpu_custom_call.1} parent=1 // loop_footer
      %s27 = sadd.s32 1, %s23
    $region7: #{tpu_custom_call.1} parent=1 // loop_footer_branch
      %22 = sbr.rel target = $region3
    $region8: #{tpu_custom_call.1} parent=1 // loop_exit
      _
    %4124 = vsyncpa [#allocation3], 1
    %s4125 = scalar_lea.sflag [#allocation3], 1
    %4126 = vsyncpa %s4125, 1
    %4127 = vsyncpa [#allocation6], 1
    %4128 = vsyncpa [#allocation9], 1
    %4129 = vsyncpa [#allocation4], 1
    %s4130 = scalar_lea.sflag [#allocation4], 1
    %4131 = vsyncpa %s4130, 1

</llo_original>
